<compile_context>
chip_gen: v6e
topology: v6e:2x2x1
jax: 0.10.0
libtpu: 0.0.40
codegen_flags: <defaults>
</compile_context>

<pallas_src>
import functools
import math

import jax
import jax.numpy as jnp
from jax.experimental import pallas as pl
from jax.experimental.pallas import tpu as pltpu

# ----------------------------- config (small synthetic BERT) -----------------------------
VOCAB = 64
TYPE_VOCAB = 2
MAX_POS = 32
HIDDEN = 32
NUM_HEADS = 2
HEAD_DIM = HIDDEN // NUM_HEADS
INTERMEDIATE = 64
NUM_LAYERS = 2
NUM_LABELS = 2
BERT_LN_EPS = 1e-12          # BERT-internal LayerNorms
HEAD_LN_EPS = 1e-5           # nn.LayerNorm default in the task head
ATT_SCALE = 1.0 / math.sqrt(HEAD_DIM)
OUT_LANES = 128              # lane-dense packed output row: [logits(2) | intensity(1) | zeros]
OUT_ROWS = 8                 # sublane pad so the per-example output block is a full (8,128) tile


# ----------------------------- in-kernel helpers -----------------------------
def _layer_norm(x, g, b, eps):
    mu = jnp.mean(x, axis=-1, keepdims=True)
    xc = x - mu
    var = jnp.mean(xc * xc, axis=-1, keepdims=True)
    return xc * jax.lax.rsqrt(var + eps) * g + b


def _gelu_tanh(x):
    # TODO(synk): HF BERT default is exact erf-GELU; tanh approximation used (guaranteed EUP lowering).
    c = jnp.float32(math.sqrt(2.0 / math.pi))
    return 0.5 * x * (1.0 + jnp.tanh(c * (x + 0.044715 * x * x * x)))


# ----------------------------- fused per-example forward kernel -----------------------------
def _fused_bert_kernel(
    x_ref,        # (S, H)          f32   embeddings for this batch row
    mask_ref,     # (1, S)          f32   attention mask for this batch row
    ln_ref,       # (2 + 4L + 2, 1, H) f32  [emb_g, emb_b, (ln1_g, ln1_b, ln2_g, ln2_b)*L, head_g, head_b]
    wqkv_ref,     # (L*NH*3, H, D)  bf16  per-(layer, head, q|k|v) projection blocks
    bqkv_ref,     # (L*NH*3, 1, D)  f32
    wo_ref,       # (L*NH, D, H)    bf16  per-(layer, head) output-projection blocks
    bo_b2_ref,    # (2L, 1, H)      f32   rows: [bo_l, b2_l] per layer
    w1_ref,       # (L, H, I)       bf16
    b1_ref,       # (L, 1, I)       f32
    w2_ref,       # (L, I, H)       bf16
    w_head_ref,   # (H, 128)        bf16  [classifier | regressor | zeros] lane-packed
    b_head_ref,   # (1, 128)        f32
    out_ref,      # (8, 128)        f32   lane-dense packed output tile
    *, seq):
    S, H, NH, D, L = seq, HIDDEN, NUM_HEADS, HEAD_DIM, NUM_LAYERS

    x = x_ref[...]                                                   # (S, H) f32
    x = _layer_norm(x, ln_ref[0], ln_ref[1], BERT_LN_EPS)

    # additive attention-mask bias, shared across heads                (1, S)
    bias = (1.0 - mask_ref[...]) * jnp.float32(-1e9)

    for l in range(L):                                               # static unroll (tiny L)
        x_bf = x.astype(jnp.bfloat16)
        attn_acc = jnp.zeros((S, H), jnp.float32)
        for h in range(NH):                                          # static unroll (tiny NH)
            base = (l * NH + h) * 3
            q = jnp.dot(x_bf, wqkv_ref[base + 0],
                        preferred_element_type=jnp.float32) + bqkv_ref[base + 0]   # (S, D)
            k = jnp.dot(x_bf, wqkv_ref[base + 1],
                        preferred_element_type=jnp.float32) + bqkv_ref[base + 1]
            v = jnp.dot(x_bf, wqkv_ref[base + 2],
                        preferred_element_type=jnp.float32) + bqkv_ref[base + 2]

            s = jax.lax.dot_general(q, k, (((1,), (1,)), ((), ())),
                                    preferred_element_type=jnp.float32)            # (S, S)
            s = s * jnp.float32(ATT_SCALE) + bias
            m = jnp.max(s, axis=-1, keepdims=True)
            p = jnp.exp(s - m)
            inv = pl.reciprocal(jnp.sum(p, axis=-1, keepdims=True), approx=True)
            p = p * inv
            ctx = jnp.dot(p, v, preferred_element_type=jnp.float32)                # (S, D)

            # fold output projection per head: sum_h ctx_h @ Wo_h == concat_h(ctx_h) @ Wo
            attn_acc = attn_acc + jnp.dot(ctx.astype(jnp.bfloat16), wo_ref[l * NH + h],
                                          preferred_element_type=jnp.float32)       # (S, H)

        # output projection bias + residual + LayerNorm epilogue
        x = _layer_norm(x + attn_acc + bo_b2_ref[2 * l],
                        ln_ref[2 + 4 * l + 0], ln_ref[2 + 4 * l + 1], BERT_LN_EPS)

        # FFN (GELU) + residual + LayerNorm epilogue
        x_bf = x.astype(jnp.bfloat16)
        hmid = _gelu_tanh(jnp.dot(x_bf, w1_ref[l],
                                  preferred_element_type=jnp.float32) + b1_ref[l])   # (S, I)
        ffn = jnp.dot(hmid.astype(jnp.bfloat16), w2_ref[l],
                      preferred_element_type=jnp.float32) + bo_b2_ref[2 * l + 1]     # (S, H)
        x = _layer_norm(x + ffn, ln_ref[2 + 4 * l + 2], ln_ref[2 + 4 * l + 3], BERT_LN_EPS)

    # CLS pooling (row 0) + head LayerNorm + packed classifier|regressor (one lane-dense matmul)
    cls = x[0:1, :]                                                   # (1, H)
    cls = _layer_norm(cls, ln_ref[2 + 4 * L + 0], ln_ref[2 + 4 * L + 1], HEAD_LN_EPS)
    # TODO(synk): nn.Dropout(0.5) is identity in eval mode; no stochastic dropout applied here.
    row = jnp.dot(cls.astype(jnp.bfloat16), w_head_ref[...],
                  preferred_element_type=jnp.float32) + b_head_ref[...]              # (1, 128)
    out_ref[...] = jnp.broadcast_to(row, (OUT_ROWS, OUT_LANES)).astype(out_ref.dtype)


# ----------------------------- parameter init (deterministic, synthetic) -----------------------------
def init_params(key):
    kit = iter(jax.random.split(key, 16))

    def normal(shape, std=0.02):
        return (std * jax.random.normal(next(kit), shape)).astype(jnp.float32)

    def xavier_normal(shape):           # stored as (in, out) for x @ W
        fan_in, fan_out = shape
        std = math.sqrt(2.0 / (fan_in + fan_out))
        return (std * jax.random.normal(next(kit), shape)).astype(jnp.float32)

    zeros = lambda s: jnp.zeros(s, jnp.float32)
    ones = lambda s: jnp.ones(s, jnp.float32)

    L, H, I = NUM_LAYERS, HIDDEN, INTERMEDIATE
    return {
        "word_emb": normal((VOCAB, H)),
        "pos_emb": normal((MAX_POS, H)),
        "type_emb": normal((TYPE_VOCAB, H)),
        "emb_ln_g": ones((1, H)), "emb_ln_b": zeros((1, H)),
        "wqkv": normal((L, H, 3 * H)), "bqkv": zeros((L, 1, 3 * H)),
        "wo": normal((L, H, H)), "bo": zeros((L, 1, H)),
        "ln1_g": ones((L, 1, H)), "ln1_b": zeros((L, 1, H)),
        "w1": normal((L, H, I)), "b1": zeros((L, 1, I)),
        "w2": normal((L, I, H)), "b2": zeros((L, 1, H)),
        "ln2_g": ones((L, 1, H)), "ln2_b": zeros((L, 1, H)),
        "head_ln_g": ones((1, H)), "head_ln_b": zeros((1, H)),
        "cls_w": xavier_normal((H, NUM_LABELS)), "cls_b": zeros((1, NUM_LABELS)),
        "reg_w": xavier_normal((H, 1)), "reg_b": zeros((1, 1)),
    }


# ----------------------------- wrapper-side weight repacking (layout plumbing only) ------------------
def _pack_params(p):
    L, H, I, NH, D = NUM_LAYERS, HIDDEN, INTERMEDIATE, NUM_HEADS, HEAD_DIM
    bf16 = jnp.bfloat16

    # LN slab: [emb_g, emb_b, (ln1_g, ln1_b, ln2_g, ln2_b)*L, head_g, head_b]   -> (2+4L+2, 1, H)
    per_layer_ln = jnp.stack([p["ln1_g"], p["ln1_b"], p["ln2_g"], p["ln2_b"]], axis=1)  # (L,4,1,H)
    ln_slab = jnp.concatenate([
        p["emb_ln_g"][None], p["emb_ln_b"][None],
        per_layer_ln.reshape(4 * L, 1, H),
        p["head_ln_g"][None], p["head_ln_b"][None]], axis=0)

    # per-(layer, head, q|k|v) projection blocks: no in-kernel lane slicing needed
    wqkv = p["wqkv"].reshape(L, H, 3, NH, D).transpose(0, 3, 2, 1, 4).reshape(L * NH * 3, H, D)
    bqkv = p["bqkv"].reshape(L, 3, NH, D).transpose(0, 2, 1, 3).reshape(L * NH * 3, 1, D)
    wo = p["wo"].reshape(L, NH, D, H).reshape(L * NH, D, H)
    bo_b2 = jnp.stack([p["bo"], p["b2"]], axis=1).reshape(2 * L, 1, H)

    # lane-dense packed head: lanes [0:NUM_LABELS]=classifier, lane NUM_LABELS=regressor, rest zero
    w_head = jnp.zeros((H, OUT_LANES), jnp.float32)
    w_head = w_head.at[:, :NUM_LABELS].set(p["cls_w"])
    w_head = w_head.at[:, NUM_LABELS:NUM_LABELS + 1].set(p["reg_w"])
    b_head = jnp.zeros((1, OUT_LANES), jnp.float32)
    b_head = b_head.at[:, :NUM_LABELS].set(p["cls_b"])
    b_head = b_head.at[:, NUM_LABELS:NUM_LABELS + 1].set(p["reg_b"])

    return dict(
        ln=ln_slab,
        wqkv=wqkv.astype(bf16), bqkv=bqkv,
        wo=wo.astype(bf16), bo_b2=bo_b2,
        w1=p["w1"].astype(bf16), b1=p["b1"],
        w2=p["w2"].astype(bf16),
        w_head=w_head.astype(bf16), b_head=b_head)


# ----------------------------- forward pass (single pallas_call, grid over batch) --------------------
def bert_for_emotion_multitask(params, input_ids, attention_mask=None,
                               labels=None, labels_intensity=None):
    B, S = input_ids.shape
    H = HIDDEN
    if attention_mask is None:
        attention_mask = jnp.ones((B, S), jnp.int32)

    # embedding gather stays in plain JAX glue
    pos_ids = jnp.arange(S)
    type_ids = jnp.zeros_like(input_ids)
    x_emb = (params["word_emb"][input_ids]
             + params["pos_emb"][pos_ids][None, :, :]
             + params["type_emb"][type_ids]).astype(jnp.float32)       # (B, S, H)
    mask = attention_mask.astype(jnp.float32).reshape(B, 1, S)

    pk = _pack_params(params)
    args = (x_emb, mask, pk["ln"], pk["wqkv"], pk["bqkv"], pk["wo"],
            pk["bo_b2"], pk["w1"], pk["b1"], pk["w2"], pk["w_head"], pk["b_head"])

    vmem = pl.BlockSpec(memory_space=pltpu.MemorySpace.VMEM)            # whole-array VMEM-resident
    in_specs = [
        pl.BlockSpec((None, S, H), lambda b: (b, 0, 0)),                # per-example activations
        pl.BlockSpec((None, 1, S), lambda b: (b, 0, 0)),                # per-example attention mask
    ] + [vmem] * (len(args) - 2)

    out = pl.pallas_call(
        functools.partial(_fused_bert_kernel, seq=S),
        grid=(B,),
        in_specs=in_specs,
        out_specs=pl.BlockSpec((None, OUT_ROWS, OUT_LANES), lambda b: (b, 0, 0)),
        out_shape=jax.ShapeDtypeStruct((B, OUT_ROWS, OUT_LANES), jnp.float32),
        compiler_params=pltpu.CompilerParams(
            dimension_semantics=("parallel",),          # shard batch across TCs on v7x
            vmem_limit_bytes=32 * 1024 * 1024),
    )(*args)

    logits = out[:, 0, :NUM_LABELS]                      # (B, NUM_LABELS)
    intensity = out[:, 0, NUM_LABELS]                    # (B,)

    loss = None
    if labels is not None and labels_intensity is not None:
        logp = jax.nn.log_softmax(logits.astype(jnp.float32), axis=-1)
        ce = -jnp.mean(jnp.take_along_axis(logp, labels[:, None], axis=-1))
        mse = jnp.mean((intensity - labels_intensity.astype(jnp.float32)) ** 2)
        loss = 0.8 * ce + 0.2 * mse
    return {"loss": loss, "logits": logits, "intensity": intensity}


# ----------------------------- main -----------------------------
if __name__ == "__main__":
    B, S = 2, 8

    params = init_params(jax.random.PRNGKey(42))

    key = jax.random.PRNGKey(0)
    k_ids, k_int = jax.random.split(key, 2)
    input_ids = jax.random.randint(k_ids, (B, S), 0, VOCAB, dtype=jnp.int32)
    attention_mask = jnp.ones((B, S), jnp.int32)
    labels = jnp.array([0, 1], dtype=jnp.int32)
    labels_intensity = jax.random.uniform(k_int, (B,), jnp.float32)

    out = bert_for_emotion_multitask(params, input_ids, attention_mask,
                                     labels=labels, labels_intensity=labels_intensity)

    jax.block_until_ready(out["logits"])
    jax.block_until_ready(out["intensity"])
    jax.block_until_ready(out["loss"])

    assert out["logits"].shape == (B, NUM_LABELS)
    assert out["intensity"].shape == (B,)
    assert out["loss"].shape == ()
    assert bool(jnp.all(jnp.isfinite(out["logits"])))
    assert bool(jnp.isfinite(out["loss"]))
    print("KERNEL_OK")
</pallas_src>

<mosaic_0001>
module attributes {stable_mosaic.version = 11 : i64} {
  func.func @_fused_bert_kernel(%arg0: i32, %arg1: memref<1x8x32xf32, #tpu.memory_space<vmem>>, %arg2: memref<1x1x8xf32, #tpu.memory_space<vmem>>, %arg3: memref<12x1x32xf32, #tpu.memory_space<vmem>>, %arg4: memref<12x32x16xbf16, #tpu.memory_space<vmem>>, %arg5: memref<12x1x16xf32, #tpu.memory_space<vmem>>, %arg6: memref<4x16x32xbf16, #tpu.memory_space<vmem>>, %arg7: memref<4x1x32xf32, #tpu.memory_space<vmem>>, %arg8: memref<2x32x64xbf16, #tpu.memory_space<vmem>>, %arg9: memref<2x1x64xf32, #tpu.memory_space<vmem>>, %arg10: memref<2x64x32xbf16, #tpu.memory_space<vmem>>, %arg11: memref<32x128xbf16, #tpu.memory_space<vmem>>, %arg12: memref<1x128xf32, #tpu.memory_space<vmem>>, %arg13: memref<1x8x128xf32, #tpu.memory_space<vmem>>) attributes {dimension_semantics = [#tpu.dimension_semantics<parallel>], iteration_bounds = array<i64: 2>, scalar_prefetch = 0 : i64, scratch_operands = 0 : i64, tpu.core_type = #tpu.core_type<tc>, window_params = [{transform_indices = @transform_0, window_bounds = array<i64: 1, 8, 32>}, {transform_indices = @transform_1, window_bounds = array<i64: 1, 1, 8>}, {pipeline_mode = #tpu.pipeline_mode<synchronous>, transform_indices = @transform_2, window_bounds = array<i64: 12, 1, 32>}, {pipeline_mode = #tpu.pipeline_mode<synchronous>, transform_indices = @transform_3, window_bounds = array<i64: 12, 32, 16>}, {pipeline_mode = #tpu.pipeline_mode<synchronous>, transform_indices = @transform_4, window_bounds = array<i64: 12, 1, 16>}, {pipeline_mode = #tpu.pipeline_mode<synchronous>, transform_indices = @transform_5, window_bounds = array<i64: 4, 16, 32>}, {pipeline_mode = #tpu.pipeline_mode<synchronous>, transform_indices = @transform_6, window_bounds = array<i64: 4, 1, 32>}, {pipeline_mode = #tpu.pipeline_mode<synchronous>, transform_indices = @transform_7, window_bounds = array<i64: 2, 32, 64>}, {pipeline_mode = #tpu.pipeline_mode<synchronous>, transform_indices = @transform_8, window_bounds = array<i64: 2, 1, 64>}, {pipeline_mode = #tpu.pipeline_mode<synchronous>, transform_indices = @transform_9, window_bounds = array<i64: 2, 64, 32>}, {pipeline_mode = #tpu.pipeline_mode<synchronous>, transform_indices = @transform_10, window_bounds = array<i64: 32, 128>}, {pipeline_mode = #tpu.pipeline_mode<synchronous>, transform_indices = @transform_11, window_bounds = array<i64: 1, 128>}, {transform_indices = @transform_12, window_bounds = array<i64: 1, 8, 128>}]} {
    %c0 = arith.constant 0 : index
    %c0_0 = arith.constant 0 : index
    %c0_1 = arith.constant 0 : index
    %0 = vector.load %arg1[%c0, %c0_0, %c0_1] : memref<1x8x32xf32, #tpu.memory_space<vmem>>, vector<1x8x32xf32>
    %1 = vector.shape_cast %0 : vector<1x8x32xf32> to vector<8x32xf32>
    %c0_2 = arith.constant 0 : index
    %c0_3 = arith.constant 0 : index
    %c0_4 = arith.constant 0 : index
    %2 = vector.load %arg3[%c0_2, %c0_3, %c0_4] : memref<12x1x32xf32, #tpu.memory_space<vmem>>, vector<1x1x32xf32>
    %3 = vector.shape_cast %2 : vector<1x1x32xf32> to vector<1x32xf32>
    %c1 = arith.constant 1 : index
    %c0_5 = arith.constant 0 : index
    %c0_6 = arith.constant 0 : index
    %4 = vector.load %arg3[%c1, %c0_5, %c0_6] : memref<12x1x32xf32, #tpu.memory_space<vmem>>, vector<1x1x32xf32>
    %5 = vector.shape_cast %4 : vector<1x1x32xf32> to vector<1x32xf32>
    %cst = arith.constant dense<0.000000e+00> : vector<8xf32>
    %6 = vector.multi_reduction <add>, %1, %cst [1] : vector<8x32xf32> to vector<8xf32>
    %7 = vector.shape_cast %6 : vector<8xf32> to vector<8x1xf32>
    %cst_7 = arith.constant 3.200000e+01 : f32
    %8 = vector.broadcast %cst_7 : f32 to vector<8x1xf32>
    %9 = arith.divf %7, %8 : vector<8x1xf32>
    %10 = vector.broadcast %9 : vector<8x1xf32> to vector<8x32xf32>
    %11 = arith.subf %1, %10 : vector<8x32xf32>
    %12 = arith.mulf %11, %11 : vector<8x32xf32>
    %cst_8 = arith.constant dense<0.000000e+00> : vector<8xf32>
    %13 = vector.multi_reduction <add>, %12, %cst_8 [1] : vector<8x32xf32> to vector<8xf32>
    %14 = vector.shape_cast %13 : vector<8xf32> to vector<8x1xf32>
    %cst_9 = arith.constant 3.200000e+01 : f32
    %15 = vector.broadcast %cst_9 : f32 to vector<8x1xf32>
    %16 = arith.divf %14, %15 : vector<8x1xf32>
    %cst_10 = arith.constant 9.99999996E-13 : f32
    %17 = vector.broadcast %cst_10 : f32 to vector<8x1xf32>
    %18 = arith.addf %16, %17 : vector<8x1xf32>
    %19 = math.rsqrt %18 : vector<8x1xf32>
    %20 = vector.broadcast %19 : vector<8x1xf32> to vector<8x32xf32>
    %21 = arith.mulf %11, %20 : vector<8x32xf32>
    %22 = vector.broadcast %3 : vector<1x32xf32> to vector<8x32xf32>
    %23 = arith.mulf %21, %22 : vector<8x32xf32>
    %24 = vector.broadcast %5 : vector<1x32xf32> to vector<8x32xf32>
    %25 = arith.addf %23, %24 : vector<8x32xf32>
    %c0_11 = arith.constant 0 : index
    %c0_12 = arith.constant 0 : index
    %c0_13 = arith.constant 0 : index
    %26 = vector.load %arg2[%c0_11, %c0_12, %c0_13] : memref<1x1x8xf32, #tpu.memory_space<vmem>>, vector<1x1x8xf32>
    %27 = vector.shape_cast %26 : vector<1x1x8xf32> to vector<1x8xf32>
    %cst_14 = arith.constant 1.000000e+00 : f32
    %28 = vector.broadcast %cst_14 : f32 to vector<1x8xf32>
    %29 = arith.subf %28, %27 : vector<1x8xf32>
    %cst_15 = arith.constant -1.000000e+09 : f32
    %30 = vector.broadcast %cst_15 : f32 to vector<1x8xf32>
    %31 = arith.mulf %29, %30 : vector<1x8xf32>
    %32 = arith.truncf %25 : vector<8x32xf32> to vector<8x32xbf16>
    %cst_16 = arith.constant 0.000000e+00 : f32
    %33 = vector.broadcast %cst_16 : f32 to vector<8x32xf32>
    %c0_17 = arith.constant 0 : index
    %c0_18 = arith.constant 0 : index
    %c0_19 = arith.constant 0 : index
    %34 = vector.load %arg4[%c0_17, %c0_18, %c0_19] : memref<12x32x16xbf16, #tpu.memory_space<vmem>>, vector<1x32x16xbf16>
    %35 = vector.shape_cast %34 : vector<1x32x16xbf16> to vector<32x16xbf16>
    %cst_20 = arith.constant dense<0.000000e+00> : vector<8x16xf32>
    %36 = tpu.matmul %32, %35, %cst_20 {dimension_numbers = #tpu.dot_dimension_numbers<[1], [0], [0], [1], [0, 0, 1, 1], [], []>} : vector<8x32xbf16>, vector<32x16xbf16>, vector<8x16xf32> -> vector<8x16xf32>
    %c0_21 = arith.constant 0 : index
    %c0_22 = arith.constant 0 : index
    %c0_23 = arith.constant 0 : index
    %37 = vector.load %arg5[%c0_21, %c0_22, %c0_23] : memref<12x1x16xf32, #tpu.memory_space<vmem>>, vector<1x1x16xf32>
    %38 = vector.shape_cast %37 : vector<1x1x16xf32> to vector<1x16xf32>
    %39 = vector.broadcast %38 : vector<1x16xf32> to vector<8x16xf32>
    %40 = arith.addf %36, %39 : vector<8x16xf32>
    %c1_24 = arith.constant 1 : index
    %c0_25 = arith.constant 0 : index
    %c0_26 = arith.constant 0 : index
    %41 = vector.load %arg4[%c1_24, %c0_25, %c0_26] : memref<12x32x16xbf16, #tpu.memory_space<vmem>>, vector<1x32x16xbf16>
    %42 = vector.shape_cast %41 : vector<1x32x16xbf16> to vector<32x16xbf16>
    %cst_27 = arith.constant dense<0.000000e+00> : vector<8x16xf32>
    %43 = tpu.matmul %32, %42, %cst_27 {dimension_numbers = #tpu.dot_dimension_numbers<[1], [0], [0], [1], [0, 0, 1, 1], [], []>} : vector<8x32xbf16>, vector<32x16xbf16>, vector<8x16xf32> -> vector<8x16xf32>
    %c1_28 = arith.constant 1 : index
    %c0_29 = arith.constant 0 : index
    %c0_30 = arith.constant 0 : index
    %44 = vector.load %arg5[%c1_28, %c0_29, %c0_30] : memref<12x1x16xf32, #tpu.memory_space<vmem>>, vector<1x1x16xf32>
    %45 = vector.shape_cast %44 : vector<1x1x16xf32> to vector<1x16xf32>
    %46 = vector.broadcast %45 : vector<1x16xf32> to vector<8x16xf32>
    %47 = arith.addf %43, %46 : vector<8x16xf32>
    %c2 = arith.constant 2 : index
    %c0_31 = arith.constant 0 : index
    %c0_32 = arith.constant 0 : index
    %48 = vector.load %arg4[%c2, %c0_31, %c0_32] : memref<12x32x16xbf16, #tpu.memory_space<vmem>>, vector<1x32x16xbf16>
    %49 = vector.shape_cast %48 : vector<1x32x16xbf16> to vector<32x16xbf16>
    %cst_33 = arith.constant dense<0.000000e+00> : vector<8x16xf32>
    %50 = tpu.matmul %32, %49, %cst_33 {dimension_numbers = #tpu.dot_dimension_numbers<[1], [0], [0], [1], [0, 0, 1, 1], [], []>} : vector<8x32xbf16>, vector<32x16xbf16>, vector<8x16xf32> -> vector<8x16xf32>
    %c2_34 = arith.constant 2 : index
    %c0_35 = arith.constant 0 : index
    %c0_36 = arith.constant 0 : index
    %51 = vector.load %arg5[%c2_34, %c0_35, %c0_36] : memref<12x1x16xf32, #tpu.memory_space<vmem>>, vector<1x1x16xf32>
    %52 = vector.shape_cast %51 : vector<1x1x16xf32> to vector<1x16xf32>
    %53 = vector.broadcast %52 : vector<1x16xf32> to vector<8x16xf32>
    %54 = arith.addf %50, %53 : vector<8x16xf32>
    %cst_37 = arith.constant dense<0.000000e+00> : vector<8x8xf32>
    %55 = tpu.matmul %40, %47, %cst_37 {dimension_numbers = #tpu.dot_dimension_numbers<[1], [1], [0], [0], [0, 0, 1, 0], [], []>} : vector<8x16xf32>, vector<8x16xf32>, vector<8x8xf32> -> vector<8x8xf32>
    %cst_38 = arith.constant 2.500000e-01 : f32
    %56 = vector.broadcast %cst_38 : f32 to vector<8x8xf32>
    %57 = arith.mulf %55, %56 : vector<8x8xf32>
    %58 = vector.broadcast %31 : vector<1x8xf32> to vector<8x8xf32>
    %59 = arith.addf %57, %58 : vector<8x8xf32>
    %cst_39 = arith.constant dense<0xFF800000> : vector<8xf32>
    %60 = vector.multi_reduction <maximumf>, %59, %cst_39 [1] : vector<8x8xf32> to vector<8xf32>
    %61 = vector.shape_cast %60 : vector<8xf32> to vector<8x1xf32>
    %62 = vector.broadcast %61 : vector<8x1xf32> to vector<8x8xf32>
    %63 = arith.subf %59, %62 : vector<8x8xf32>
    %64 = math.exp %63 : vector<8x8xf32>
    %cst_40 = arith.constant dense<0.000000e+00> : vector<8xf32>
    %65 = vector.multi_reduction <add>, %64, %cst_40 [1] : vector<8x8xf32> to vector<8xf32>
    %66 = vector.shape_cast %65 : vector<8xf32> to vector<8x1xf32>
    %67 = tpu.reciprocal %66 {approx = true} : vector<8x1xf32> -> vector<8x1xf32>
    %68 = vector.broadcast %67 : vector<8x1xf32> to vector<8x8xf32>
    %69 = arith.mulf %64, %68 : vector<8x8xf32>
    %cst_41 = arith.constant dense<0.000000e+00> : vector<8x16xf32>
    %70 = tpu.matmul %69, %54, %cst_41 {dimension_numbers = #tpu.dot_dimension_numbers<[1], [0], [0], [1], [0, 0, 1, 1], [], []>} : vector<8x8xf32>, vector<8x16xf32>, vector<8x16xf32> -> vector<8x16xf32>
    %71 = arith.truncf %70 : vector<8x16xf32> to vector<8x16xbf16>
    %c0_42 = arith.constant 0 : index
    %c0_43 = arith.constant 0 : index
    %c0_44 = arith.constant 0 : index
    %72 = vector.load %arg6[%c0_42, %c0_43, %c0_44] : memref<4x16x32xbf16, #tpu.memory_space<vmem>>, vector<1x16x32xbf16>
    %73 = vector.shape_cast %72 : vector<1x16x32xbf16> to vector<16x32xbf16>
    %cst_45 = arith.constant dense<0.000000e+00> : vector<8x32xf32>
    %74 = tpu.matmul %71, %73, %cst_45 {dimension_numbers = #tpu.dot_dimension_numbers<[1], [0], [0], [1], [0, 0, 1, 1], [], []>} : vector<8x16xbf16>, vector<16x32xbf16>, vector<8x32xf32> -> vector<8x32xf32>
    %75 = arith.addf %33, %74 : vector<8x32xf32>
    %c3 = arith.constant 3 : index
    %c0_46 = arith.constant 0 : index
    %c0_47 = arith.constant 0 : index
    %76 = vector.load %arg4[%c3, %c0_46, %c0_47] : memref<12x32x16xbf16, #tpu.memory_space<vmem>>, vector<1x32x16xbf16>
    %77 = vector.shape_cast %76 : vector<1x32x16xbf16> to vector<32x16xbf16>
    %cst_48 = arith.constant dense<0.000000e+00> : vector<8x16xf32>
    %78 = tpu.matmul %32, %77, %cst_48 {dimension_numbers = #tpu.dot_dimension_numbers<[1], [0], [0], [1], [0, 0, 1, 1], [], []>} : vector<8x32xbf16>, vector<32x16xbf16>, vector<8x16xf32> -> vector<8x16xf32>
    %c3_49 = arith.constant 3 : index
    %c0_50 = arith.constant 0 : index
    %c0_51 = arith.constant 0 : index
    %79 = vector.load %arg5[%c3_49, %c0_50, %c0_51] : memref<12x1x16xf32, #tpu.memory_space<vmem>>, vector<1x1x16xf32>
    %80 = vector.shape_cast %79 : vector<1x1x16xf32> to vector<1x16xf32>
    %81 = vector.broadcast %80 : vector<1x16xf32> to vector<8x16xf32>
    %82 = arith.addf %78, %81 : vector<8x16xf32>
    %c4 = arith.constant 4 : index
    %c0_52 = arith.constant 0 : index
    %c0_53 = arith.constant 0 : index
    %83 = vector.load %arg4[%c4, %c0_52, %c0_53] : memref<12x32x16xbf16, #tpu.memory_space<vmem>>, vector<1x32x16xbf16>
    %84 = vector.shape_cast %83 : vector<1x32x16xbf16> to vector<32x16xbf16>
    %cst_54 = arith.constant dense<0.000000e+00> : vector<8x16xf32>
    %85 = tpu.matmul %32, %84, %cst_54 {dimension_numbers = #tpu.dot_dimension_numbers<[1], [0], [0], [1], [0, 0, 1, 1], [], []>} : vector<8x32xbf16>, vector<32x16xbf16>, vector<8x16xf32> -> vector<8x16xf32>
    %c4_55 = arith.constant 4 : index
    %c0_56 = arith.constant 0 : index
    %c0_57 = arith.constant 0 : index
    %86 = vector.load %arg5[%c4_55, %c0_56, %c0_57] : memref<12x1x16xf32, #tpu.memory_space<vmem>>, vector<1x1x16xf32>
    %87 = vector.shape_cast %86 : vector<1x1x16xf32> to vector<1x16xf32>
    %88 = vector.broadcast %87 : vector<1x16xf32> to vector<8x16xf32>
    %89 = arith.addf %85, %88 : vector<8x16xf32>
    %c5 = arith.constant 5 : index
    %c0_58 = arith.constant 0 : index
    %c0_59 = arith.constant 0 : index
    %90 = vector.load %arg4[%c5, %c0_58, %c0_59] : memref<12x32x16xbf16, #tpu.memory_space<vmem>>, vector<1x32x16xbf16>
    %91 = vector.shape_cast %90 : vector<1x32x16xbf16> to vector<32x16xbf16>
    %cst_60 = arith.constant dense<0.000000e+00> : vector<8x16xf32>
    %92 = tpu.matmul %32, %91, %cst_60 {dimension_numbers = #tpu.dot_dimension_numbers<[1], [0], [0], [1], [0, 0, 1, 1], [], []>} : vector<8x32xbf16>, vector<32x16xbf16>, vector<8x16xf32> -> vector<8x16xf32>
    %c5_61 = arith.constant 5 : index
    %c0_62 = arith.constant 0 : index
    %c0_63 = arith.constant 0 : index
    %93 = vector.load %arg5[%c5_61, %c0_62, %c0_63] : memref<12x1x16xf32, #tpu.memory_space<vmem>>, vector<1x1x16xf32>
    %94 = vector.shape_cast %93 : vector<1x1x16xf32> to vector<1x16xf32>
    %95 = vector.broadcast %94 : vector<1x16xf32> to vector<8x16xf32>
    %96 = arith.addf %92, %95 : vector<8x16xf32>
    %cst_64 = arith.constant dense<0.000000e+00> : vector<8x8xf32>
    %97 = tpu.matmul %82, %89, %cst_64 {dimension_numbers = #tpu.dot_dimension_numbers<[1], [1], [0], [0], [0, 0, 1, 0], [], []>} : vector<8x16xf32>, vector<8x16xf32>, vector<8x8xf32> -> vector<8x8xf32>
    %cst_65 = arith.constant 2.500000e-01 : f32
    %98 = vector.broadcast %cst_65 : f32 to vector<8x8xf32>
    %99 = arith.mulf %97, %98 : vector<8x8xf32>
    %100 = vector.broadcast %31 : vector<1x8xf32> to vector<8x8xf32>
    %101 = arith.addf %99, %100 : vector<8x8xf32>
    %cst_66 = arith.constant dense<0xFF800000> : vector<8xf32>
    %102 = vector.multi_reduction <maximumf>, %101, %cst_66 [1] : vector<8x8xf32> to vector<8xf32>
    %103 = vector.shape_cast %102 : vector<8xf32> to vector<8x1xf32>
    %104 = vector.broadcast %103 : vector<8x1xf32> to vector<8x8xf32>
    %105 = arith.subf %101, %104 : vector<8x8xf32>
    %106 = math.exp %105 : vector<8x8xf32>
    %cst_67 = arith.constant dense<0.000000e+00> : vector<8xf32>
    %107 = vector.multi_reduction <add>, %106, %cst_67 [1] : vector<8x8xf32> to vector<8xf32>
    %108 = vector.shape_cast %107 : vector<8xf32> to vector<8x1xf32>
    %109 = tpu.reciprocal %108 {approx = true} : vector<8x1xf32> -> vector<8x1xf32>
    %110 = vector.broadcast %109 : vector<8x1xf32> to vector<8x8xf32>
    %111 = arith.mulf %106, %110 : vector<8x8xf32>
    %cst_68 = arith.constant dense<0.000000e+00> : vector<8x16xf32>
    %112 = tpu.matmul %111, %96, %cst_68 {dimension_numbers = #tpu.dot_dimension_numbers<[1], [0], [0], [1], [0, 0, 1, 1], [], []>} : vector<8x8xf32>, vector<8x16xf32>, vector<8x16xf32> -> vector<8x16xf32>
    %113 = arith.truncf %112 : vector<8x16xf32> to vector<8x16xbf16>
    %c1_69 = arith.constant 1 : index
    %c0_70 = arith.constant 0 : index
    %c0_71 = arith.constant 0 : index
    %114 = vector.load %arg6[%c1_69, %c0_70, %c0_71] : memref<4x16x32xbf16, #tpu.memory_space<vmem>>, vector<1x16x32xbf16>
    %115 = vector.shape_cast %114 : vector<1x16x32xbf16> to vector<16x32xbf16>
    %cst_72 = arith.constant dense<0.000000e+00> : vector<8x32xf32>
    %116 = tpu.matmul %113, %115, %cst_72 {dimension_numbers = #tpu.dot_dimension_numbers<[1], [0], [0], [1], [0, 0, 1, 1], [], []>} : vector<8x16xbf16>, vector<16x32xbf16>, vector<8x32xf32> -> vector<8x32xf32>
    %117 = arith.addf %75, %116 : vector<8x32xf32>
    %118 = arith.addf %25, %117 : vector<8x32xf32>
    %c0_73 = arith.constant 0 : index
    %c0_74 = arith.constant 0 : index
    %c0_75 = arith.constant 0 : index
    %119 = vector.load %arg7[%c0_73, %c0_74, %c0_75] : memref<4x1x32xf32, #tpu.memory_space<vmem>>, vector<1x1x32xf32>
    %120 = vector.shape_cast %119 : vector<1x1x32xf32> to vector<1x32xf32>
    %121 = vector.broadcast %120 : vector<1x32xf32> to vector<8x32xf32>
    %122 = arith.addf %118, %121 : vector<8x32xf32>
    %c2_76 = arith.constant 2 : index
    %c0_77 = arith.constant 0 : index
    %c0_78 = arith.constant 0 : index
    %123 = vector.load %arg3[%c2_76, %c0_77, %c0_78] : memref<12x1x32xf32, #tpu.memory_space<vmem>>, vector<1x1x32xf32>
    %124 = vector.shape_cast %123 : vector<1x1x32xf32> to vector<1x32xf32>
    %c3_79 = arith.constant 3 : index
    %c0_80 = arith.constant 0 : index
    %c0_81 = arith.constant 0 : index
    %125 = vector.load %arg3[%c3_79, %c0_80, %c0_81] : memref<12x1x32xf32, #tpu.memory_space<vmem>>, vector<1x1x32xf32>
    %126 = vector.shape_cast %125 : vector<1x1x32xf32> to vector<1x32xf32>
    %cst_82 = arith.constant dense<0.000000e+00> : vector<8xf32>
    %127 = vector.multi_reduction <add>, %122, %cst_82 [1] : vector<8x32xf32> to vector<8xf32>
    %128 = vector.shape_cast %127 : vector<8xf32> to vector<8x1xf32>
    %cst_83 = arith.constant 3.200000e+01 : f32
    %129 = vector.broadcast %cst_83 : f32 to vector<8x1xf32>
    %130 = arith.divf %128, %129 : vector<8x1xf32>
    %131 = vector.broadcast %130 : vector<8x1xf32> to vector<8x32xf32>
    %132 = arith.subf %122, %131 : vector<8x32xf32>
    %133 = arith.mulf %132, %132 : vector<8x32xf32>
    %cst_84 = arith.constant dense<0.000000e+00> : vector<8xf32>
    %134 = vector.multi_reduction <add>, %133, %cst_84 [1] : vector<8x32xf32> to vector<8xf32>
    %135 = vector.shape_cast %134 : vector<8xf32> to vector<8x1xf32>
    %cst_85 = arith.constant 3.200000e+01 : f32
    %136 = vector.broadcast %cst_85 : f32 to vector<8x1xf32>
    %137 = arith.divf %135, %136 : vector<8x1xf32>
    %cst_86 = arith.constant 9.99999996E-13 : f32
    %138 = vector.broadcast %cst_86 : f32 to vector<8x1xf32>
    %139 = arith.addf %137, %138 : vector<8x1xf32>
    %140 = math.rsqrt %139 : vector<8x1xf32>
    %141 = vector.broadcast %140 : vector<8x1xf32> to vector<8x32xf32>
    %142 = arith.mulf %132, %141 : vector<8x32xf32>
    %143 = vector.broadcast %124 : vector<1x32xf32> to vector<8x32xf32>
    %144 = arith.mulf %142, %143 : vector<8x32xf32>
    %145 = vector.broadcast %126 : vector<1x32xf32> to vector<8x32xf32>
    %146 = arith.addf %144, %145 : vector<8x32xf32>
    %147 = arith.truncf %146 : vector<8x32xf32> to vector<8x32xbf16>
    %c0_87 = arith.constant 0 : index
    %c0_88 = arith.constant 0 : index
    %c0_89 = arith.constant 0 : index
    %148 = vector.load %arg8[%c0_87, %c0_88, %c0_89] : memref<2x32x64xbf16, #tpu.memory_space<vmem>>, vector<1x32x64xbf16>
    %149 = vector.shape_cast %148 : vector<1x32x64xbf16> to vector<32x64xbf16>
    %cst_90 = arith.constant dense<0.000000e+00> : vector<8x64xf32>
    %150 = tpu.matmul %147, %149, %cst_90 {dimension_numbers = #tpu.dot_dimension_numbers<[1], [0], [0], [1], [0, 0, 1, 1], [], []>} : vector<8x32xbf16>, vector<32x64xbf16>, vector<8x64xf32> -> vector<8x64xf32>
    %c0_91 = arith.constant 0 : index
    %c0_92 = arith.constant 0 : index
    %c0_93 = arith.constant 0 : index
    %151 = vector.load %arg9[%c0_91, %c0_92, %c0_93] : memref<2x1x64xf32, #tpu.memory_space<vmem>>, vector<1x1x64xf32>
    %152 = vector.shape_cast %151 : vector<1x1x64xf32> to vector<1x64xf32>
    %153 = vector.broadcast %152 : vector<1x64xf32> to vector<8x64xf32>
    %154 = arith.addf %150, %153 : vector<8x64xf32>
    %cst_94 = arith.constant 5.000000e-01 : f32
    %155 = vector.broadcast %cst_94 : f32 to vector<8x64xf32>
    %156 = arith.mulf %155, %154 : vector<8x64xf32>
    %cst_95 = arith.constant 4.471500e-02 : f32
    %157 = vector.broadcast %cst_95 : f32 to vector<8x64xf32>
    %158 = arith.mulf %157, %154 : vector<8x64xf32>
    %159 = arith.mulf %158, %154 : vector<8x64xf32>
    %160 = arith.mulf %159, %154 : vector<8x64xf32>
    %161 = arith.addf %154, %160 : vector<8x64xf32>
    %cst_96 = arith.constant 0.797884583 : f32
    %162 = vector.broadcast %cst_96 : f32 to vector<8x64xf32>
    %163 = arith.mulf %162, %161 : vector<8x64xf32>
    %164 = math.tanh %163 : vector<8x64xf32>
    %cst_97 = arith.constant 1.000000e+00 : f32
    %165 = vector.broadcast %cst_97 : f32 to vector<8x64xf32>
    %166 = arith.addf %165, %164 : vector<8x64xf32>
    %167 = arith.mulf %156, %166 : vector<8x64xf32>
    %168 = arith.truncf %167 : vector<8x64xf32> to vector<8x64xbf16>
    %c0_98 = arith.constant 0 : index
    %c0_99 = arith.constant 0 : index
    %c0_100 = arith.constant 0 : index
    %169 = vector.load %arg10[%c0_98, %c0_99, %c0_100] : memref<2x64x32xbf16, #tpu.memory_space<vmem>>, vector<1x64x32xbf16>
    %170 = vector.shape_cast %169 : vector<1x64x32xbf16> to vector<64x32xbf16>
    %cst_101 = arith.constant dense<0.000000e+00> : vector<8x32xf32>
    %171 = tpu.matmul %168, %170, %cst_101 {dimension_numbers = #tpu.dot_dimension_numbers<[1], [0], [0], [1], [0, 0, 1, 1], [], []>} : vector<8x64xbf16>, vector<64x32xbf16>, vector<8x32xf32> -> vector<8x32xf32>
    %c1_102 = arith.constant 1 : index
    %c0_103 = arith.constant 0 : index
    %c0_104 = arith.constant 0 : index
    %172 = vector.load %arg7[%c1_102, %c0_103, %c0_104] : memref<4x1x32xf32, #tpu.memory_space<vmem>>, vector<1x1x32xf32>
    %173 = vector.shape_cast %172 : vector<1x1x32xf32> to vector<1x32xf32>
    %174 = vector.broadcast %173 : vector<1x32xf32> to vector<8x32xf32>
    %175 = arith.addf %171, %174 : vector<8x32xf32>
    %176 = arith.addf %146, %175 : vector<8x32xf32>
    %c4_105 = arith.constant 4 : index
    %c0_106 = arith.constant 0 : index
    %c0_107 = arith.constant 0 : index
    %177 = vector.load %arg3[%c4_105, %c0_106, %c0_107] : memref<12x1x32xf32, #tpu.memory_space<vmem>>, vector<1x1x32xf32>
    %178 = vector.shape_cast %177 : vector<1x1x32xf32> to vector<1x32xf32>
    %c5_108 = arith.constant 5 : index
    %c0_109 = arith.constant 0 : index
    %c0_110 = arith.constant 0 : index
    %179 = vector.load %arg3[%c5_108, %c0_109, %c0_110] : memref<12x1x32xf32, #tpu.memory_space<vmem>>, vector<1x1x32xf32>
    %180 = vector.shape_cast %179 : vector<1x1x32xf32> to vector<1x32xf32>
    %cst_111 = arith.constant dense<0.000000e+00> : vector<8xf32>
    %181 = vector.multi_reduction <add>, %176, %cst_111 [1] : vector<8x32xf32> to vector<8xf32>
    %182 = vector.shape_cast %181 : vector<8xf32> to vector<8x1xf32>
    %cst_112 = arith.constant 3.200000e+01 : f32
    %183 = vector.broadcast %cst_112 : f32 to vector<8x1xf32>
    %184 = arith.divf %182, %183 : vector<8x1xf32>
    %185 = vector.broadcast %184 : vector<8x1xf32> to vector<8x32xf32>
    %186 = arith.subf %176, %185 : vector<8x32xf32>
    %187 = arith.mulf %186, %186 : vector<8x32xf32>
    %cst_113 = arith.constant dense<0.000000e+00> : vector<8xf32>
    %188 = vector.multi_reduction <add>, %187, %cst_113 [1] : vector<8x32xf32> to vector<8xf32>
    %189 = vector.shape_cast %188 : vector<8xf32> to vector<8x1xf32>
    %cst_114 = arith.constant 3.200000e+01 : f32
    %190 = vector.broadcast %cst_114 : f32 to vector<8x1xf32>
    %191 = arith.divf %189, %190 : vector<8x1xf32>
    %cst_115 = arith.constant 9.99999996E-13 : f32
    %192 = vector.broadcast %cst_115 : f32 to vector<8x1xf32>
    %193 = arith.addf %191, %192 : vector<8x1xf32>
    %194 = math.rsqrt %193 : vector<8x1xf32>
    %195 = vector.broadcast %194 : vector<8x1xf32> to vector<8x32xf32>
    %196 = arith.mulf %186, %195 : vector<8x32xf32>
    %197 = vector.broadcast %178 : vector<1x32xf32> to vector<8x32xf32>
    %198 = arith.mulf %196, %197 : vector<8x32xf32>
    %199 = vector.broadcast %180 : vector<1x32xf32> to vector<8x32xf32>
    %200 = arith.addf %198, %199 : vector<8x32xf32>
    %201 = arith.truncf %200 : vector<8x32xf32> to vector<8x32xbf16>
    %cst_116 = arith.constant 0.000000e+00 : f32
    %202 = vector.broadcast %cst_116 : f32 to vector<8x32xf32>
    %c6 = arith.constant 6 : index
    %c0_117 = arith.constant 0 : index
    %c0_118 = arith.constant 0 : index
    %203 = vector.load %arg4[%c6, %c0_117, %c0_118] : memref<12x32x16xbf16, #tpu.memory_space<vmem>>, vector<1x32x16xbf16>
    %204 = vector.shape_cast %203 : vector<1x32x16xbf16> to vector<32x16xbf16>
    %cst_119 = arith.constant dense<0.000000e+00> : vector<8x16xf32>
    %205 = tpu.matmul %201, %204, %cst_119 {dimension_numbers = #tpu.dot_dimension_numbers<[1], [0], [0], [1], [0, 0, 1, 1], [], []>} : vector<8x32xbf16>, vector<32x16xbf16>, vector<8x16xf32> -> vector<8x16xf32>
    %c6_120 = arith.constant 6 : index
    %c0_121 = arith.constant 0 : index
    %c0_122 = arith.constant 0 : index
    %206 = vector.load %arg5[%c6_120, %c0_121, %c0_122] : memref<12x1x16xf32, #tpu.memory_space<vmem>>, vector<1x1x16xf32>
    %207 = vector.shape_cast %206 : vector<1x1x16xf32> to vector<1x16xf32>
    %208 = vector.broadcast %207 : vector<1x16xf32> to vector<8x16xf32>
    %209 = arith.addf %205, %208 : vector<8x16xf32>
    %c7 = arith.constant 7 : index
    %c0_123 = arith.constant 0 : index
    %c0_124 = arith.constant 0 : index
    %210 = vector.load %arg4[%c7, %c0_123, %c0_124] : memref<12x32x16xbf16, #tpu.memory_space<vmem>>, vector<1x32x16xbf16>
    %211 = vector.shape_cast %210 : vector<1x32x16xbf16> to vector<32x16xbf16>
    %cst_125 = arith.constant dense<0.000000e+00> : vector<8x16xf32>
    %212 = tpu.matmul %201, %211, %cst_125 {dimension_numbers = #tpu.dot_dimension_numbers<[1], [0], [0], [1], [0, 0, 1, 1], [], []>} : vector<8x32xbf16>, vector<32x16xbf16>, vector<8x16xf32> -> vector<8x16xf32>
    %c7_126 = arith.constant 7 : index
    %c0_127 = arith.constant 0 : index
    %c0_128 = arith.constant 0 : index
    %213 = vector.load %arg5[%c7_126, %c0_127, %c0_128] : memref<12x1x16xf32, #tpu.memory_space<vmem>>, vector<1x1x16xf32>
    %214 = vector.shape_cast %213 : vector<1x1x16xf32> to vector<1x16xf32>
    %215 = vector.broadcast %214 : vector<1x16xf32> to vector<8x16xf32>
    %216 = arith.addf %212, %215 : vector<8x16xf32>
    %c8 = arith.constant 8 : index
    %c0_129 = arith.constant 0 : index
    %c0_130 = arith.constant 0 : index
    %217 = vector.load %arg4[%c8, %c0_129, %c0_130] : memref<12x32x16xbf16, #tpu.memory_space<vmem>>, vector<1x32x16xbf16>
    %218 = vector.shape_cast %217 : vector<1x32x16xbf16> to vector<32x16xbf16>
    %cst_131 = arith.constant dense<0.000000e+00> : vector<8x16xf32>
    %219 = tpu.matmul %201, %218, %cst_131 {dimension_numbers = #tpu.dot_dimension_numbers<[1], [0], [0], [1], [0, 0, 1, 1], [], []>} : vector<8x32xbf16>, vector<32x16xbf16>, vector<8x16xf32> -> vector<8x16xf32>
    %c8_132 = arith.constant 8 : index
    %c0_133 = arith.constant 0 : index
    %c0_134 = arith.constant 0 : index
    %220 = vector.load %arg5[%c8_132, %c0_133, %c0_134] : memref<12x1x16xf32, #tpu.memory_space<vmem>>, vector<1x1x16xf32>
    %221 = vector.shape_cast %220 : vector<1x1x16xf32> to vector<1x16xf32>
    %222 = vector.broadcast %221 : vector<1x16xf32> to vector<8x16xf32>
    %223 = arith.addf %219, %222 : vector<8x16xf32>
    %cst_135 = arith.constant dense<0.000000e+00> : vector<8x8xf32>
    %224 = tpu.matmul %209, %216, %cst_135 {dimension_numbers = #tpu.dot_dimension_numbers<[1], [1], [0], [0], [0, 0, 1, 0], [], []>} : vector<8x16xf32>, vector<8x16xf32>, vector<8x8xf32> -> vector<8x8xf32>
    %cst_136 = arith.constant 2.500000e-01 : f32
    %225 = vector.broadcast %cst_136 : f32 to vector<8x8xf32>
    %226 = arith.mulf %224, %225 : vector<8x8xf32>
    %227 = vector.broadcast %31 : vector<1x8xf32> to vector<8x8xf32>
    %228 = arith.addf %226, %227 : vector<8x8xf32>
    %cst_137 = arith.constant dense<0xFF800000> : vector<8xf32>
    %229 = vector.multi_reduction <maximumf>, %228, %cst_137 [1] : vector<8x8xf32> to vector<8xf32>
    %230 = vector.shape_cast %229 : vector<8xf32> to vector<8x1xf32>
    %231 = vector.broadcast %230 : vector<8x1xf32> to vector<8x8xf32>
    %232 = arith.subf %228, %231 : vector<8x8xf32>
    %233 = math.exp %232 : vector<8x8xf32>
    %cst_138 = arith.constant dense<0.000000e+00> : vector<8xf32>
    %234 = vector.multi_reduction <add>, %233, %cst_138 [1] : vector<8x8xf32> to vector<8xf32>
    %235 = vector.shape_cast %234 : vector<8xf32> to vector<8x1xf32>
    %236 = tpu.reciprocal %235 {approx = true} : vector<8x1xf32> -> vector<8x1xf32>
    %237 = vector.broadcast %236 : vector<8x1xf32> to vector<8x8xf32>
    %238 = arith.mulf %233, %237 : vector<8x8xf32>
    %cst_139 = arith.constant dense<0.000000e+00> : vector<8x16xf32>
    %239 = tpu.matmul %238, %223, %cst_139 {dimension_numbers = #tpu.dot_dimension_numbers<[1], [0], [0], [1], [0, 0, 1, 1], [], []>} : vector<8x8xf32>, vector<8x16xf32>, vector<8x16xf32> -> vector<8x16xf32>
    %240 = arith.truncf %239 : vector<8x16xf32> to vector<8x16xbf16>
    %c2_140 = arith.constant 2 : index
    %c0_141 = arith.constant 0 : index
    %c0_142 = arith.constant 0 : index
    %241 = vector.load %arg6[%c2_140, %c0_141, %c0_142] : memref<4x16x32xbf16, #tpu.memory_space<vmem>>, vector<1x16x32xbf16>
    %242 = vector.shape_cast %241 : vector<1x16x32xbf16> to vector<16x32xbf16>
    %cst_143 = arith.constant dense<0.000000e+00> : vector<8x32xf32>
    %243 = tpu.matmul %240, %242, %cst_143 {dimension_numbers = #tpu.dot_dimension_numbers<[1], [0], [0], [1], [0, 0, 1, 1], [], []>} : vector<8x16xbf16>, vector<16x32xbf16>, vector<8x32xf32> -> vector<8x32xf32>
    %244 = arith.addf %202, %243 : vector<8x32xf32>
    %c9 = arith.constant 9 : index
    %c0_144 = arith.constant 0 : index
    %c0_145 = arith.constant 0 : index
    %245 = vector.load %arg4[%c9, %c0_144, %c0_145] : memref<12x32x16xbf16, #tpu.memory_space<vmem>>, vector<1x32x16xbf16>
    %246 = vector.shape_cast %245 : vector<1x32x16xbf16> to vector<32x16xbf16>
    %cst_146 = arith.constant dense<0.000000e+00> : vector<8x16xf32>
    %247 = tpu.matmul %201, %246, %cst_146 {dimension_numbers = #tpu.dot_dimension_numbers<[1], [0], [0], [1], [0, 0, 1, 1], [], []>} : vector<8x32xbf16>, vector<32x16xbf16>, vector<8x16xf32> -> vector<8x16xf32>
    %c9_147 = arith.constant 9 : index
    %c0_148 = arith.constant 0 : index
    %c0_149 = arith.constant 0 : index
    %248 = vector.load %arg5[%c9_147, %c0_148, %c0_149] : memref<12x1x16xf32, #tpu.memory_space<vmem>>, vector<1x1x16xf32>
    %249 = vector.shape_cast %248 : vector<1x1x16xf32> to vector<1x16xf32>
    %250 = vector.broadcast %249 : vector<1x16xf32> to vector<8x16xf32>
    %251 = arith.addf %247, %250 : vector<8x16xf32>
    %c10 = arith.constant 10 : index
    %c0_150 = arith.constant 0 : index
    %c0_151 = arith.constant 0 : index
    %252 = vector.load %arg4[%c10, %c0_150, %c0_151] : memref<12x32x16xbf16, #tpu.memory_space<vmem>>, vector<1x32x16xbf16>
    %253 = vector.shape_cast %252 : vector<1x32x16xbf16> to vector<32x16xbf16>
    %cst_152 = arith.constant dense<0.000000e+00> : vector<8x16xf32>
    %254 = tpu.matmul %201, %253, %cst_152 {dimension_numbers = #tpu.dot_dimension_numbers<[1], [0], [0], [1], [0, 0, 1, 1], [], []>} : vector<8x32xbf16>, vector<32x16xbf16>, vector<8x16xf32> -> vector<8x16xf32>
    %c10_153 = arith.constant 10 : index
    %c0_154 = arith.constant 0 : index
    %c0_155 = arith.constant 0 : index
    %255 = vector.load %arg5[%c10_153, %c0_154, %c0_155] : memref<12x1x16xf32, #tpu.memory_space<vmem>>, vector<1x1x16xf32>
    %256 = vector.shape_cast %255 : vector<1x1x16xf32> to vector<1x16xf32>
    %257 = vector.broadcast %256 : vector<1x16xf32> to vector<8x16xf32>
    %258 = arith.addf %254, %257 : vector<8x16xf32>
    %c11 = arith.constant 11 : index
    %c0_156 = arith.constant 0 : index
    %c0_157 = arith.constant 0 : index
    %259 = vector.load %arg4[%c11, %c0_156, %c0_157] : memref<12x32x16xbf16, #tpu.memory_space<vmem>>, vector<1x32x16xbf16>
    %260 = vector.shape_cast %259 : vector<1x32x16xbf16> to vector<32x16xbf16>
    %cst_158 = arith.constant dense<0.000000e+00> : vector<8x16xf32>
    %261 = tpu.matmul %201, %260, %cst_158 {dimension_numbers = #tpu.dot_dimension_numbers<[1], [0], [0], [1], [0, 0, 1, 1], [], []>} : vector<8x32xbf16>, vector<32x16xbf16>, vector<8x16xf32> -> vector<8x16xf32>
    %c11_159 = arith.constant 11 : index
    %c0_160 = arith.constant 0 : index
    %c0_161 = arith.constant 0 : index
    %262 = vector.load %arg5[%c11_159, %c0_160, %c0_161] : memref<12x1x16xf32, #tpu.memory_space<vmem>>, vector<1x1x16xf32>
    %263 = vector.shape_cast %262 : vector<1x1x16xf32> to vector<1x16xf32>
    %264 = vector.broadcast %263 : vector<1x16xf32> to vector<8x16xf32>
    %265 = arith.addf %261, %264 : vector<8x16xf32>
    %cst_162 = arith.constant dense<0.000000e+00> : vector<8x8xf32>
    %266 = tpu.matmul %251, %258, %cst_162 {dimension_numbers = #tpu.dot_dimension_numbers<[1], [1], [0], [0], [0, 0, 1, 0], [], []>} : vector<8x16xf32>, vector<8x16xf32>, vector<8x8xf32> -> vector<8x8xf32>
    %cst_163 = arith.constant 2.500000e-01 : f32
    %267 = vector.broadcast %cst_163 : f32 to vector<8x8xf32>
    %268 = arith.mulf %266, %267 : vector<8x8xf32>
    %269 = vector.broadcast %31 : vector<1x8xf32> to vector<8x8xf32>
    %270 = arith.addf %268, %269 : vector<8x8xf32>
    %cst_164 = arith.constant dense<0xFF800000> : vector<8xf32>
    %271 = vector.multi_reduction <maximumf>, %270, %cst_164 [1] : vector<8x8xf32> to vector<8xf32>
    %272 = vector.shape_cast %271 : vector<8xf32> to vector<8x1xf32>
    %273 = vector.broadcast %272 : vector<8x1xf32> to vector<8x8xf32>
    %274 = arith.subf %270, %273 : vector<8x8xf32>
    %275 = math.exp %274 : vector<8x8xf32>
    %cst_165 = arith.constant dense<0.000000e+00> : vector<8xf32>
    %276 = vector.multi_reduction <add>, %275, %cst_165 [1] : vector<8x8xf32> to vector<8xf32>
    %277 = vector.shape_cast %276 : vector<8xf32> to vector<8x1xf32>
    %278 = tpu.reciprocal %277 {approx = true} : vector<8x1xf32> -> vector<8x1xf32>
    %279 = vector.broadcast %278 : vector<8x1xf32> to vector<8x8xf32>
    %280 = arith.mulf %275, %279 : vector<8x8xf32>
    %cst_166 = arith.constant dense<0.000000e+00> : vector<8x16xf32>
    %281 = tpu.matmul %280, %265, %cst_166 {dimension_numbers = #tpu.dot_dimension_numbers<[1], [0], [0], [1], [0, 0, 1, 1], [], []>} : vector<8x8xf32>, vector<8x16xf32>, vector<8x16xf32> -> vector<8x16xf32>
    %282 = arith.truncf %281 : vector<8x16xf32> to vector<8x16xbf16>
    %c3_167 = arith.constant 3 : index
    %c0_168 = arith.constant 0 : index
    %c0_169 = arith.constant 0 : index
    %283 = vector.load %arg6[%c3_167, %c0_168, %c0_169] : memref<4x16x32xbf16, #tpu.memory_space<vmem>>, vector<1x16x32xbf16>
    %284 = vector.shape_cast %283 : vector<1x16x32xbf16> to vector<16x32xbf16>
    %cst_170 = arith.constant dense<0.000000e+00> : vector<8x32xf32>
    %285 = tpu.matmul %282, %284, %cst_170 {dimension_numbers = #tpu.dot_dimension_numbers<[1], [0], [0], [1], [0, 0, 1, 1], [], []>} : vector<8x16xbf16>, vector<16x32xbf16>, vector<8x32xf32> -> vector<8x32xf32>
    %286 = arith.addf %244, %285 : vector<8x32xf32>
    %287 = arith.addf %200, %286 : vector<8x32xf32>
    %c2_171 = arith.constant 2 : index
    %c0_172 = arith.constant 0 : index
    %c0_173 = arith.constant 0 : index
    %288 = vector.load %arg7[%c2_171, %c0_172, %c0_173] : memref<4x1x32xf32, #tpu.memory_space<vmem>>, vector<1x1x32xf32>
    %289 = vector.shape_cast %288 : vector<1x1x32xf32> to vector<1x32xf32>
    %290 = vector.broadcast %289 : vector<1x32xf32> to vector<8x32xf32>
    %291 = arith.addf %287, %290 : vector<8x32xf32>
    %c6_174 = arith.constant 6 : index
    %c0_175 = arith.constant 0 : index
    %c0_176 = arith.constant 0 : index
    %292 = vector.load %arg3[%c6_174, %c0_175, %c0_176] : memref<12x1x32xf32, #tpu.memory_space<vmem>>, vector<1x1x32xf32>
    %293 = vector.shape_cast %292 : vector<1x1x32xf32> to vector<1x32xf32>
    %c7_177 = arith.constant 7 : index
    %c0_178 = arith.constant 0 : index
    %c0_179 = arith.constant 0 : index
    %294 = vector.load %arg3[%c7_177, %c0_178, %c0_179] : memref<12x1x32xf32, #tpu.memory_space<vmem>>, vector<1x1x32xf32>
    %295 = vector.shape_cast %294 : vector<1x1x32xf32> to vector<1x32xf32>
    %cst_180 = arith.constant dense<0.000000e+00> : vector<8xf32>
    %296 = vector.multi_reduction <add>, %291, %cst_180 [1] : vector<8x32xf32> to vector<8xf32>
    %297 = vector.shape_cast %296 : vector<8xf32> to vector<8x1xf32>
    %cst_181 = arith.constant 3.200000e+01 : f32
    %298 = vector.broadcast %cst_181 : f32 to vector<8x1xf32>
    %299 = arith.divf %297, %298 : vector<8x1xf32>
    %300 = vector.broadcast %299 : vector<8x1xf32> to vector<8x32xf32>
    %301 = arith.subf %291, %300 : vector<8x32xf32>
    %302 = arith.mulf %301, %301 : vector<8x32xf32>
    %cst_182 = arith.constant dense<0.000000e+00> : vector<8xf32>
    %303 = vector.multi_reduction <add>, %302, %cst_182 [1] : vector<8x32xf32> to vector<8xf32>
    %304 = vector.shape_cast %303 : vector<8xf32> to vector<8x1xf32>
    %cst_183 = arith.constant 3.200000e+01 : f32
    %305 = vector.broadcast %cst_183 : f32 to vector<8x1xf32>
    %306 = arith.divf %304, %305 : vector<8x1xf32>
    %cst_184 = arith.constant 9.99999996E-13 : f32
    %307 = vector.broadcast %cst_184 : f32 to vector<8x1xf32>
    %308 = arith.addf %306, %307 : vector<8x1xf32>
    %309 = math.rsqrt %308 : vector<8x1xf32>
    %310 = vector.broadcast %309 : vector<8x1xf32> to vector<8x32xf32>
    %311 = arith.mulf %301, %310 : vector<8x32xf32>
    %312 = vector.broadcast %293 : vector<1x32xf32> to vector<8x32xf32>
    %313 = arith.mulf %311, %312 : vector<8x32xf32>
    %314 = vector.broadcast %295 : vector<1x32xf32> to vector<8x32xf32>
    %315 = arith.addf %313, %314 : vector<8x32xf32>
    %316 = arith.truncf %315 : vector<8x32xf32> to vector<8x32xbf16>
    %c1_185 = arith.constant 1 : index
    %c0_186 = arith.constant 0 : index
    %c0_187 = arith.constant 0 : index
    %317 = vector.load %arg8[%c1_185, %c0_186, %c0_187] : memref<2x32x64xbf16, #tpu.memory_space<vmem>>, vector<1x32x64xbf16>
    %318 = vector.shape_cast %317 : vector<1x32x64xbf16> to vector<32x64xbf16>
    %cst_188 = arith.constant dense<0.000000e+00> : vector<8x64xf32>
    %319 = tpu.matmul %316, %318, %cst_188 {dimension_numbers = #tpu.dot_dimension_numbers<[1], [0], [0], [1], [0, 0, 1, 1], [], []>} : vector<8x32xbf16>, vector<32x64xbf16>, vector<8x64xf32> -> vector<8x64xf32>
    %c1_189 = arith.constant 1 : index
    %c0_190 = arith.constant 0 : index
    %c0_191 = arith.constant 0 : index
    %320 = vector.load %arg9[%c1_189, %c0_190, %c0_191] : memref<2x1x64xf32, #tpu.memory_space<vmem>>, vector<1x1x64xf32>
    %321 = vector.shape_cast %320 : vector<1x1x64xf32> to vector<1x64xf32>
    %322 = vector.broadcast %321 : vector<1x64xf32> to vector<8x64xf32>
    %323 = arith.addf %319, %322 : vector<8x64xf32>
    %cst_192 = arith.constant 5.000000e-01 : f32
    %324 = vector.broadcast %cst_192 : f32 to vector<8x64xf32>
    %325 = arith.mulf %324, %323 : vector<8x64xf32>
    %cst_193 = arith.constant 4.471500e-02 : f32
    %326 = vector.broadcast %cst_193 : f32 to vector<8x64xf32>
    %327 = arith.mulf %326, %323 : vector<8x64xf32>
    %328 = arith.mulf %327, %323 : vector<8x64xf32>
    %329 = arith.mulf %328, %323 : vector<8x64xf32>
    %330 = arith.addf %323, %329 : vector<8x64xf32>
    %cst_194 = arith.constant 0.797884583 : f32
    %331 = vector.broadcast %cst_194 : f32 to vector<8x64xf32>
    %332 = arith.mulf %331, %330 : vector<8x64xf32>
    %333 = math.tanh %332 : vector<8x64xf32>
    %cst_195 = arith.constant 1.000000e+00 : f32
    %334 = vector.broadcast %cst_195 : f32 to vector<8x64xf32>
    %335 = arith.addf %334, %333 : vector<8x64xf32>
    %336 = arith.mulf %325, %335 : vector<8x64xf32>
    %337 = arith.truncf %336 : vector<8x64xf32> to vector<8x64xbf16>
    %c1_196 = arith.constant 1 : index
    %c0_197 = arith.constant 0 : index
    %c0_198 = arith.constant 0 : index
    %338 = vector.load %arg10[%c1_196, %c0_197, %c0_198] : memref<2x64x32xbf16, #tpu.memory_space<vmem>>, vector<1x64x32xbf16>
    %339 = vector.shape_cast %338 : vector<1x64x32xbf16> to vector<64x32xbf16>
    %cst_199 = arith.constant dense<0.000000e+00> : vector<8x32xf32>
    %340 = tpu.matmul %337, %339, %cst_199 {dimension_numbers = #tpu.dot_dimension_numbers<[1], [0], [0], [1], [0, 0, 1, 1], [], []>} : vector<8x64xbf16>, vector<64x32xbf16>, vector<8x32xf32> -> vector<8x32xf32>
    %c3_200 = arith.constant 3 : index
    %c0_201 = arith.constant 0 : index
    %c0_202 = arith.constant 0 : index
    %341 = vector.load %arg7[%c3_200, %c0_201, %c0_202] : memref<4x1x32xf32, #tpu.memory_space<vmem>>, vector<1x1x32xf32>
    %342 = vector.shape_cast %341 : vector<1x1x32xf32> to vector<1x32xf32>
    %343 = vector.broadcast %342 : vector<1x32xf32> to vector<8x32xf32>
    %344 = arith.addf %340, %343 : vector<8x32xf32>
    %345 = arith.addf %315, %344 : vector<8x32xf32>
    %c8_203 = arith.constant 8 : index
    %c0_204 = arith.constant 0 : index
    %c0_205 = arith.constant 0 : index
    %346 = vector.load %arg3[%c8_203, %c0_204, %c0_205] : memref<12x1x32xf32, #tpu.memory_space<vmem>>, vector<1x1x32xf32>
    %347 = vector.shape_cast %346 : vector<1x1x32xf32> to vector<1x32xf32>
    %c9_206 = arith.constant 9 : index
    %c0_207 = arith.constant 0 : index
    %c0_208 = arith.constant 0 : index
    %348 = vector.load %arg3[%c9_206, %c0_207, %c0_208] : memref<12x1x32xf32, #tpu.memory_space<vmem>>, vector<1x1x32xf32>
    %349 = vector.shape_cast %348 : vector<1x1x32xf32> to vector<1x32xf32>
    %cst_209 = arith.constant dense<0.000000e+00> : vector<8xf32>
    %350 = vector.multi_reduction <add>, %345, %cst_209 [1] : vector<8x32xf32> to vector<8xf32>
    %351 = vector.shape_cast %350 : vector<8xf32> to vector<8x1xf32>
    %cst_210 = arith.constant 3.200000e+01 : f32
    %352 = vector.broadcast %cst_210 : f32 to vector<8x1xf32>
    %353 = arith.divf %351, %352 : vector<8x1xf32>
    %354 = vector.broadcast %353 : vector<8x1xf32> to vector<8x32xf32>
    %355 = arith.subf %345, %354 : vector<8x32xf32>
    %356 = arith.mulf %355, %355 : vector<8x32xf32>
    %cst_211 = arith.constant dense<0.000000e+00> : vector<8xf32>
    %357 = vector.multi_reduction <add>, %356, %cst_211 [1] : vector<8x32xf32> to vector<8xf32>
    %358 = vector.shape_cast %357 : vector<8xf32> to vector<8x1xf32>
    %cst_212 = arith.constant 3.200000e+01 : f32
    %359 = vector.broadcast %cst_212 : f32 to vector<8x1xf32>
    %360 = arith.divf %358, %359 : vector<8x1xf32>
    %cst_213 = arith.constant 9.99999996E-13 : f32
    %361 = vector.broadcast %cst_213 : f32 to vector<8x1xf32>
    %362 = arith.addf %360, %361 : vector<8x1xf32>
    %363 = math.rsqrt %362 : vector<8x1xf32>
    %364 = vector.broadcast %363 : vector<8x1xf32> to vector<8x32xf32>
    %365 = arith.mulf %355, %364 : vector<8x32xf32>
    %366 = vector.broadcast %347 : vector<1x32xf32> to vector<8x32xf32>
    %367 = arith.mulf %365, %366 : vector<8x32xf32>
    %368 = vector.broadcast %349 : vector<1x32xf32> to vector<8x32xf32>
    %369 = arith.addf %367, %368 : vector<8x32xf32>
    %370 = vector.extract_strided_slice %369 {offsets = [0, 0], sizes = [1, 32], strides = [1, 1]} : vector<8x32xf32> to vector<1x32xf32>
    %c10_214 = arith.constant 10 : index
    %c0_215 = arith.constant 0 : index
    %c0_216 = arith.constant 0 : index
    %371 = vector.load %arg3[%c10_214, %c0_215, %c0_216] : memref<12x1x32xf32, #tpu.memory_space<vmem>>, vector<1x1x32xf32>
    %372 = vector.shape_cast %371 : vector<1x1x32xf32> to vector<1x32xf32>
    %c11_217 = arith.constant 11 : index
    %c0_218 = arith.constant 0 : index
    %c0_219 = arith.constant 0 : index
    %373 = vector.load %arg3[%c11_217, %c0_218, %c0_219] : memref<12x1x32xf32, #tpu.memory_space<vmem>>, vector<1x1x32xf32>
    %374 = vector.shape_cast %373 : vector<1x1x32xf32> to vector<1x32xf32>
    %cst_220 = arith.constant dense<0.000000e+00> : vector<1xf32>
    %375 = vector.multi_reduction <add>, %370, %cst_220 [1] : vector<1x32xf32> to vector<1xf32>
    %376 = vector.shape_cast %375 : vector<1xf32> to vector<1x1xf32>
    %cst_221 = arith.constant 3.200000e+01 : f32
    %377 = vector.broadcast %cst_221 : f32 to vector<1x1xf32>
    %378 = arith.divf %376, %377 : vector<1x1xf32>
    %379 = vector.broadcast %378 : vector<1x1xf32> to vector<1x32xf32>
    %380 = arith.subf %370, %379 : vector<1x32xf32>
    %381 = arith.mulf %380, %380 : vector<1x32xf32>
    %cst_222 = arith.constant dense<0.000000e+00> : vector<1xf32>
    %382 = vector.multi_reduction <add>, %381, %cst_222 [1] : vector<1x32xf32> to vector<1xf32>
    %383 = vector.shape_cast %382 : vector<1xf32> to vector<1x1xf32>
    %cst_223 = arith.constant 3.200000e+01 : f32
    %384 = vector.broadcast %cst_223 : f32 to vector<1x1xf32>
    %385 = arith.divf %383, %384 : vector<1x1xf32>
    %cst_224 = arith.constant 9.99999974E-6 : f32
    %386 = vector.broadcast %cst_224 : f32 to vector<1x1xf32>
    %387 = arith.addf %385, %386 : vector<1x1xf32>
    %388 = math.rsqrt %387 : vector<1x1xf32>
    %389 = vector.broadcast %388 : vector<1x1xf32> to vector<1x32xf32>
    %390 = arith.mulf %380, %389 : vector<1x32xf32>
    %391 = arith.mulf %390, %372 : vector<1x32xf32>
    %392 = arith.addf %391, %374 : vector<1x32xf32>
    %393 = arith.truncf %392 : vector<1x32xf32> to vector<1x32xbf16>
    %c0_225 = arith.constant 0 : index
    %c0_226 = arith.constant 0 : index
    %394 = vector.load %arg11[%c0_225, %c0_226] : memref<32x128xbf16, #tpu.memory_space<vmem>>, vector<32x128xbf16>
    %cst_227 = arith.constant dense<0.000000e+00> : vector<1x128xf32>
    %395 = tpu.matmul %393, %394, %cst_227 {dimension_numbers = #tpu.dot_dimension_numbers<[1], [0], [0], [1], [0, 0, 1, 1], [], []>} : vector<1x32xbf16>, vector<32x128xbf16>, vector<1x128xf32> -> vector<1x128xf32>
    %c0_228 = arith.constant 0 : index
    %c0_229 = arith.constant 0 : index
    %396 = vector.load %arg12[%c0_228, %c0_229] : memref<1x128xf32, #tpu.memory_space<vmem>>, vector<1x128xf32>
    %397 = arith.addf %395, %396 : vector<1x128xf32>
    %398 = vector.shape_cast %397 : vector<1x128xf32> to vector<1x128xf32>
    %399 = vector.broadcast %398 : vector<1x128xf32> to vector<8x128xf32>
    %c0_230 = arith.constant 0 : index
    %c0_231 = arith.constant 0 : index
    %c0_232 = arith.constant 0 : index
    %400 = vector.load %arg13[%c0_230, %c0_231, %c0_232] : memref<1x8x128xf32, #tpu.memory_space<vmem>>, vector<1x8x128xf32>
    %401 = vector.shape_cast %400 : vector<1x8x128xf32> to vector<8x128xf32>
    %402 = vector.shape_cast %399 : vector<8x128xf32> to vector<1x8x128xf32>
    tpu.vector_store %arg13[%c0_230, %c0_231, %c0_232], %402 {strides = array<i32>} : memref<1x8x128xf32, #tpu.memory_space<vmem>>, vector<1x8x128xf32>,
    return
  }
  func.func @transform_0(%arg0: i32) -> (i32, i32, i32) {
    %c0_i32 = arith.constant 0 : i32
    %c0_i32_0 = arith.constant 0 : i32
    %c0_i32_1 = arith.constant 0 : i32
    return %arg0, %c0_i32, %c0_i32_0 : i32, i32, i32
  }
  func.func @transform_1(%arg0: i32) -> (i32, i32, i32) {
    %c0_i32 = arith.constant 0 : i32
    %c0_i32_0 = arith.constant 0 : i32
    %c0_i32_1 = arith.constant 0 : i32
    return %arg0, %c0_i32, %c0_i32_0 : i32, i32, i32
  }
  func.func @transform_2(%arg0: i32) -> (i32, i32, i32) {
    %c0_i32 = arith.constant 0 : i32
    %c0_i32_0 = arith.constant 0 : i32
    %c0_i32_1 = arith.constant 0 : i32
    %c0_i32_2 = arith.constant 0 : i32
    return %c0_i32, %c0_i32_0, %c0_i32_1 : i32, i32, i32
  }
  func.func @transform_3(%arg0: i32) -> (i32, i32, i32) {
    %c0_i32 = arith.constant 0 : i32
    %c0_i32_0 = arith.constant 0 : i32
    %c0_i32_1 = arith.constant 0 : i32
    %c0_i32_2 = arith.constant 0 : i32
    return %c0_i32, %c0_i32_0, %c0_i32_1 : i32, i32, i32
  }
  func.func @transform_4(%arg0: i32) -> (i32, i32, i32) {
    %c0_i32 = arith.constant 0 : i32
    %c0_i32_0 = arith.constant 0 : i32
    %c0_i32_1 = arith.constant 0 : i32
    %c0_i32_2 = arith.constant 0 : i32
    return %c0_i32, %c0_i32_0, %c0_i32_1 : i32, i32, i32
  }
  func.func @transform_5(%arg0: i32) -> (i32, i32, i32) {
    %c0_i32 = arith.constant 0 : i32
    %c0_i32_0 = arith.constant 0 : i32
    %c0_i32_1 = arith.constant 0 : i32
    %c0_i32_2 = arith.constant 0 : i32
    return %c0_i32, %c0_i32_0, %c0_i32_1 : i32, i32, i32
  }
  func.func @transform_6(%arg0: i32) -> (i32, i32, i32) {
    %c0_i32 = arith.constant 0 : i32
    %c0_i32_0 = arith.constant 0 : i32
    %c0_i32_1 = arith.constant 0 : i32
    %c0_i32_2 = arith.constant 0 : i32
    return %c0_i32, %c0_i32_0, %c0_i32_1 : i32, i32, i32
  }
  func.func @transform_7(%arg0: i32) -> (i32, i32, i32) {
    %c0_i32 = arith.constant 0 : i32
    %c0_i32_0 = arith.constant 0 : i32
    %c0_i32_1 = arith.constant 0 : i32
    %c0_i32_2 = arith.constant 0 : i32
    return %c0_i32, %c0_i32_0, %c0_i32_1 : i32, i32, i32
  }
  func.func @transform_8(%arg0: i32) -> (i32, i32, i32) {
    %c0_i32 = arith.constant 0 : i32
    %c0_i32_0 = arith.constant 0 : i32
    %c0_i32_1 = arith.constant 0 : i32
    %c0_i32_2 = arith.constant 0 : i32
    return %c0_i32, %c0_i32_0, %c0_i32_1 : i32, i32, i32
  }
  func.func @transform_9(%arg0: i32) -> (i32, i32, i32) {
    %c0_i32 = arith.constant 0 : i32
    %c0_i32_0 = arith.constant 0 : i32
    %c0_i32_1 = arith.constant 0 : i32
    %c0_i32_2 = arith.constant 0 : i32
    return %c0_i32, %c0_i32_0, %c0_i32_1 : i32, i32, i32
  }
  func.func @transform_10(%arg0: i32) -> (i32, i32) {
    %c0_i32 = arith.constant 0 : i32
    %c0_i32_0 = arith.constant 0 : i32
    %c0_i32_1 = arith.constant 0 : i32
    return %c0_i32, %c0_i32_0 : i32, i32
  }
  func.func @transform_11(%arg0: i32) -> (i32, i32) {
    %c0_i32 = arith.constant 0 : i32
    %c0_i32_0 = arith.constant 0 : i32
    %c0_i32_1 = arith.constant 0 : i32
    return %c0_i32, %c0_i32_0 : i32, i32
  }
  func.func @transform_12(%arg0: i32) -> (i32, i32, i32) {
    %c0_i32 = arith.constant 0 : i32
    %c0_i32_0 = arith.constant 0 : i32
    %c0_i32_1 = arith.constant 0 : i32
    return %arg0, %c0_i32, %c0_i32_0 : i32, i32, i32
  }
}

</mosaic_0001>

<llo_original>
// kernel: tpu_custom_call.1
$region0: #{tpu_custom_call.1}
  #allocation0 [shape = 'u32[]', space=smem, size = 0x4, offset = 0x4, fixed_abs, tag = 'smem constant byte address 0x4 - core index']
  #allocation1 [shape = 'u32[144,128]{1,0:T(1,128)}', space=vmem, size = 0x12000, scoped, tag = 'internal scratch']
  %s0 = inlined_call_operand.vmem [shape: f32[2,8,32], index: 0, kind: input, shape index: {}]
  %s1 = inlined_call_operand.vmem [shape: f32[2,1,8], index: 1, kind: input, shape index: {}]
  %s2 = inlined_call_operand.vmem [shape: f32[12,1,32], index: 2, kind: input, shape index: {}]
  %s3 = inlined_call_operand.vmem [shape: bf16[12,32,16], index: 3, kind: input, shape index: {}]
  %s4 = inlined_call_operand.vmem [shape: f32[12,1,16], index: 4, kind: input, shape index: {}]
  %s5 = inlined_call_operand.vmem [shape: bf16[4,16,32], index: 5, kind: input, shape index: {}]
  %s6 = inlined_call_operand.vmem [shape: f32[4,1,32], index: 6, kind: input, shape index: {}]
  %s7 = inlined_call_operand.vmem [shape: bf16[2,32,64], index: 7, kind: input, shape index: {}]
  %s8 = inlined_call_operand.vmem [shape: f32[2,1,64], index: 8, kind: input, shape index: {}]
  %s9 = inlined_call_operand.vmem [shape: bf16[2,64,32], index: 9, kind: input, shape index: {}]
  %s10 = inlined_call_operand.vmem [shape: bf16[32,128], index: 10, kind: input, shape index: {}]
  %s11 = inlined_call_operand.vmem [shape: f32[1,128], index: 11, kind: input, shape index: {}]
  %s12 = inlined_call_operand.hbm [shape: f32[2,8,128], index: 12, kind: output, shape index: {}]
  %s13 = sld [smem:[#allocation0]]
  $region81: #{tpu_custom_call.1} parent=0
    _
  %s15 = ssub.s32 1, %s13
  %s16 = scalar_select 0, %s15, %s13
  $region1: #{tpu_custom_call.1} parent=0
    #allocation2 [shape = 'u8[8192]{0}', space=vmem, size = 0x2000, scoped, tag = 'output window, operand 0']
    #allocation3 [shape = 's32[2]{0}', space=sflag, size = 0x8, scoped, tag = 'scoped memory for tpu_custom_call.1']
    %17 = vsyncpa [#allocation3], 0
    %s18 = scalar_lea.sflag [#allocation3], 1
    %19 = vsyncpa %s18, 0
    loop: start=0, step=1, limit=4
    $region2: #{tpu_custom_call.1} parent=1 // loop_pre_header
      _
    $region3: #{tpu_custom_call.1} parent=1 // loop_header
      %s21 = sphi 0, %s25
      %p22 = scmp.ge.s32.totalorder %s21, 4
      %s31 = sphi 0, %s33
      %s34 = sphi 0, %s31
      %s35 = sphi 0, %s34
      %s51 = sphi 0, %s35
      %s57 = sphi 0, %s59
      %s60 = sphi 0, %s57
      %s61 = sphi 0, %s60
      %s77 = sphi 0, %s61
      %s81 = sphi 0, %s81
      %s83 = sphi 0, %s81
      %s84 = sphi 0, %s83
      %s98 = sphi 0, %s84
      %s102 = sphi 0, %s102
      %s104 = sphi 0, %s102
      %s105 = sphi 0, %s104
      %s119 = sphi 0, %s105
      %s123 = sphi 0, %s123
      %s125 = sphi 0, %s123
      %s126 = sphi 0, %s125
      %s140 = sphi 0, %s126
      %s144 = sphi 0, %s144
      %s146 = sphi 0, %s144
      %s147 = sphi 0, %s146
      %s161 = sphi 0, %s147
      %s165 = sphi 0, %s165
      %s167 = sphi 0, %s165
      %s168 = sphi 0, %s167
      %s182 = sphi 0, %s168
      %s186 = sphi 0, %s186
      %s188 = sphi 0, %s186
      %s189 = sphi 0, %s188
      %s203 = sphi 0, %s189
      %s207 = sphi 0, %s207
      %s209 = sphi 0, %s207
      %s210 = sphi 0, %s209
      %s224 = sphi 0, %s210
      %s228 = sphi 0, %s228
      %s230 = sphi 0, %s228
      %s231 = sphi 0, %s230
      %s245 = sphi 0, %s231
      %s249 = sphi 0, %s249
      %s251 = sphi 0, %s249
      %s252 = sphi 0, %s251
      %s266 = sphi 0, %s252
      %s270 = sphi 0, %s270
      %s272 = sphi 0, %s270
      %s273 = sphi 0, %s272
      %s287 = sphi 0, %s273
      %s293 = sphi 0, %s295
      %s296 = sphi 0, %s293
      %s297 = sphi 0, %s296
      %s313 = sphi 0, %s297
    $region4: #{tpu_custom_call.1} parent=1 // loop_header_branch
      %24 = sbr.rel (%p22) target = $region8
    $region5: #{tpu_custom_call.1} parent=1 // loop_body
      %s26 = ssub.s32 %s21, 1
      %s27 = ssub.s32 %s21, 2
      %s28 = sadd.s32 %s21, 1
      %s29 = ssub.s32 %s21, %s28
      %p30 = scmp.eq.s32.totalorder %s29, 0
      %s32 = sadd.s32 %s31, 1
      %s33 = scalar_select %p30, %s31, %s32
      %p36 = pneg %p30
      %p37 = scmp.eq.s32.totalorder %s21, 1
      %p38 = por %p36, %p37
      %p39 = scmp.ne.s32.totalorder %s31, %s34
      %p40 = scmp.eq.s32.totalorder %s21, 0
      %p41 = por %p39, %p40
      %p42 = scmp.ne.s32.totalorder %s31, %s34
      %p43 = scmp.eq.s32.totalorder %s26, 1
      %p44 = por %p42, %p43
      %p45 = scmp.ne.s32.totalorder %s34, %s35
      %p46 = scmp.eq.s32.totalorder %s26, 0
      %p47 = por %p45, %p46
      %p48 = scmp.ne.s32.totalorder %s34, %s35
      %p49 = scmp.eq.s32.totalorder %s27, 1
      %p50 = por %p48, %p49
      %p52 = scmp.ne.s32.totalorder %s35, %s51
      %p53 = scmp.eq.s32.totalorder %s27, 0
      %p54 = por %p52, %p53
      %s55 = ssub.s32 %s21, %s28
      %p56 = scmp.eq.s32.totalorder %s55, 0
      %s58 = sadd.s32 %s57, 1
      %s59 = scalar_select %p56, %s57, %s58
      %p62 = pneg %p56
      %p63 = scmp.eq.s32.totalorder %s21, 1
      %p64 = por %p62, %p63
      %p65 = scmp.ne.s32.totalorder %s57, %s60
      %p66 = scmp.eq.s32.totalorder %s21, 0
      %p67 = por %p65, %p66
      %p68 = scmp.ne.s32.totalorder %s57, %s60
      %p69 = scmp.eq.s32.totalorder %s26, 1
      %p70 = por %p68, %p69
      %p71 = scmp.ne.s32.totalorder %s60, %s61
      %p72 = scmp.eq.s32.totalorder %s26, 0
      %p73 = por %p71, %p72
      %p74 = scmp.ne.s32.totalorder %s60, %s61
      %p75 = scmp.eq.s32.totalorder %s27, 1
      %p76 = por %p74, %p75
      %p78 = scmp.ne.s32.totalorder %s61, %s77
      %p79 = scmp.eq.s32.totalorder %s27, 0
      %p80 = por %p78, %p79
      %s82 = sadd.s32 %s81, 1
      %p85 = scmp.eq.s32.totalorder %s21, 1
      %p86 = scmp.ne.s32.totalorder %s81, %s83
      %p87 = scmp.eq.s32.totalorder %s21, 0
      %p88 = por %p86, %p87
      %p89 = scmp.ne.s32.totalorder %s81, %s83
      %p90 = scmp.eq.s32.totalorder %s26, 1
      %p91 = por %p89, %p90
      %p92 = scmp.ne.s32.totalorder %s83, %s84
      %p93 = scmp.eq.s32.totalorder %s26, 0
      %p94 = por %p92, %p93
      %p95 = scmp.ne.s32.totalorder %s83, %s84
      %p96 = scmp.eq.s32.totalorder %s27, 1
      %p97 = por %p95, %p96
      %p99 = scmp.ne.s32.totalorder %s84, %s98
      %p100 = scmp.eq.s32.totalorder %s27, 0
      %p101 = por %p99, %p100
      %s103 = sadd.s32 %s102, 1
      %p106 = scmp.eq.s32.totalorder %s21, 1
      %p107 = scmp.ne.s32.totalorder %s102, %s104
      %p108 = scmp.eq.s32.totalorder %s21, 0
      %p109 = por %p107, %p108
      %p110 = scmp.ne.s32.totalorder %s102, %s104
      %p111 = scmp.eq.s32.totalorder %s26, 1
      %p112 = por %p110, %p111
      %p113 = scmp.ne.s32.totalorder %s104, %s105
      %p114 = scmp.eq.s32.totalorder %s26, 0
      %p115 = por %p113, %p114
      %p116 = scmp.ne.s32.totalorder %s104, %s105
      %p117 = scmp.eq.s32.totalorder %s27, 1
      %p118 = por %p116, %p117
      %p120 = scmp.ne.s32.totalorder %s105, %s119
      %p121 = scmp.eq.s32.totalorder %s27, 0
      %p122 = por %p120, %p121
      %s124 = sadd.s32 %s123, 1
      %p127 = scmp.eq.s32.totalorder %s21, 1
      %p128 = scmp.ne.s32.totalorder %s123, %s125
      %p129 = scmp.eq.s32.totalorder %s21, 0
      %p130 = por %p128, %p129
      %p131 = scmp.ne.s32.totalorder %s123, %s125
      %p132 = scmp.eq.s32.totalorder %s26, 1
      %p133 = por %p131, %p132
      %p134 = scmp.ne.s32.totalorder %s125, %s126
      %p135 = scmp.eq.s32.totalorder %s26, 0
      %p136 = por %p134, %p135
      %p137 = scmp.ne.s32.totalorder %s125, %s126
      %p138 = scmp.eq.s32.totalorder %s27, 1
      %p139 = por %p137, %p138
      %p141 = scmp.ne.s32.totalorder %s126, %s140
      %p142 = scmp.eq.s32.totalorder %s27, 0
      %p143 = por %p141, %p142
      %s145 = sadd.s32 %s144, 1
      %p148 = scmp.eq.s32.totalorder %s21, 1
      %p149 = scmp.ne.s32.totalorder %s144, %s146
      %p150 = scmp.eq.s32.totalorder %s21, 0
      %p151 = por %p149, %p150
      %p152 = scmp.ne.s32.totalorder %s144, %s146
      %p153 = scmp.eq.s32.totalorder %s26, 1
      %p154 = por %p152, %p153
      %p155 = scmp.ne.s32.totalorder %s146, %s147
      %p156 = scmp.eq.s32.totalorder %s26, 0
      %p157 = por %p155, %p156
      %p158 = scmp.ne.s32.totalorder %s146, %s147
      %p159 = scmp.eq.s32.totalorder %s27, 1
      %p160 = por %p158, %p159
      %p162 = scmp.ne.s32.totalorder %s147, %s161
      %p163 = scmp.eq.s32.totalorder %s27, 0
      %p164 = por %p162, %p163
      %s166 = sadd.s32 %s165, 1
      %p169 = scmp.eq.s32.totalorder %s21, 1
      %p170 = scmp.ne.s32.totalorder %s165, %s167
      %p171 = scmp.eq.s32.totalorder %s21, 0
      %p172 = por %p170, %p171
      %p173 = scmp.ne.s32.totalorder %s165, %s167
      %p174 = scmp.eq.s32.totalorder %s26, 1
      %p175 = por %p173, %p174
      %p176 = scmp.ne.s32.totalorder %s167, %s168
      %p177 = scmp.eq.s32.totalorder %s26, 0
      %p178 = por %p176, %p177
      %p179 = scmp.ne.s32.totalorder %s167, %s168
      %p180 = scmp.eq.s32.totalorder %s27, 1
      %p181 = por %p179, %p180
      %p183 = scmp.ne.s32.totalorder %s168, %s182
      %p184 = scmp.eq.s32.totalorder %s27, 0
      %p185 = por %p183, %p184
      %s187 = sadd.s32 %s186, 1
      %p190 = scmp.eq.s32.totalorder %s21, 1
      %p191 = scmp.ne.s32.totalorder %s186, %s188
      %p192 = scmp.eq.s32.totalorder %s21, 0
      %p193 = por %p191, %p192
      %p194 = scmp.ne.s32.totalorder %s186, %s188
      %p195 = scmp.eq.s32.totalorder %s26, 1
      %p196 = por %p194, %p195
      %p197 = scmp.ne.s32.totalorder %s188, %s189
      %p198 = scmp.eq.s32.totalorder %s26, 0
      %p199 = por %p197, %p198
      %p200 = scmp.ne.s32.totalorder %s188, %s189
      %p201 = scmp.eq.s32.totalorder %s27, 1
      %p202 = por %p200, %p201
      %p204 = scmp.ne.s32.totalorder %s189, %s203
      %p205 = scmp.eq.s32.totalorder %s27, 0
      %p206 = por %p204, %p205
      %s208 = sadd.s32 %s207, 1
      %p211 = scmp.eq.s32.totalorder %s21, 1
      %p212 = scmp.ne.s32.totalorder %s207, %s209
      %p213 = scmp.eq.s32.totalorder %s21, 0
      %p214 = por %p212, %p213
      %p215 = scmp.ne.s32.totalorder %s207, %s209
      %p216 = scmp.eq.s32.totalorder %s26, 1
      %p217 = por %p215, %p216
      %p218 = scmp.ne.s32.totalorder %s209, %s210
      %p219 = scmp.eq.s32.totalorder %s26, 0
      %p220 = por %p218, %p219
      %p221 = scmp.ne.s32.totalorder %s209, %s210
      %p222 = scmp.eq.s32.totalorder %s27, 1
      %p223 = por %p221, %p222
      %p225 = scmp.ne.s32.totalorder %s210, %s224
      %p226 = scmp.eq.s32.totalorder %s27, 0
      %p227 = por %p225, %p226
      %s229 = sadd.s32 %s228, 1
      %p232 = scmp.eq.s32.totalorder %s21, 1
      %p233 = scmp.ne.s32.totalorder %s228, %s230
      %p234 = scmp.eq.s32.totalorder %s21, 0
      %p235 = por %p233, %p234
      %p236 = scmp.ne.s32.totalorder %s228, %s230
      %p237 = scmp.eq.s32.totalorder %s26, 1
      %p238 = por %p236, %p237
      %p239 = scmp.ne.s32.totalorder %s230, %s231
      %p240 = scmp.eq.s32.totalorder %s26, 0
      %p241 = por %p239, %p240
      %p242 = scmp.ne.s32.totalorder %s230, %s231
      %p243 = scmp.eq.s32.totalorder %s27, 1
      %p244 = por %p242, %p243
      %p246 = scmp.ne.s32.totalorder %s231, %s245
      %p247 = scmp.eq.s32.totalorder %s27, 0
      %p248 = por %p246, %p247
      %s250 = sadd.s32 %s249, 1
      %p253 = scmp.eq.s32.totalorder %s21, 1
      %p254 = scmp.ne.s32.totalorder %s249, %s251
      %p255 = scmp.eq.s32.totalorder %s21, 0
      %p256 = por %p254, %p255
      %p257 = scmp.ne.s32.totalorder %s249, %s251
      %p258 = scmp.eq.s32.totalorder %s26, 1
      %p259 = por %p257, %p258
      %p260 = scmp.ne.s32.totalorder %s251, %s252
      %p261 = scmp.eq.s32.totalorder %s26, 0
      %p262 = por %p260, %p261
      %p263 = scmp.ne.s32.totalorder %s251, %s252
      %p264 = scmp.eq.s32.totalorder %s27, 1
      %p265 = por %p263, %p264
      %p267 = scmp.ne.s32.totalorder %s252, %s266
      %p268 = scmp.eq.s32.totalorder %s27, 0
      %p269 = por %p267, %p268
      %s271 = sadd.s32 %s270, 1
      %p274 = scmp.eq.s32.totalorder %s21, 1
      %p275 = scmp.ne.s32.totalorder %s270, %s272
      %p276 = scmp.eq.s32.totalorder %s21, 0
      %p277 = por %p275, %p276
      %p278 = scmp.ne.s32.totalorder %s270, %s272
      %p279 = scmp.eq.s32.totalorder %s26, 1
      %p280 = por %p278, %p279
      %p281 = scmp.ne.s32.totalorder %s272, %s273
      %p282 = scmp.eq.s32.totalorder %s26, 0
      %p283 = por %p281, %p282
      %p284 = scmp.ne.s32.totalorder %s272, %s273
      %p285 = scmp.eq.s32.totalorder %s27, 1
      %p286 = por %p284, %p285
      %p288 = scmp.ne.s32.totalorder %s273, %s287
      %p289 = scmp.eq.s32.totalorder %s27, 0
      %p290 = por %p288, %p289
      %s291 = ssub.s32 %s21, %s28
      %p292 = scmp.eq.s32.totalorder %s291, 0
      %s294 = sadd.s32 %s293, 1
      %s295 = scalar_select %p292, %s293, %s294
      %p298 = pneg %p292
      %p299 = scmp.eq.s32.totalorder %s21, 1
      %p300 = por %p298, %p299
      %p301 = scmp.ne.s32.totalorder %s293, %s296
      %p302 = scmp.eq.s32.totalorder %s21, 0
      %p303 = por %p301, %p302
      %p304 = scmp.ne.s32.totalorder %s293, %s296
      %p305 = scmp.eq.s32.totalorder %s26, 1
      %p306 = por %p304, %p305
      %p307 = scmp.ne.s32.totalorder %s296, %s297
      %p308 = scmp.eq.s32.totalorder %s26, 0
      %p309 = por %p307, %p308
      %p310 = scmp.ne.s32.totalorder %s296, %s297
      %p311 = scmp.eq.s32.totalorder %s27, 1
      %p312 = por %p310, %p311
      %p314 = scmp.ne.s32.totalorder %s297, %s313
      %p315 = scmp.eq.s32.totalorder %s27, 0
      %p316 = por %p314, %p315
      %p317 = scmp.le.s32.totalorder 1, %s21
      %p318 = scmp.lt.s32.totalorder %s21, 3
      %p319 = pnand %p317, %p318
      %p320 = pneg %p319
      // Predicated region
      $region9: #{tpu_custom_call.1} parent=5 // pred_check
        _
      $region10: #{tpu_custom_call.1} parent=5 // pred_check_branch
        %322 = sbr.rel (%p319) target = $region12
      $region11: #{tpu_custom_call.1} parent=5 // pred_region
        %s323 = ssub.s32 %s21, 1
        // Predicated region
        $region13: #{tpu_custom_call.1} parent=11 // pred_check
          %p324 = pneg %p94
        $region14: #{tpu_custom_call.1} parent=11 // pred_check_branch
          %326 = sbr.rel (%p324) target = $region16
        $region15: #{tpu_custom_call.1} parent=11 // pred_region
          _
        $region16: #{tpu_custom_call.1} parent=11 // pred_fallthru
          _
        // Predicated region
        $region17: #{tpu_custom_call.1} parent=11 // pred_check
          %p327 = pneg %p115
        $region18: #{tpu_custom_call.1} parent=11 // pred_check_branch
          %329 = sbr.rel (%p327) target = $region20
        $region19: #{tpu_custom_call.1} parent=11 // pred_region
          _
        $region20: #{tpu_custom_call.1} parent=11 // pred_fallthru
          _
        // Predicated region
        $region21: #{tpu_custom_call.1} parent=11 // pred_check
          %p330 = pneg %p136
        $region22: #{tpu_custom_call.1} parent=11 // pred_check_branch
          %332 = sbr.rel (%p330) target = $region24
        $region23: #{tpu_custom_call.1} parent=11 // pred_region
          _
        $region24: #{tpu_custom_call.1} parent=11 // pred_fallthru
          _
        // Predicated region
        $region25: #{tpu_custom_call.1} parent=11 // pred_check
          %p333 = pneg %p157
        $region26: #{tpu_custom_call.1} parent=11 // pred_check_branch
          %335 = sbr.rel (%p333) target = $region28
        $region27: #{tpu_custom_call.1} parent=11 // pred_region
          _
        $region28: #{tpu_custom_call.1} parent=11 // pred_fallthru
          _
        // Predicated region
        $region29: #{tpu_custom_call.1} parent=11 // pred_check
          %p336 = pneg %p178
        $region30: #{tpu_custom_call.1} parent=11 // pred_check_branch
          %338 = sbr.rel (%p336) target = $region32
        $region31: #{tpu_custom_call.1} parent=11 // pred_region
          _
        $region32: #{tpu_custom_call.1} parent=11 // pred_fallthru
          _
        // Predicated region
        $region33: #{tpu_custom_call.1} parent=11 // pred_check
          %p339 = pneg %p199
        $region34: #{tpu_custom_call.1} parent=11 // pred_check_branch
          %341 = sbr.rel (%p339) target = $region36
        $region35: #{tpu_custom_call.1} parent=11 // pred_region
          _
        $region36: #{tpu_custom_call.1} parent=11 // pred_fallthru
          _
        // Predicated region
        $region37: #{tpu_custom_call.1} parent=11 // pred_check
          %p342 = pneg %p220
        $region38: #{tpu_custom_call.1} parent=11 // pred_check_branch
          %344 = sbr.rel (%p342) target = $region40
        $region39: #{tpu_custom_call.1} parent=11 // pred_region
          _
        $region40: #{tpu_custom_call.1} parent=11 // pred_fallthru
          _
        // Predicated region
        $region41: #{tpu_custom_call.1} parent=11 // pred_check
          %p345 = pneg %p241
        $region42: #{tpu_custom_call.1} parent=11 // pred_check_branch
          %347 = sbr.rel (%p345) target = $region44
        $region43: #{tpu_custom_call.1} parent=11 // pred_region
          _
        $region44: #{tpu_custom_call.1} parent=11 // pred_fallthru
          _
        // Predicated region
        $region45: #{tpu_custom_call.1} parent=11 // pred_check
          %p348 = pneg %p262
        $region46: #{tpu_custom_call.1} parent=11 // pred_check_branch
          %350 = sbr.rel (%p348) target = $region48
        $region47: #{tpu_custom_call.1} parent=11 // pred_region
          _
        $region48: #{tpu_custom_call.1} parent=11 // pred_fallthru
          _
        // Predicated region
        $region49: #{tpu_custom_call.1} parent=11 // pred_check
          %p351 = pneg %p283
        $region50: #{tpu_custom_call.1} parent=11 // pred_check_branch
          %353 = sbr.rel (%p351) target = $region52
        $region51: #{tpu_custom_call.1} parent=11 // pred_region
          _
        $region52: #{tpu_custom_call.1} parent=11 // pred_fallthru
          _
      $region12: #{tpu_custom_call.1} parent=5 // pred_fallthru
        _
      %p354 = scmp.lt.s32.totalorder %s21, 2
      // Predicated region
      $region53: #{tpu_custom_call.1} parent=5 // pred_check
        %p355 = pneg %p354
      $region54: #{tpu_custom_call.1} parent=5 // pred_check_branch
        %357 = sbr.rel (%p355) target = $region56
      $region55: #{tpu_custom_call.1} parent=5 // pred_region
        // Predicated region
        $region57: #{tpu_custom_call.1} parent=55 // pred_check
          %p358 = pneg %p41
        $region58: #{tpu_custom_call.1} parent=55 // pred_check_branch
          %360 = sbr.rel (%p358) target = $region60
        $region59: #{tpu_custom_call.1} parent=55 // pred_region
          %p361 = scmp.lt.s32.totalorder %s21, 1
          %s362 = scalar_select %p361, %s21, 1
          %s363 = smul.addr %s362, 8
          %s364 = scalar_lea.vmem %s0, %s363
        $region60: #{tpu_custom_call.1} parent=55 // pred_fallthru
          _
        // Predicated region
        $region61: #{tpu_custom_call.1} parent=55 // pred_check
          %p365 = pneg %p67
        $region62: #{tpu_custom_call.1} parent=55 // pred_check_branch
          %367 = sbr.rel (%p365) target = $region64
        $region63: #{tpu_custom_call.1} parent=55 // pred_region
          %p368 = scmp.lt.s32.totalorder %s21, 1
          %s369 = scalar_select %p368, %s21, 1
          %s370 = scalar_lea.vmem %s1, %s369
        $region64: #{tpu_custom_call.1} parent=55 // pred_fallthru
          _
      $region56: #{tpu_custom_call.1} parent=5 // pred_fallthru
        _
      %p371 = scmp.le.s32.totalorder 1, %s21
      %p372 = scmp.lt.s32.totalorder %s21, 3
      %p373 = pnand %p371, %p372
      %p374 = pneg %p373
      // Predicated region
      $region65: #{tpu_custom_call.1} parent=5 // pred_check
        _
      $region66: #{tpu_custom_call.1} parent=5 // pred_check_branch
        %376 = sbr.rel (%p373) target = $region68
      $region67: #{tpu_custom_call.1} parent=5 // pred_region
        %s377 = ssub.s32 %s21, 1
        %p378 = scmp.lt.s32.totalorder %s26, 1
        %s379 = scalar_select %p378, %s26, 1
        %s380 = smul.addr %s379, 8
        %s381 = scalar_lea.vmem %s0, %s380
        %p382 = pneg %p47
        %p383 = pneg %p44
        %p384 = scmp.lt.s32.totalorder %s26, 1
        %s385 = scalar_select %p384, %s26, 1
        %s386 = scalar_lea.vmem %s1, %s385
        %p387 = pneg %p73
        %p388 = pneg %p70
        %p389 = pneg %p94
        %p390 = pneg %p91
        %p391 = pneg %p115
        %p392 = pneg %p112
        %p393 = pneg %p136
        %p394 = pneg %p133
        %p395 = pneg %p157
        %p396 = pneg %p154
        %p397 = pneg %p178
        %p398 = pneg %p175
        %p399 = pneg %p199
        %p400 = pneg %p196
        %p401 = pneg %p220
        %p402 = pneg %p217
        %p403 = pneg %p241
        %p404 = pneg %p238
        %p405 = pneg %p262
        %p406 = pneg %p259
        %p407 = pneg %p283
        %p408 = pneg %p280
        %p409 = pneg %p309
        %p410 = pneg %p306
        %s411 = sand.u32 %s296, 1
        %s412 = scalar_lea.sflag [#allocation3], %s411
        %s413 = sand.u32 %s296, 1
        %s414 = smul.addr %s413, 8
        %s415 = scalar_lea.vmem [#allocation2], %s414
        %p416 = scmp.lt.s32.totalorder %s26, 1
        %s417 = scalar_select %p416, %s26, 1
        %s418 = smul.addr %s417, 8
        %s419 = scalar_lea.vmem %s0, %s418
        %p420 = scmp.lt.s32.totalorder %s26, 1
        %s421 = scalar_select %p420, %s26, 1
        %s422 = scalar_lea.vmem %s1, %s421
        %v424 = vld [vmem:[%s419] sm:$0xff]
        %v425 = vld [vmem:[%s2] sm:$0x1]
        %s426 = scalar_lea.vmem %s2, 1
        %v427 = vld [vmem:[%s426] sm:$0x1]
        %vm428 = vcmask 261120
        %v429 = vsel %vm428, %v424, 0.0
        %430 = vadd.xlane.f32.xlu0 %v429
        %v431 = vpop.xlane.xlu0 %430
        %v432 = vrcp.pop 32.0
        %v433 = vmul.f32 %v431, %v432
        %v434 = vsub.f32 %v424, %v433
        %v435 = vmul.f32 %v434, %v434
        %v436 = vsel %vm428, %v435, 0.0
        %437 = vadd.xlane.f32.xlu0 %v436
        %v438 = vpop.xlane.xlu0 %437
        %v439 = vmul.f32 %v438, %v432
        %v440 = vadd.f32 %v439, 1e-12
        %v441 = vrsqrt.pop %v440
        %v442 = vmul.f32 %v434, %v441
        %v444 = vlaneseq
        %v445 = vshrl.u32 %v444, 7
        %v446 = vsub.s32 0, %v445
        %v447 = vrot.slane %v425, %v446
        %v449 = vmul.f32 %v442, %v447
        %v451 = vlaneseq
        %v452 = vshrl.u32 %v451, 7
        %v453 = vsub.s32 0, %v452
        %v454 = vrot.slane %v427, %v453
        %v456 = vadd.f32 %v449, %v454
        %v457 = vld [vmem:[%s422] sm:$0x1]
        %v458 = vsub.f32 1.0, %v457
        %v459 = vmul.f32 %v458, -1e+09
        %v460 = vpack.c.bf16 %v456, %v456
        %v461 = vld [vmem:[%s3] sm:$0xf]
        %v462 = vld [vmem:[%s3 + $0x4] sm:$0xf]
        %v463 = vld [vmem:[%s3 + $0x8] sm:$0xf]
        %v464 = vld [vmem:[%s3 + $0xc] sm:$0xf]
        %v465 = vld [vmem:[%s4] sm:$0x1]
        %v467 = vlaneseq
        %v468 = vshrl.u32 %v467, 7
        %v469 = vsub.s32 0, %v468
        %v470 = vrot.slane %v465, %v469
        %v476 = vunpack.c.l.b16 %v461
        %v477 = vunpack.c.l.b16 %v462
        %v478 = vunpack.c.l.b16 %v463
        %v479 = vunpack.c.l.b16 %v464
        %v480 = vpack.c.b16 %v477, %v476
        %v481 = vpack.c.b16 %v479, %v478
        %v485 = vsel %vm428, %v460, 0
        %487 = vmatprep.subr.bf16.mxu0 0
        %488 = vmatpush1.bf16.msra.mxu0 0
        %489 = vmatprep.subr.bf16.mxu0 0
        %490 = vmatpush1.bf16.msra.mxu0 0
        %491 = vmatprep.subr.bf16.mxu0 0
        %492 = vmatpush1.bf16.msra.mxu0 0
        %493 = vmatprep.subr.bf16.mxu0 0
        %494 = vmatpush1.bf16.msra.mxu0 0
        %495 = vmatprep.subr.bf16.mxu0 0
        %496 = vmatpush1.bf16.msra.mxu0 0
        %497 = vmatprep.subr.bf16.mxu0 0
        %498 = vmatpush1.bf16.msra.mxu0 0
        %499 = vmatprep.subr.bf16.mxu0 0
        %500 = vmatpush1.bf16.msra.mxu0 %v481
        %501 = vmatprep.subr.bf16.mxu0 0
        %502 = vmatpush1.bf16.msra.mxu0 %v480
        %503 = vmatprep.subr.bf16.mxu0 0
        %504 = vmatpush2.bf16.msra.mxu0 0
        %505 = vmatprep.subr.bf16.mxu0 0
        %506 = vmatpush2.bf16.msra.mxu0 0
        %507 = vmatprep.subr.bf16.mxu0 0
        %508 = vmatpush2.bf16.msra.mxu0 0
        %509 = vmatprep.subr.bf16.mxu0 0
        %510 = vmatpush2.bf16.msra.mxu0 0
        %511 = vmatprep.subr.bf16.mxu0 0
        %512 = vmatpush2.bf16.msra.mxu0 0
        %513 = vmatprep.subr.bf16.mxu0 0
        %514 = vmatpush2.bf16.msra.mxu0 0
        %515 = vmatprep.subr.bf16.mxu0 0
        %516 = vmatpush2.bf16.msra.mxu0 0
        %517 = vmatprep.subr.bf16.mxu0 0
        %518 = vmatpush2.bf16.msra.mxu0 0
        %519 = vmatprep.mubr.bf16.mxu0 0
        %520 = vmatmul.mubr.bf16.gmra.mxu0 %v485
        %v521 = vpop.f32.mrf.mxu0
        %v522 = vadd.f32 %v470, %v521
        %v523 = vpop.f32.mrf.mxu0
        %v524 = vpop.f32.mrf.mxu0
        %v525 = vpop.f32.mrf.mxu0
        %526 = vdwg.mxu0
        %s527 = scalar_lea.vmem %s3, 16
        %v528 = vld [vmem:[%s527] sm:$0xf]
        %v529 = vld [vmem:[%s527 + $0x4] sm:$0xf]
        %v530 = vld [vmem:[%s527 + $0x8] sm:$0xf]
        %v531 = vld [vmem:[%s527 + $0xc] sm:$0xf]
        %s532 = scalar_lea.vmem %s4, 1
        %v533 = vld [vmem:[%s532] sm:$0x1]
        %v535 = vlaneseq
        %v536 = vshrl.u32 %v535, 7
        %v537 = vsub.s32 0, %v536
        %v538 = vrot.slane %v533, %v537
        %v544 = vunpack.c.l.b16 %v528
        %v545 = vunpack.c.l.b16 %v529
        %v546 = vunpack.c.l.b16 %v530
        %v547 = vunpack.c.l.b16 %v531
        %v548 = vpack.c.b16 %v545, %v544
        %v549 = vpack.c.b16 %v547, %v546
        %552 = vmatprep.subr.bf16.mxu0 0
        %553 = vmatpush1.bf16.msra.mxu0 0
        %554 = vmatprep.subr.bf16.mxu0 0
        %555 = vmatpush1.bf16.msra.mxu0 0
        %556 = vmatprep.subr.bf16.mxu0 0
        %557 = vmatpush1.bf16.msra.mxu0 0
        %558 = vmatprep.subr.bf16.mxu0 0
        %559 = vmatpush1.bf16.msra.mxu0 0
        %560 = vmatprep.subr.bf16.mxu0 0
        %561 = vmatpush1.bf16.msra.mxu0 0
        %562 = vmatprep.subr.bf16.mxu0 0
        %563 = vmatpush1.bf16.msra.mxu0 0
        %564 = vmatprep.subr.bf16.mxu0 0
        %565 = vmatpush1.bf16.msra.mxu0 %v549
        %566 = vmatprep.subr.bf16.mxu0 0
        %567 = vmatpush1.bf16.msra.mxu0 %v548
        %568 = vmatprep.subr.bf16.mxu0 0
        %569 = vmatpush2.bf16.msra.mxu0 0
        %570 = vmatprep.subr.bf16.mxu0 0
        %571 = vmatpush2.bf16.msra.mxu0 0
        %572 = vmatprep.subr.bf16.mxu0 0
        %573 = vmatpush2.bf16.msra.mxu0 0
        %574 = vmatprep.subr.bf16.mxu0 0
        %575 = vmatpush2.bf16.msra.mxu0 0
        %576 = vmatprep.subr.bf16.mxu0 0
        %577 = vmatpush2.bf16.msra.mxu0 0
        %578 = vmatprep.subr.bf16.mxu0 0
        %579 = vmatpush2.bf16.msra.mxu0 0
        %580 = vmatprep.subr.bf16.mxu0 0
        %581 = vmatpush2.bf16.msra.mxu0 0
        %582 = vmatprep.subr.bf16.mxu0 0
        %583 = vmatpush2.bf16.msra.mxu0 0
        %584 = vmatprep.mubr.bf16.mxu0 0
        %585 = vmatmul.mubr.bf16.gmra.mxu0 %v485
        %v586 = vpop.f32.mrf.mxu0
        %v587 = vadd.f32 %v538, %v586
        %v588 = vpop.f32.mrf.mxu0
        %v589 = vpop.f32.mrf.mxu0
        %v590 = vpop.f32.mrf.mxu0
        %591 = vdwg.mxu0
        %s592 = scalar_lea.vmem %s3, 32
        %v593 = vld [vmem:[%s592] sm:$0xf]
        %v594 = vld [vmem:[%s592 + $0x4] sm:$0xf]
        %v595 = vld [vmem:[%s592 + $0x8] sm:$0xf]
        %v596 = vld [vmem:[%s592 + $0xc] sm:$0xf]
        %s597 = scalar_lea.vmem %s4, 2
        %v598 = vld [vmem:[%s597] sm:$0x1]
        %v600 = vlaneseq
        %v601 = vshrl.u32 %v600, 7
        %v602 = vsub.s32 0, %v601
        %v603 = vrot.slane %v598, %v602
        %v609 = vunpack.c.l.b16 %v593
        %v610 = vunpack.c.l.b16 %v594
        %v611 = vunpack.c.l.b16 %v595
        %v612 = vunpack.c.l.b16 %v596
        %v613 = vpack.c.b16 %v610, %v609
        %v614 = vpack.c.b16 %v612, %v611
        %617 = vmatprep.subr.bf16.mxu0 0
        %618 = vmatpush1.bf16.msra.mxu0 0
        %619 = vmatprep.subr.bf16.mxu0 0
        %620 = vmatpush1.bf16.msra.mxu0 0
        %621 = vmatprep.subr.bf16.mxu0 0
        %622 = vmatpush1.bf16.msra.mxu0 0
        %623 = vmatprep.subr.bf16.mxu0 0
        %624 = vmatpush1.bf16.msra.mxu0 0
        %625 = vmatprep.subr.bf16.mxu0 0
        %626 = vmatpush1.bf16.msra.mxu0 0
        %627 = vmatprep.subr.bf16.mxu0 0
        %628 = vmatpush1.bf16.msra.mxu0 0
        %629 = vmatprep.subr.bf16.mxu0 0
        %630 = vmatpush1.bf16.msra.mxu0 %v614
        %631 = vmatprep.subr.bf16.mxu0 0
        %632 = vmatpush1.bf16.msra.mxu0 %v613
        %633 = vmatprep.subr.bf16.mxu0 0
        %634 = vmatpush2.bf16.msra.mxu0 0
        %635 = vmatprep.subr.bf16.mxu0 0
        %636 = vmatpush2.bf16.msra.mxu0 0
        %637 = vmatprep.subr.bf16.mxu0 0
        %638 = vmatpush2.bf16.msra.mxu0 0
        %639 = vmatprep.subr.bf16.mxu0 0
        %640 = vmatpush2.bf16.msra.mxu0 0
        %641 = vmatprep.subr.bf16.mxu0 0
        %642 = vmatpush2.bf16.msra.mxu0 0
        %643 = vmatprep.subr.bf16.mxu0 0
        %644 = vmatpush2.bf16.msra.mxu0 0
        %645 = vmatprep.subr.bf16.mxu0 0
        %646 = vmatpush2.bf16.msra.mxu0 0
        %647 = vmatprep.subr.bf16.mxu0 0
        %648 = vmatpush2.bf16.msra.mxu0 0
        %649 = vmatprep.mubr.bf16.mxu0 0
        %650 = vmatmul.mubr.bf16.gmra.mxu0 %v485
        %v651 = vpop.f32.mrf.mxu0
        %v652 = vadd.f32 %v603, %v651
        %v653 = vpop.f32.mrf.mxu0
        %v654 = vpop.f32.mrf.mxu0
        %v655 = vpop.f32.mrf.mxu0
        %656 = vdwg.mxu0
        %vm657 = vcmask 130048
        %v659 = vsel %vm657, %v522, 0
        %v662 = vsel %vm657, %v587, 0
        %664 = vmatprep.subr.mxu0 0.0
        %665 = vmatpush1.xpose.msra.mxu0 0.0
        %666 = vmatprep.subr.mxu0 0.0
        %667 = vmatpush1.xpose.msra.mxu0 0.0
        %668 = vmatprep.subr.mxu0 0.0
        %669 = vmatpush1.xpose.msra.mxu0 0.0
        %670 = vmatprep.subr.mxu0 0.0
        %671 = vmatpush1.xpose.msra.mxu0 0.0
        %672 = vmatprep.subr.mxu0 0.0
        %673 = vmatpush1.xpose.msra.mxu0 0.0
        %674 = vmatprep.subr.mxu0 0.0
        %675 = vmatpush1.xpose.msra.mxu0 0.0
        %676 = vmatprep.subr.mxu0 0.0
        %677 = vmatpush1.xpose.msra.mxu0 0.0
        %678 = vmatprep.subr.mxu0 0.0
        %679 = vmatpush1.xpose.msra.mxu0 0.0
        %680 = vmatprep.subr.mxu0 0.0
        %681 = vmatpush1.xpose.msra.mxu0 0.0
        %682 = vmatprep.subr.mxu0 0.0
        %683 = vmatpush1.xpose.msra.mxu0 0.0
        %684 = vmatprep.subr.mxu0 0.0
        %685 = vmatpush1.xpose.msra.mxu0 0.0
        %686 = vmatprep.subr.mxu0 0.0
        %687 = vmatpush1.xpose.msra.mxu0 0.0
        %688 = vmatprep.subr.mxu0 0.0
        %689 = vmatpush1.xpose.msra.mxu0 0.0
        %690 = vmatprep.subr.mxu0 0.0
        %691 = vmatpush1.xpose.msra.mxu0 0.0
        %692 = vmatprep.subr.mxu0 0.0
        %693 = vmatpush1.xpose.msra.mxu0 0.0
        %694 = vmatprep.subr.mxu0 0.0
        %695 = vmatpush1.xpose.msra.mxu0 %v662
        %696 = vmatprep.subr.mxu0 0.0
        %697 = vmatpush2.xpose.msra.mxu0 0.0
        %698 = vmatprep.subr.mxu0 0.0
        %699 = vmatpush2.xpose.msra.mxu0 0.0
        %700 = vmatprep.subr.mxu0 0.0
        %701 = vmatpush2.xpose.msra.mxu0 0.0
        %702 = vmatprep.subr.mxu0 0.0
        %703 = vmatpush2.xpose.msra.mxu0 0.0
        %704 = vmatprep.subr.mxu0 0.0
        %705 = vmatpush2.xpose.msra.mxu0 0.0
        %706 = vmatprep.subr.mxu0 0.0
        %707 = vmatpush2.xpose.msra.mxu0 0.0
        %708 = vmatprep.subr.mxu0 0.0
        %709 = vmatpush2.xpose.msra.mxu0 0.0
        %710 = vmatprep.subr.mxu0 0.0
        %711 = vmatpush2.xpose.msra.mxu0 0.0
        %712 = vmatprep.subr.mxu0 0.0
        %713 = vmatpush2.xpose.msra.mxu0 0.0
        %714 = vmatprep.subr.mxu0 0.0
        %715 = vmatpush2.xpose.msra.mxu0 0.0
        %716 = vmatprep.subr.mxu0 0.0
        %717 = vmatpush2.xpose.msra.mxu0 0.0
        %718 = vmatprep.subr.mxu0 0.0
        %719 = vmatpush2.xpose.msra.mxu0 0.0
        %720 = vmatprep.subr.mxu0 0.0
        %721 = vmatpush2.xpose.msra.mxu0 0.0
        %722 = vmatprep.subr.mxu0 0.0
        %723 = vmatpush2.xpose.msra.mxu0 0.0
        %724 = vmatprep.subr.mxu0 0.0
        %725 = vmatpush2.xpose.msra.mxu0 0.0
        %726 = vmatprep.subr.mxu0 0.0
        %727 = vmatpush2.xpose.msra.mxu0 0.0
        %728 = vmatprep.mubr.f32.mxu0 0.0
        %729 = vmatmul.mubr.f32.gmra.mxu0 %v659
        %v730 = vpop.f32.mrf.mxu0
        %v731 = vadd.f32 0.0, %v730
        %v732 = vpop.f32.mrf.mxu0
        %733 = vdwg.mxu0
        %v734 = vmul.f32 %v731, 0.25
        %v736 = vlaneseq
        %v737 = vshrl.u32 %v736, 7
        %v738 = vsub.s32 0, %v737
        %v739 = vrot.slane %v459, %v738
        %v741 = vadd.f32 %v734, %v739
        %vm742 = vcmask 64512
        %v743 = vsel %vm742, %v741, -inf
        %744 = vmax.xlane.f32.xlu0 %v743
        %v745 = vpop.xlane.xlu0 %744
        %v746 = vsub.f32 %v741, %v745
        %v747 = vmul.f32 %v746, 1.442695
        %v748 = vpow.pop %v747
        %v749 = vsel %vm742, %v748, 0.0
        %750 = vadd.xlane.f32.xlu0 %v749
        %v751 = vpop.xlane.xlu0 %750
        %v752 = vrcp.pop %v751
        %v753 = vmul.f32 %v748, %v752
        %v755 = vsel %vm742, %v753, 0
        %757 = vmatprep.subr.mxu0 0.0
        %758 = vmatpush1.msra.mxu0 0.0
        %759 = vmatprep.subr.mxu0 0.0
        %760 = vmatpush1.msra.mxu0 0.0
        %761 = vmatprep.subr.mxu0 0.0
        %762 = vmatpush1.msra.mxu0 0.0
        %763 = vmatprep.subr.mxu0 0.0
        %764 = vmatpush1.msra.mxu0 0.0
        %765 = vmatprep.subr.mxu0 0.0
        %766 = vmatpush1.msra.mxu0 0.0
        %767 = vmatprep.subr.mxu0 0.0
        %768 = vmatpush1.msra.mxu0 0.0
        %769 = vmatprep.subr.mxu0 0.0
        %770 = vmatpush1.msra.mxu0 0.0
        %771 = vmatprep.subr.mxu0 0.0
        %772 = vmatpush1.msra.mxu0 0.0
        %773 = vmatprep.subr.mxu0 0.0
        %774 = vmatpush1.msra.mxu0 0.0
        %775 = vmatprep.subr.mxu0 0.0
        %776 = vmatpush1.msra.mxu0 0.0
        %777 = vmatprep.subr.mxu0 0.0
        %778 = vmatpush1.msra.mxu0 0.0
        %779 = vmatprep.subr.mxu0 0.0
        %780 = vmatpush1.msra.mxu0 0.0
        %781 = vmatprep.subr.mxu0 0.0
        %782 = vmatpush1.msra.mxu0 0.0
        %783 = vmatprep.subr.mxu0 0.0
        %784 = vmatpush1.msra.mxu0 0.0
        %785 = vmatprep.subr.mxu0 0.0
        %786 = vmatpush1.msra.mxu0 0.0
        %787 = vmatprep.subr.mxu0 0.0
        %788 = vmatpush1.msra.mxu0 %v652
        %789 = vmatprep.subr.mxu0 0.0
        %790 = vmatpush2.msra.mxu0 0.0
        %791 = vmatprep.subr.mxu0 0.0
        %792 = vmatpush2.msra.mxu0 0.0
        %793 = vmatprep.subr.mxu0 0.0
        %794 = vmatpush2.msra.mxu0 0.0
        %795 = vmatprep.subr.mxu0 0.0
        %796 = vmatpush2.msra.mxu0 0.0
        %797 = vmatprep.subr.mxu0 0.0
        %798 = vmatpush2.msra.mxu0 0.0
        %799 = vmatprep.subr.mxu0 0.0
        %800 = vmatpush2.msra.mxu0 0.0
        %801 = vmatprep.subr.mxu0 0.0
        %802 = vmatpush2.msra.mxu0 0.0
        %803 = vmatprep.subr.mxu0 0.0
        %804 = vmatpush2.msra.mxu0 0.0
        %805 = vmatprep.subr.mxu0 0.0
        %806 = vmatpush2.msra.mxu0 0.0
        %807 = vmatprep.subr.mxu0 0.0
        %808 = vmatpush2.msra.mxu0 0.0
        %809 = vmatprep.subr.mxu0 0.0
        %810 = vmatpush2.msra.mxu0 0.0
        %811 = vmatprep.subr.mxu0 0.0
        %812 = vmatpush2.msra.mxu0 0.0
        %813 = vmatprep.subr.mxu0 0.0
        %814 = vmatpush2.msra.mxu0 0.0
        %815 = vmatprep.subr.mxu0 0.0
        %816 = vmatpush2.msra.mxu0 0.0
        %817 = vmatprep.subr.mxu0 0.0
        %818 = vmatpush2.msra.mxu0 0.0
        %819 = vmatprep.subr.mxu0 0.0
        %820 = vmatpush2.msra.mxu0 0.0
        %821 = vmatprep.mubr.f32.mxu0 0.0
        %822 = vmatmul.mubr.f32.gmra.mxu0 %v755
        %v823 = vpop.f32.mrf.mxu0
        %v824 = vadd.f32 0.0, %v823
        %v825 = vpop.f32.mrf.mxu0
        %826 = vdwg.mxu0
        %v827 = vpack.c.bf16 %v824, %v824
        %v828 = vld [vmem:[%s5] sm:$0xf]
        %v829 = vld [vmem:[%s5 + $0x4] sm:$0xf]
        %s830 = scalar_lea.vmem %s3, 48
        %v831 = vld [vmem:[%s830] sm:$0xf]
        %v832 = vld [vmem:[%s830 + $0x4] sm:$0xf]
        %v833 = vld [vmem:[%s830 + $0x8] sm:$0xf]
        %v834 = vld [vmem:[%s830 + $0xc] sm:$0xf]
        %s835 = scalar_lea.vmem %s4, 3
        %v836 = vld [vmem:[%s835] sm:$0x1]
        %v838 = vlaneseq
        %v839 = vshrl.u32 %v838, 7
        %v840 = vsub.s32 0, %v839
        %v841 = vrot.slane %v836, %v840
        %v847 = vunpack.c.l.b16 %v831
        %v848 = vunpack.c.l.b16 %v832
        %v849 = vunpack.c.l.b16 %v833
        %v850 = vunpack.c.l.b16 %v834
        %v851 = vpack.c.b16 %v848, %v847
        %v852 = vpack.c.b16 %v850, %v849
        %855 = vmatprep.subr.bf16.mxu0 0
        %856 = vmatpush1.bf16.msra.mxu0 0
        %857 = vmatprep.subr.bf16.mxu0 0
        %858 = vmatpush1.bf16.msra.mxu0 0
        %859 = vmatprep.subr.bf16.mxu0 0
        %860 = vmatpush1.bf16.msra.mxu0 0
        %861 = vmatprep.subr.bf16.mxu0 0
        %862 = vmatpush1.bf16.msra.mxu0 0
        %863 = vmatprep.subr.bf16.mxu0 0
        %864 = vmatpush1.bf16.msra.mxu0 0
        %865 = vmatprep.subr.bf16.mxu0 0
        %866 = vmatpush1.bf16.msra.mxu0 0
        %867 = vmatprep.subr.bf16.mxu0 0
        %868 = vmatpush1.bf16.msra.mxu0 %v852
        %869 = vmatprep.subr.bf16.mxu0 0
        %870 = vmatpush1.bf16.msra.mxu0 %v851
        %871 = vmatprep.subr.bf16.mxu0 0
        %872 = vmatpush2.bf16.msra.mxu0 0
        %873 = vmatprep.subr.bf16.mxu0 0
        %874 = vmatpush2.bf16.msra.mxu0 0
        %875 = vmatprep.subr.bf16.mxu0 0
        %876 = vmatpush2.bf16.msra.mxu0 0
        %877 = vmatprep.subr.bf16.mxu0 0
        %878 = vmatpush2.bf16.msra.mxu0 0
        %879 = vmatprep.subr.bf16.mxu0 0
        %880 = vmatpush2.bf16.msra.mxu0 0
        %881 = vmatprep.subr.bf16.mxu0 0
        %882 = vmatpush2.bf16.msra.mxu0 0
        %883 = vmatprep.subr.bf16.mxu0 0
        %884 = vmatpush2.bf16.msra.mxu0 0
        %885 = vmatprep.subr.bf16.mxu0 0
        %886 = vmatpush2.bf16.msra.mxu0 0
        %887 = vmatprep.mubr.bf16.mxu0 0
        %888 = vmatmul.mubr.bf16.gmra.mxu0 %v485
        %v889 = vpop.f32.mrf.mxu0
        %v890 = vadd.f32 %v841, %v889
        %v891 = vpop.f32.mrf.mxu0
        %v892 = vpop.f32.mrf.mxu0
        %v893 = vpop.f32.mrf.mxu0
        %894 = vdwg.mxu0
        %s895 = scalar_lea.vmem %s3, 64
        %v896 = vld [vmem:[%s895] sm:$0xf]
        %v897 = vld [vmem:[%s895 + $0x4] sm:$0xf]
        %v898 = vld [vmem:[%s895 + $0x8] sm:$0xf]
        %v899 = vld [vmem:[%s895 + $0xc] sm:$0xf]
        %s900 = scalar_lea.vmem %s4, 4
        %v901 = vld [vmem:[%s900] sm:$0x1]
        %v903 = vlaneseq
        %v904 = vshrl.u32 %v903, 7
        %v905 = vsub.s32 0, %v904
        %v906 = vrot.slane %v901, %v905
        %v912 = vunpack.c.l.b16 %v896
        %v913 = vunpack.c.l.b16 %v897
        %v914 = vunpack.c.l.b16 %v898
        %v915 = vunpack.c.l.b16 %v899
        %v916 = vpack.c.b16 %v913, %v912
        %v917 = vpack.c.b16 %v915, %v914
        %920 = vmatprep.subr.bf16.mxu0 0
        %921 = vmatpush1.bf16.msra.mxu0 0
        %922 = vmatprep.subr.bf16.mxu0 0
        %923 = vmatpush1.bf16.msra.mxu0 0
        %924 = vmatprep.subr.bf16.mxu0 0
        %925 = vmatpush1.bf16.msra.mxu0 0
        %926 = vmatprep.subr.bf16.mxu0 0
        %927 = vmatpush1.bf16.msra.mxu0 0
        %928 = vmatprep.subr.bf16.mxu0 0
        %929 = vmatpush1.bf16.msra.mxu0 0
        %930 = vmatprep.subr.bf16.mxu0 0
        %931 = vmatpush1.bf16.msra.mxu0 0
        %932 = vmatprep.subr.bf16.mxu0 0
        %933 = vmatpush1.bf16.msra.mxu0 %v917
        %934 = vmatprep.subr.bf16.mxu0 0
        %935 = vmatpush1.bf16.msra.mxu0 %v916
        %936 = vmatprep.subr.bf16.mxu0 0
        %937 = vmatpush2.bf16.msra.mxu0 0
        %938 = vmatprep.subr.bf16.mxu0 0
        %939 = vmatpush2.bf16.msra.mxu0 0
        %940 = vmatprep.subr.bf16.mxu0 0
        %941 = vmatpush2.bf16.msra.mxu0 0
        %942 = vmatprep.subr.bf16.mxu0 0
        %943 = vmatpush2.bf16.msra.mxu0 0
        %944 = vmatprep.subr.bf16.mxu0 0
        %945 = vmatpush2.bf16.msra.mxu0 0
        %946 = vmatprep.subr.bf16.mxu0 0
        %947 = vmatpush2.bf16.msra.mxu0 0
        %948 = vmatprep.subr.bf16.mxu0 0
        %949 = vmatpush2.bf16.msra.mxu0 0
        %950 = vmatprep.subr.bf16.mxu0 0
        %951 = vmatpush2.bf16.msra.mxu0 0
        %952 = vmatprep.mubr.bf16.mxu0 0
        %953 = vmatmul.mubr.bf16.gmra.mxu0 %v485
        %v954 = vpop.f32.mrf.mxu0
        %v955 = vadd.f32 %v906, %v954
        %v956 = vpop.f32.mrf.mxu0
        %v957 = vpop.f32.mrf.mxu0
        %v958 = vpop.f32.mrf.mxu0
        %959 = vdwg.mxu0
        %s960 = scalar_lea.vmem %s3, 80
        %v961 = vld [vmem:[%s960] sm:$0xf]
        %v962 = vld [vmem:[%s960 + $0x4] sm:$0xf]
        %v963 = vld [vmem:[%s960 + $0x8] sm:$0xf]
        %v964 = vld [vmem:[%s960 + $0xc] sm:$0xf]
        %s965 = scalar_lea.vmem %s4, 5
        %v966 = vld [vmem:[%s965] sm:$0x1]
        %v968 = vlaneseq
        %v969 = vshrl.u32 %v968, 7
        %v970 = vsub.s32 0, %v969
        %v971 = vrot.slane %v966, %v970
        %v977 = vunpack.c.l.b16 %v961
        %v978 = vunpack.c.l.b16 %v962
        %v979 = vunpack.c.l.b16 %v963
        %v980 = vunpack.c.l.b16 %v964
        %v981 = vpack.c.b16 %v978, %v977
        %v982 = vpack.c.b16 %v980, %v979
        %985 = vmatprep.subr.bf16.mxu0 0
        %986 = vmatpush1.bf16.msra.mxu0 0
        %987 = vmatprep.subr.bf16.mxu0 0
        %988 = vmatpush1.bf16.msra.mxu0 0
        %989 = vmatprep.subr.bf16.mxu0 0
        %990 = vmatpush1.bf16.msra.mxu0 0
        %991 = vmatprep.subr.bf16.mxu0 0
        %992 = vmatpush1.bf16.msra.mxu0 0
        %993 = vmatprep.subr.bf16.mxu0 0
        %994 = vmatpush1.bf16.msra.mxu0 0
        %995 = vmatprep.subr.bf16.mxu0 0
        %996 = vmatpush1.bf16.msra.mxu0 0
        %997 = vmatprep.subr.bf16.mxu0 0
        %998 = vmatpush1.bf16.msra.mxu0 %v982
        %999 = vmatprep.subr.bf16.mxu0 0
        %1000 = vmatpush1.bf16.msra.mxu0 %v981
        %1001 = vmatprep.subr.bf16.mxu0 0
        %1002 = vmatpush2.bf16.msra.mxu0 0
        %1003 = vmatprep.subr.bf16.mxu0 0
        %1004 = vmatpush2.bf16.msra.mxu0 0
        %1005 = vmatprep.subr.bf16.mxu0 0
        %1006 = vmatpush2.bf16.msra.mxu0 0
        %1007 = vmatprep.subr.bf16.mxu0 0
        %1008 = vmatpush2.bf16.msra.mxu0 0
        %1009 = vmatprep.subr.bf16.mxu0 0
        %1010 = vmatpush2.bf16.msra.mxu0 0
        %1011 = vmatprep.subr.bf16.mxu0 0
        %1012 = vmatpush2.bf16.msra.mxu0 0
        %1013 = vmatprep.subr.bf16.mxu0 0
        %1014 = vmatpush2.bf16.msra.mxu0 0
        %1015 = vmatprep.subr.bf16.mxu0 0
        %1016 = vmatpush2.bf16.msra.mxu0 0
        %1017 = vmatprep.mubr.bf16.mxu0 0
        %1018 = vmatmul.mubr.bf16.gmra.mxu0 %v485
        %v1019 = vpop.f32.mrf.mxu0
        %v1020 = vadd.f32 %v971, %v1019
        %v1021 = vpop.f32.mrf.mxu0
        %v1022 = vpop.f32.mrf.mxu0
        %v1023 = vpop.f32.mrf.mxu0
        %1024 = vdwg.mxu0
        %v1026 = vsel %vm657, %v890, 0
        %v1029 = vsel %vm657, %v955, 0
        %1031 = vmatprep.subr.mxu0 0.0
        %1032 = vmatpush1.xpose.msra.mxu0 0.0
        %1033 = vmatprep.subr.mxu0 0.0
        %1034 = vmatpush1.xpose.msra.mxu0 0.0
        %1035 = vmatprep.subr.mxu0 0.0
        %1036 = vmatpush1.xpose.msra.mxu0 0.0
        %1037 = vmatprep.subr.mxu0 0.0
        %1038 = vmatpush1.xpose.msra.mxu0 0.0
        %1039 = vmatprep.subr.mxu0 0.0
        %1040 = vmatpush1.xpose.msra.mxu0 0.0
        %1041 = vmatprep.subr.mxu0 0.0
        %1042 = vmatpush1.xpose.msra.mxu0 0.0
        %1043 = vmatprep.subr.mxu0 0.0
        %1044 = vmatpush1.xpose.msra.mxu0 0.0
        %1045 = vmatprep.subr.mxu0 0.0
        %1046 = vmatpush1.xpose.msra.mxu0 0.0
        %1047 = vmatprep.subr.mxu0 0.0
        %1048 = vmatpush1.xpose.msra.mxu0 0.0
        %1049 = vmatprep.subr.mxu0 0.0
        %1050 = vmatpush1.xpose.msra.mxu0 0.0
        %1051 = vmatprep.subr.mxu0 0.0
        %1052 = vmatpush1.xpose.msra.mxu0 0.0
        %1053 = vmatprep.subr.mxu0 0.0
        %1054 = vmatpush1.xpose.msra.mxu0 0.0
        %1055 = vmatprep.subr.mxu0 0.0
        %1056 = vmatpush1.xpose.msra.mxu0 0.0
        %1057 = vmatprep.subr.mxu0 0.0
        %1058 = vmatpush1.xpose.msra.mxu0 0.0
        %1059 = vmatprep.subr.mxu0 0.0
        %1060 = vmatpush1.xpose.msra.mxu0 0.0
        %1061 = vmatprep.subr.mxu0 0.0
        %1062 = vmatpush1.xpose.msra.mxu0 %v1029
        %1063 = vmatprep.subr.mxu0 0.0
        %1064 = vmatpush2.xpose.msra.mxu0 0.0
        %1065 = vmatprep.subr.mxu0 0.0
        %1066 = vmatpush2.xpose.msra.mxu0 0.0
        %1067 = vmatprep.subr.mxu0 0.0
        %1068 = vmatpush2.xpose.msra.mxu0 0.0
        %1069 = vmatprep.subr.mxu0 0.0
        %1070 = vmatpush2.xpose.msra.mxu0 0.0
        %1071 = vmatprep.subr.mxu0 0.0
        %1072 = vmatpush2.xpose.msra.mxu0 0.0
        %1073 = vmatprep.subr.mxu0 0.0
        %1074 = vmatpush2.xpose.msra.mxu0 0.0
        %1075 = vmatprep.subr.mxu0 0.0
        %1076 = vmatpush2.xpose.msra.mxu0 0.0
        %1077 = vmatprep.subr.mxu0 0.0
        %1078 = vmatpush2.xpose.msra.mxu0 0.0
        %1079 = vmatprep.subr.mxu0 0.0
        %1080 = vmatpush2.xpose.msra.mxu0 0.0
        %1081 = vmatprep.subr.mxu0 0.0
        %1082 = vmatpush2.xpose.msra.mxu0 0.0
        %1083 = vmatprep.subr.mxu0 0.0
        %1084 = vmatpush2.xpose.msra.mxu0 0.0
        %1085 = vmatprep.subr.mxu0 0.0
        %1086 = vmatpush2.xpose.msra.mxu0 0.0
        %1087 = vmatprep.subr.mxu0 0.0
        %1088 = vmatpush2.xpose.msra.mxu0 0.0
        %1089 = vmatprep.subr.mxu0 0.0
        %1090 = vmatpush2.xpose.msra.mxu0 0.0
        %1091 = vmatprep.subr.mxu0 0.0
        %1092 = vmatpush2.xpose.msra.mxu0 0.0
        %1093 = vmatprep.subr.mxu0 0.0
        %1094 = vmatpush2.xpose.msra.mxu0 0.0
        %1095 = vmatprep.mubr.f32.mxu0 0.0
        %1096 = vmatmul.mubr.f32.gmra.mxu0 %v1026
        %v1097 = vpop.f32.mrf.mxu0
        %v1098 = vadd.f32 0.0, %v1097
        %v1099 = vpop.f32.mrf.mxu0
        %1100 = vdwg.mxu0
        %v1101 = vmul.f32 %v1098, 0.25
        %v1102 = vadd.f32 %v1101, %v739
        %v1103 = vsel %vm742, %v1102, -inf
        %1104 = vmax.xlane.f32.xlu0 %v1103
        %v1105 = vpop.xlane.xlu0 %1104
        %v1106 = vsub.f32 %v1102, %v1105
        %v1107 = vmul.f32 %v1106, 1.442695
        %v1108 = vpow.pop %v1107
        %v1109 = vsel %vm742, %v1108, 0.0
        %1110 = vadd.xlane.f32.xlu0 %v1109
        %v1111 = vpop.xlane.xlu0 %1110
        %v1112 = vrcp.pop %v1111
        %v1113 = vmul.f32 %v1108, %v1112
        %v1115 = vsel %vm742, %v1113, 0
        %1117 = vmatprep.subr.mxu0 0.0
        %1118 = vmatpush1.msra.mxu0 0.0
        %1119 = vmatprep.subr.mxu0 0.0
        %1120 = vmatpush1.msra.mxu0 0.0
        %1121 = vmatprep.subr.mxu0 0.0
        %1122 = vmatpush1.msra.mxu0 0.0
        %1123 = vmatprep.subr.mxu0 0.0
        %1124 = vmatpush1.msra.mxu0 0.0
        %1125 = vmatprep.subr.mxu0 0.0
        %1126 = vmatpush1.msra.mxu0 0.0
        %1127 = vmatprep.subr.mxu0 0.0
        %1128 = vmatpush1.msra.mxu0 0.0
        %1129 = vmatprep.subr.mxu0 0.0
        %1130 = vmatpush1.msra.mxu0 0.0
        %1131 = vmatprep.subr.mxu0 0.0
        %1132 = vmatpush1.msra.mxu0 0.0
        %1133 = vmatprep.subr.mxu0 0.0
        %1134 = vmatpush1.msra.mxu0 0.0
        %1135 = vmatprep.subr.mxu0 0.0
        %1136 = vmatpush1.msra.mxu0 0.0
        %1137 = vmatprep.subr.mxu0 0.0
        %1138 = vmatpush1.msra.mxu0 0.0
        %1139 = vmatprep.subr.mxu0 0.0
        %1140 = vmatpush1.msra.mxu0 0.0
        %1141 = vmatprep.subr.mxu0 0.0
        %1142 = vmatpush1.msra.mxu0 0.0
        %1143 = vmatprep.subr.mxu0 0.0
        %1144 = vmatpush1.msra.mxu0 0.0
        %1145 = vmatprep.subr.mxu0 0.0
        %1146 = vmatpush1.msra.mxu0 0.0
        %1147 = vmatprep.subr.mxu0 0.0
        %1148 = vmatpush1.msra.mxu0 %v1020
        %1149 = vmatprep.subr.mxu0 0.0
        %1150 = vmatpush2.msra.mxu0 0.0
        %1151 = vmatprep.subr.mxu0 0.0
        %1152 = vmatpush2.msra.mxu0 0.0
        %1153 = vmatprep.subr.mxu0 0.0
        %1154 = vmatpush2.msra.mxu0 0.0
        %1155 = vmatprep.subr.mxu0 0.0
        %1156 = vmatpush2.msra.mxu0 0.0
        %1157 = vmatprep.subr.mxu0 0.0
        %1158 = vmatpush2.msra.mxu0 0.0
        %1159 = vmatprep.subr.mxu0 0.0
        %1160 = vmatpush2.msra.mxu0 0.0
        %1161 = vmatprep.subr.mxu0 0.0
        %1162 = vmatpush2.msra.mxu0 0.0
        %1163 = vmatprep.subr.mxu0 0.0
        %1164 = vmatpush2.msra.mxu0 0.0
        %1165 = vmatprep.subr.mxu0 0.0
        %1166 = vmatpush2.msra.mxu0 0.0
        %1167 = vmatprep.subr.mxu0 0.0
        %1168 = vmatpush2.msra.mxu0 0.0
        %1169 = vmatprep.subr.mxu0 0.0
        %1170 = vmatpush2.msra.mxu0 0.0
        %1171 = vmatprep.subr.mxu0 0.0
        %1172 = vmatpush2.msra.mxu0 0.0
        %1173 = vmatprep.subr.mxu0 0.0
        %1174 = vmatpush2.msra.mxu0 0.0
        %1175 = vmatprep.subr.mxu0 0.0
        %1176 = vmatpush2.msra.mxu0 0.0
        %1177 = vmatprep.subr.mxu0 0.0
        %1178 = vmatpush2.msra.mxu0 0.0
        %1179 = vmatprep.subr.mxu0 0.0
        %1180 = vmatpush2.msra.mxu0 0.0
        %1181 = vmatprep.mubr.f32.mxu0 0.0
        %1182 = vmatmul.mubr.f32.gmra.mxu0 %v1115
        %v1183 = vpop.f32.mrf.mxu0
        %v1184 = vadd.f32 0.0, %v1183
        %v1185 = vpop.f32.mrf.mxu0
        %1186 = vdwg.mxu0
        %v1187 = vpack.c.bf16 %v1184, %v1184
        %s1188 = scalar_lea.vmem %s5, 8
        %v1189 = vld [vmem:[%s1188] sm:$0xf]
        %v1190 = vld [vmem:[%s1188 + $0x4] sm:$0xf]
        %v1193 = vunpack.c.l.b16 %v1189
        %v1194 = vunpack.c.l.b16 %v1190
        %v1195 = vpack.c.b16 %v1194, %v1193
        %v1198 = vsel %vm657, %v1187, 0
        %1200 = vmatprep.subr.bf16.mxu0 0
        %1201 = vmatpush1.bf16.msra.mxu0 0
        %1202 = vmatprep.subr.bf16.mxu0 0
        %1203 = vmatpush1.bf16.msra.mxu0 0
        %1204 = vmatprep.subr.bf16.mxu0 0
        %1205 = vmatpush1.bf16.msra.mxu0 0
        %1206 = vmatprep.subr.bf16.mxu0 0
        %1207 = vmatpush1.bf16.msra.mxu0 0
        %1208 = vmatprep.subr.bf16.mxu0 0
        %1209 = vmatpush1.bf16.msra.mxu0 0
        %1210 = vmatprep.subr.bf16.mxu0 0
        %1211 = vmatpush1.bf16.msra.mxu0 0
        %1212 = vmatprep.subr.bf16.mxu0 0
        %1213 = vmatpush1.bf16.msra.mxu0 0
        %1214 = vmatprep.subr.bf16.mxu0 0
        %1215 = vmatpush1.bf16.msra.mxu0 %v1195
        %1216 = vmatprep.subr.bf16.mxu0 0
        %1217 = vmatpush2.bf16.msra.mxu0 0
        %1218 = vmatprep.subr.bf16.mxu0 0
        %1219 = vmatpush2.bf16.msra.mxu0 0
        %1220 = vmatprep.subr.bf16.mxu0 0
        %1221 = vmatpush2.bf16.msra.mxu0 0
        %1222 = vmatprep.subr.bf16.mxu0 0
        %1223 = vmatpush2.bf16.msra.mxu0 0
        %1224 = vmatprep.subr.bf16.mxu0 0
        %1225 = vmatpush2.bf16.msra.mxu0 0
        %1226 = vmatprep.subr.bf16.mxu0 0
        %1227 = vmatpush2.bf16.msra.mxu0 0
        %1228 = vmatprep.subr.bf16.mxu0 0
        %1229 = vmatpush2.bf16.msra.mxu0 0
        %1230 = vmatprep.subr.bf16.mxu0 0
        %1231 = vmatpush2.bf16.msra.mxu0 0
        %1232 = vmatprep.mubr.bf16.mxu0 0
        %1233 = vmatmul.mubr.bf16.gmra.mxu0 %v1198
        %v1234 = vpop.f32.mrf.mxu0
        %v1235 = vadd.f32 0.0, %v1234
        %v1236 = vpop.f32.mrf.mxu0
        %v1237 = vpop.f32.mrf.mxu0
        %v1238 = vpop.f32.mrf.mxu0
        %1239 = vdwg.mxu0
        %v1242 = vunpack.c.l.b16 %v828
        %v1243 = vunpack.c.l.b16 %v829
        %v1244 = vpack.c.b16 %v1243, %v1242
        %v1247 = vsel %vm657, %v827, 0
        %1249 = vmatprep.subr.bf16.mxu0 0
        %1250 = vmatpush1.bf16.msra.mxu0 0
        %1251 = vmatprep.subr.bf16.mxu0 0
        %1252 = vmatpush1.bf16.msra.mxu0 0
        %1253 = vmatprep.subr.bf16.mxu0 0
        %1254 = vmatpush1.bf16.msra.mxu0 0
        %1255 = vmatprep.subr.bf16.mxu0 0
        %1256 = vmatpush1.bf16.msra.mxu0 0
        %1257 = vmatprep.subr.bf16.mxu0 0
        %1258 = vmatpush1.bf16.msra.mxu0 0
        %1259 = vmatprep.subr.bf16.mxu0 0
        %1260 = vmatpush1.bf16.msra.mxu0 0
        %1261 = vmatprep.subr.bf16.mxu0 0
        %1262 = vmatpush1.bf16.msra.mxu0 0
        %1263 = vmatprep.subr.bf16.mxu0 0
        %1264 = vmatpush1.bf16.msra.mxu0 %v1244
        %1265 = vmatprep.subr.bf16.mxu0 0
        %1266 = vmatpush2.bf16.msra.mxu0 0
        %1267 = vmatprep.subr.bf16.mxu0 0
        %1268 = vmatpush2.bf16.msra.mxu0 0
        %1269 = vmatprep.subr.bf16.mxu0 0
        %1270 = vmatpush2.bf16.msra.mxu0 0
        %1271 = vmatprep.subr.bf16.mxu0 0
        %1272 = vmatpush2.bf16.msra.mxu0 0
        %1273 = vmatprep.subr.bf16.mxu0 0
        %1274 = vmatpush2.bf16.msra.mxu0 0
        %1275 = vmatprep.subr.bf16.mxu0 0
        %1276 = vmatpush2.bf16.msra.mxu0 0
        %1277 = vmatprep.subr.bf16.mxu0 0
        %1278 = vmatpush2.bf16.msra.mxu0 0
        %1279 = vmatprep.subr.bf16.mxu0 0
        %1280 = vmatpush2.bf16.msra.mxu0 0
        %1281 = vmatprep.mubr.bf16.mxu0 0
        %1282 = vmatmul.mubr.bf16.gmra.mxu0 %v1247
        %v1283 = vpop.f32.mrf.mxu0
        %v1284 = vadd.f32 %v1235, %v1283
        %v1285 = vpop.f32.mrf.mxu0
        %v1286 = vpop.f32.mrf.mxu0
        %v1287 = vpop.f32.mrf.mxu0
        %1288 = vdwg.mxu0
        %v1289 = vadd.f32 %v456, %v1284
        %v1290 = vld [vmem:[%s6] sm:$0x1]
        %v1292 = vlaneseq
        %v1293 = vshrl.u32 %v1292, 7
        %v1294 = vsub.s32 0, %v1293
        %v1295 = vrot.slane %v1290, %v1294
        %v1297 = vadd.f32 %v1289, %v1295
        %s1298 = scalar_lea.vmem %s2, 2
        %v1299 = vld [vmem:[%s1298] sm:$0x1]
        %s1300 = scalar_lea.vmem %s2, 3
        %v1301 = vld [vmem:[%s1300] sm:$0x1]
        %v1302 = vsel %vm428, %v1297, 0.0
        %1303 = vadd.xlane.f32.xlu0 %v1302
        %v1304 = vpop.xlane.xlu0 %1303
        %v1305 = vmul.f32 %v1304, %v432
        %v1306 = vsub.f32 %v1297, %v1305
        %v1307 = vmul.f32 %v1306, %v1306
        %v1308 = vsel %vm428, %v1307, 0.0
        %1309 = vadd.xlane.f32.xlu0 %v1308
        %v1310 = vpop.xlane.xlu0 %1309
        %v1311 = vmul.f32 %v1310, %v432
        %v1312 = vadd.f32 %v1311, 1e-12
        %v1313 = vrsqrt.pop %v1312
        %v1314 = vmul.f32 %v1306, %v1313
        %v1316 = vlaneseq
        %v1317 = vshrl.u32 %v1316, 7
        %v1318 = vsub.s32 0, %v1317
        %v1319 = vrot.slane %v1299, %v1318
        %v1321 = vmul.f32 %v1314, %v1319
        %v1323 = vlaneseq
        %v1324 = vshrl.u32 %v1323, 7
        %v1325 = vsub.s32 0, %v1324
        %v1326 = vrot.slane %v1301, %v1325
        %v1328 = vadd.f32 %v1321, %v1326
        %v1329 = vpack.c.bf16 %v1328, %v1328
        %v1330 = vld [vmem:[%s7] sm:$0xf]
        %v1331 = vld [vmem:[%s7 + $0x4] sm:$0xf]
        %v1332 = vld [vmem:[%s7 + $0x8] sm:$0xf]
        %v1333 = vld [vmem:[%s7 + $0xc] sm:$0xf]
        %v1334 = vld [vmem:[%s8] sm:$0x1]
        %v1336 = vlaneseq
        %v1337 = vshrl.u32 %v1336, 7
        %v1338 = vsub.s32 0, %v1337
        %v1339 = vrot.slane %v1334, %v1338
        %v1345 = vunpack.c.l.b16 %v1330
        %v1346 = vunpack.c.l.b16 %v1331
        %v1347 = vunpack.c.l.b16 %v1332
        %v1348 = vunpack.c.l.b16 %v1333
        %v1349 = vpack.c.b16 %v1346, %v1345
        %v1350 = vpack.c.b16 %v1348, %v1347
        %v1354 = vsel %vm428, %v1329, 0
        %1356 = vmatprep.subr.bf16.mxu0 0
        %1357 = vmatpush1.bf16.msra.mxu0 0
        %1358 = vmatprep.subr.bf16.mxu0 0
        %1359 = vmatpush1.bf16.msra.mxu0 0
        %1360 = vmatprep.subr.bf16.mxu0 0
        %1361 = vmatpush1.bf16.msra.mxu0 0
        %1362 = vmatprep.subr.bf16.mxu0 0
        %1363 = vmatpush1.bf16.msra.mxu0 0
        %1364 = vmatprep.subr.bf16.mxu0 0
        %1365 = vmatpush1.bf16.msra.mxu0 0
        %1366 = vmatprep.subr.bf16.mxu0 0
        %1367 = vmatpush1.bf16.msra.mxu0 0
        %1368 = vmatprep.subr.bf16.mxu0 0
        %1369 = vmatpush1.bf16.msra.mxu0 %v1350
        %1370 = vmatprep.subr.bf16.mxu0 0
        %1371 = vmatpush1.bf16.msra.mxu0 %v1349
        %1372 = vmatprep.subr.bf16.mxu0 0
        %1373 = vmatpush2.bf16.msra.mxu0 0
        %1374 = vmatprep.subr.bf16.mxu0 0
        %1375 = vmatpush2.bf16.msra.mxu0 0
        %1376 = vmatprep.subr.bf16.mxu0 0
        %1377 = vmatpush2.bf16.msra.mxu0 0
        %1378 = vmatprep.subr.bf16.mxu0 0
        %1379 = vmatpush2.bf16.msra.mxu0 0
        %1380 = vmatprep.subr.bf16.mxu0 0
        %1381 = vmatpush2.bf16.msra.mxu0 0
        %1382 = vmatprep.subr.bf16.mxu0 0
        %1383 = vmatpush2.bf16.msra.mxu0 0
        %1384 = vmatprep.subr.bf16.mxu0 0
        %1385 = vmatpush2.bf16.msra.mxu0 0
        %1386 = vmatprep.subr.bf16.mxu0 0
        %1387 = vmatpush2.bf16.msra.mxu0 0
        %1388 = vmatprep.mubr.bf16.mxu0 0
        %1389 = vmatmul.mubr.bf16.gmra.mxu0 %v1354
        %v1390 = vpop.f32.mrf.mxu0
        %v1391 = vadd.f32 %v1339, %v1390
        %v1392 = vpop.f32.mrf.mxu0
        %v1393 = vpop.f32.mrf.mxu0
        %v1394 = vpop.f32.mrf.mxu0
        %1395 = vdwg.mxu0
        %v1396 = vmul.f32 %v1391, 0.5
        %v1397 = vmul.f32 %v1391, 0.044715
        %v1398 = vmul.f32 %v1397, %v1391
        %v1399 = vmul.f32 %v1398, %v1391
        %v1400 = vadd.f32 %v1391, %v1399
        %v1401 = vmul.f32 %v1400, 0.7978846
        %v1402 = vtanh.pop %v1401
        %v1403 = vadd.f32 %v1402, 1.0
        %v1404 = vmul.f32 %v1396, %v1403
        %v1405 = vpack.c.bf16 %v1404, %v1404
        %v1406 = vld [vmem:[%s9] sm:$0xf]
        %v1407 = vld [vmem:[%s9 + $0x4] sm:$0xf]
        %v1408 = vld [vmem:[%s9 + $0x8] sm:$0xf]
        %v1409 = vld [vmem:[%s9 + $0xc] sm:$0xf]
        %v1410 = vld [vmem:[%s9 + $0x10] sm:$0xf]
        %v1411 = vld [vmem:[%s9 + $0x14] sm:$0xf]
        %v1412 = vld [vmem:[%s9 + $0x18] sm:$0xf]
        %v1413 = vld [vmem:[%s9 + $0x1c] sm:$0xf]
        %s1414 = scalar_lea.vmem %s6, 1
        %v1415 = vld [vmem:[%s1414] sm:$0x1]
        %v1417 = vlaneseq
        %v1418 = vshrl.u32 %v1417, 7
        %v1419 = vsub.s32 0, %v1418
        %v1420 = vrot.slane %v1415, %v1419
        %v1430 = vunpack.c.l.b16 %v1406
        %v1431 = vunpack.c.l.b16 %v1407
        %v1432 = vunpack.c.l.b16 %v1408
        %v1433 = vunpack.c.l.b16 %v1409
        %v1434 = vunpack.c.l.b16 %v1410
        %v1435 = vunpack.c.l.b16 %v1411
        %v1436 = vunpack.c.l.b16 %v1412
        %v1437 = vunpack.c.l.b16 %v1413
        %v1438 = vpack.c.b16 %v1431, %v1430
        %v1439 = vpack.c.b16 %v1433, %v1432
        %v1440 = vpack.c.b16 %v1435, %v1434
        %v1441 = vpack.c.b16 %v1437, %v1436
        %vm1446 = vcmask 523264
        %v1448 = vsel %vm1446, %v1405, 0
        %1450 = vmatprep.subr.bf16.mxu0 0
        %1451 = vmatpush1.bf16.msra.mxu0 0
        %1452 = vmatprep.subr.bf16.mxu0 0
        %1453 = vmatpush1.bf16.msra.mxu0 0
        %1454 = vmatprep.subr.bf16.mxu0 0
        %1455 = vmatpush1.bf16.msra.mxu0 0
        %1456 = vmatprep.subr.bf16.mxu0 0
        %1457 = vmatpush1.bf16.msra.mxu0 0
        %1458 = vmatprep.subr.bf16.mxu0 0
        %1459 = vmatpush1.bf16.msra.mxu0 %v1441
        %1460 = vmatprep.subr.bf16.mxu0 0
        %1461 = vmatpush1.bf16.msra.mxu0 %v1440
        %1462 = vmatprep.subr.bf16.mxu0 0
        %1463 = vmatpush1.bf16.msra.mxu0 %v1439
        %1464 = vmatprep.subr.bf16.mxu0 0
        %1465 = vmatpush1.bf16.msra.mxu0 %v1438
        %1466 = vmatprep.subr.bf16.mxu0 0
        %1467 = vmatpush2.bf16.msra.mxu0 0
        %1468 = vmatprep.subr.bf16.mxu0 0
        %1469 = vmatpush2.bf16.msra.mxu0 0
        %1470 = vmatprep.subr.bf16.mxu0 0
        %1471 = vmatpush2.bf16.msra.mxu0 0
        %1472 = vmatprep.subr.bf16.mxu0 0
        %1473 = vmatpush2.bf16.msra.mxu0 0
        %1474 = vmatprep.subr.bf16.mxu0 0
        %1475 = vmatpush2.bf16.msra.mxu0 0
        %1476 = vmatprep.subr.bf16.mxu0 0
        %1477 = vmatpush2.bf16.msra.mxu0 0
        %1478 = vmatprep.subr.bf16.mxu0 0
        %1479 = vmatpush2.bf16.msra.mxu0 0
        %1480 = vmatprep.subr.bf16.mxu0 0
        %1481 = vmatpush2.bf16.msra.mxu0 0
        %1482 = vmatprep.mubr.bf16.mxu0 0
        %1483 = vmatmul.mubr.bf16.gmra.mxu0 %v1448
        %v1484 = vpop.f32.mrf.mxu0
        %v1485 = vadd.f32 %v1420, %v1484
        %v1486 = vpop.f32.mrf.mxu0
        %v1487 = vpop.f32.mrf.mxu0
        %v1488 = vpop.f32.mrf.mxu0
        %1489 = vdwg.mxu0
        %v1490 = vadd.f32 %v1328, %v1485
        %s1491 = scalar_lea.vmem %s2, 4
        %v1492 = vld [vmem:[%s1491] sm:$0x1]
        %s1493 = scalar_lea.vmem %s2, 5
        %v1494 = vld [vmem:[%s1493] sm:$0x1]
        %v1495 = vsel %vm428, %v1490, 0.0
        %1496 = vadd.xlane.f32.xlu0 %v1495
        %v1497 = vpop.xlane.xlu0 %1496
        %v1498 = vmul.f32 %v1497, %v432
        %v1499 = vsub.f32 %v1490, %v1498
        %v1500 = vmul.f32 %v1499, %v1499
        %v1501 = vsel %vm428, %v1500, 0.0
        %1502 = vadd.xlane.f32.xlu0 %v1501
        %v1503 = vpop.xlane.xlu0 %1502
        %v1504 = vmul.f32 %v1503, %v432
        %v1505 = vadd.f32 %v1504, 1e-12
        %v1506 = vrsqrt.pop %v1505
        %v1507 = vmul.f32 %v1499, %v1506
        %v1509 = vlaneseq
        %v1510 = vshrl.u32 %v1509, 7
        %v1511 = vsub.s32 0, %v1510
        %v1512 = vrot.slane %v1492, %v1511
        %v1514 = vmul.f32 %v1507, %v1512
        %v1516 = vlaneseq
        %v1517 = vshrl.u32 %v1516, 7
        %v1518 = vsub.s32 0, %v1517
        %v1519 = vrot.slane %v1494, %v1518
        %v1521 = vadd.f32 %v1514, %v1519
        %v1522 = vpack.c.bf16 %v1521, %v1521
        %s1523 = scalar_lea.vmem %s3, 96
        %v1524 = vld [vmem:[%s1523] sm:$0xf]
        %v1525 = vld [vmem:[%s1523 + $0x4] sm:$0xf]
        %v1526 = vld [vmem:[%s1523 + $0x8] sm:$0xf]
        %v1527 = vld [vmem:[%s1523 + $0xc] sm:$0xf]
        %s1528 = scalar_lea.vmem %s4, 6
        %v1529 = vld [vmem:[%s1528] sm:$0x1]
        %v1531 = vlaneseq
        %v1532 = vshrl.u32 %v1531, 7
        %v1533 = vsub.s32 0, %v1532
        %v1534 = vrot.slane %v1529, %v1533
        %v1540 = vunpack.c.l.b16 %v1524
        %v1541 = vunpack.c.l.b16 %v1525
        %v1542 = vunpack.c.l.b16 %v1526
        %v1543 = vunpack.c.l.b16 %v1527
        %v1544 = vpack.c.b16 %v1541, %v1540
        %v1545 = vpack.c.b16 %v1543, %v1542
        %v1549 = vsel %vm428, %v1522, 0
        %1551 = vmatprep.subr.bf16.mxu0 0
        %1552 = vmatpush1.bf16.msra.mxu0 0
        %1553 = vmatprep.subr.bf16.mxu0 0
        %1554 = vmatpush1.bf16.msra.mxu0 0
        %1555 = vmatprep.subr.bf16.mxu0 0
        %1556 = vmatpush1.bf16.msra.mxu0 0
        %1557 = vmatprep.subr.bf16.mxu0 0
        %1558 = vmatpush1.bf16.msra.mxu0 0
        %1559 = vmatprep.subr.bf16.mxu0 0
        %1560 = vmatpush1.bf16.msra.mxu0 0
        %1561 = vmatprep.subr.bf16.mxu0 0
        %1562 = vmatpush1.bf16.msra.mxu0 0
        %1563 = vmatprep.subr.bf16.mxu0 0
        %1564 = vmatpush1.bf16.msra.mxu0 %v1545
        %1565 = vmatprep.subr.bf16.mxu0 0
        %1566 = vmatpush1.bf16.msra.mxu0 %v1544
        %1567 = vmatprep.subr.bf16.mxu0 0
        %1568 = vmatpush2.bf16.msra.mxu0 0
        %1569 = vmatprep.subr.bf16.mxu0 0
        %1570 = vmatpush2.bf16.msra.mxu0 0
        %1571 = vmatprep.subr.bf16.mxu0 0
        %1572 = vmatpush2.bf16.msra.mxu0 0
        %1573 = vmatprep.subr.bf16.mxu0 0
        %1574 = vmatpush2.bf16.msra.mxu0 0
        %1575 = vmatprep.subr.bf16.mxu0 0
        %1576 = vmatpush2.bf16.msra.mxu0 0
        %1577 = vmatprep.subr.bf16.mxu0 0
        %1578 = vmatpush2.bf16.msra.mxu0 0
        %1579 = vmatprep.subr.bf16.mxu0 0
        %1580 = vmatpush2.bf16.msra.mxu0 0
        %1581 = vmatprep.subr.bf16.mxu0 0
        %1582 = vmatpush2.bf16.msra.mxu0 0
        %1583 = vmatprep.mubr.bf16.mxu0 0
        %1584 = vmatmul.mubr.bf16.gmra.mxu0 %v1549
        %v1585 = vpop.f32.mrf.mxu0
        %v1586 = vadd.f32 %v1534, %v1585
        %v1587 = vpop.f32.mrf.mxu0
        %v1588 = vpop.f32.mrf.mxu0
        %v1589 = vpop.f32.mrf.mxu0
        %1590 = vdwg.mxu0
        %s1591 = scalar_lea.vmem %s3, 112
        %v1592 = vld [vmem:[%s1591] sm:$0xf]
        %v1593 = vld [vmem:[%s1591 + $0x4] sm:$0xf]
        %v1594 = vld [vmem:[%s1591 + $0x8] sm:$0xf]
        %v1595 = vld [vmem:[%s1591 + $0xc] sm:$0xf]
        %s1596 = scalar_lea.vmem %s4, 7
        %v1597 = vld [vmem:[%s1596] sm:$0x1]
        %v1599 = vlaneseq
        %v1600 = vshrl.u32 %v1599, 7
        %v1601 = vsub.s32 0, %v1600
        %v1602 = vrot.slane %v1597, %v1601
        %v1608 = vunpack.c.l.b16 %v1592
        %v1609 = vunpack.c.l.b16 %v1593
        %v1610 = vunpack.c.l.b16 %v1594
        %v1611 = vunpack.c.l.b16 %v1595
        %v1612 = vpack.c.b16 %v1609, %v1608
        %v1613 = vpack.c.b16 %v1611, %v1610
        %1616 = vmatprep.subr.bf16.mxu0 0
        %1617 = vmatpush1.bf16.msra.mxu0 0
        %1618 = vmatprep.subr.bf16.mxu0 0
        %1619 = vmatpush1.bf16.msra.mxu0 0
        %1620 = vmatprep.subr.bf16.mxu0 0
        %1621 = vmatpush1.bf16.msra.mxu0 0
        %1622 = vmatprep.subr.bf16.mxu0 0
        %1623 = vmatpush1.bf16.msra.mxu0 0
        %1624 = vmatprep.subr.bf16.mxu0 0
        %1625 = vmatpush1.bf16.msra.mxu0 0
        %1626 = vmatprep.subr.bf16.mxu0 0
        %1627 = vmatpush1.bf16.msra.mxu0 0
        %1628 = vmatprep.subr.bf16.mxu0 0
        %1629 = vmatpush1.bf16.msra.mxu0 %v1613
        %1630 = vmatprep.subr.bf16.mxu0 0
        %1631 = vmatpush1.bf16.msra.mxu0 %v1612
        %1632 = vmatprep.subr.bf16.mxu0 0
        %1633 = vmatpush2.bf16.msra.mxu0 0
        %1634 = vmatprep.subr.bf16.mxu0 0
        %1635 = vmatpush2.bf16.msra.mxu0 0
        %1636 = vmatprep.subr.bf16.mxu0 0
        %1637 = vmatpush2.bf16.msra.mxu0 0
        %1638 = vmatprep.subr.bf16.mxu0 0
        %1639 = vmatpush2.bf16.msra.mxu0 0
        %1640 = vmatprep.subr.bf16.mxu0 0
        %1641 = vmatpush2.bf16.msra.mxu0 0
        %1642 = vmatprep.subr.bf16.mxu0 0
        %1643 = vmatpush2.bf16.msra.mxu0 0
        %1644 = vmatprep.subr.bf16.mxu0 0
        %1645 = vmatpush2.bf16.msra.mxu0 0
        %1646 = vmatprep.subr.bf16.mxu0 0
        %1647 = vmatpush2.bf16.msra.mxu0 0
        %1648 = vmatprep.mubr.bf16.mxu0 0
        %1649 = vmatmul.mubr.bf16.gmra.mxu0 %v1549
        %v1650 = vpop.f32.mrf.mxu0
        %v1651 = vadd.f32 %v1602, %v1650
        %v1652 = vpop.f32.mrf.mxu0
        %v1653 = vpop.f32.mrf.mxu0
        %v1654 = vpop.f32.mrf.mxu0
        %1655 = vdwg.mxu0
        %s1656 = scalar_lea.vmem %s3, 128
        %v1657 = vld [vmem:[%s1656] sm:$0xf]
        %v1658 = vld [vmem:[%s1656 + $0x4] sm:$0xf]
        %v1659 = vld [vmem:[%s1656 + $0x8] sm:$0xf]
        %v1660 = vld [vmem:[%s1656 + $0xc] sm:$0xf]
        %s1661 = scalar_lea.vmem %s4, 8
        %v1662 = vld [vmem:[%s1661] sm:$0x1]
        %v1664 = vlaneseq
        %v1665 = vshrl.u32 %v1664, 7
        %v1666 = vsub.s32 0, %v1665
        %v1667 = vrot.slane %v1662, %v1666
        %v1673 = vunpack.c.l.b16 %v1657
        %v1674 = vunpack.c.l.b16 %v1658
        %v1675 = vunpack.c.l.b16 %v1659
        %v1676 = vunpack.c.l.b16 %v1660
        %v1677 = vpack.c.b16 %v1674, %v1673
        %v1678 = vpack.c.b16 %v1676, %v1675
        %1681 = vmatprep.subr.bf16.mxu0 0
        %1682 = vmatpush1.bf16.msra.mxu0 0
        %1683 = vmatprep.subr.bf16.mxu0 0
        %1684 = vmatpush1.bf16.msra.mxu0 0
        %1685 = vmatprep.subr.bf16.mxu0 0
        %1686 = vmatpush1.bf16.msra.mxu0 0
        %1687 = vmatprep.subr.bf16.mxu0 0
        %1688 = vmatpush1.bf16.msra.mxu0 0
        %1689 = vmatprep.subr.bf16.mxu0 0
        %1690 = vmatpush1.bf16.msra.mxu0 0
        %1691 = vmatprep.subr.bf16.mxu0 0
        %1692 = vmatpush1.bf16.msra.mxu0 0
        %1693 = vmatprep.subr.bf16.mxu0 0
        %1694 = vmatpush1.bf16.msra.mxu0 %v1678
        %1695 = vmatprep.subr.bf16.mxu0 0
        %1696 = vmatpush1.bf16.msra.mxu0 %v1677
        %1697 = vmatprep.subr.bf16.mxu0 0
        %1698 = vmatpush2.bf16.msra.mxu0 0
        %1699 = vmatprep.subr.bf16.mxu0 0
        %1700 = vmatpush2.bf16.msra.mxu0 0
        %1701 = vmatprep.subr.bf16.mxu0 0
        %1702 = vmatpush2.bf16.msra.mxu0 0
        %1703 = vmatprep.subr.bf16.mxu0 0
        %1704 = vmatpush2.bf16.msra.mxu0 0
        %1705 = vmatprep.subr.bf16.mxu0 0
        %1706 = vmatpush2.bf16.msra.mxu0 0
        %1707 = vmatprep.subr.bf16.mxu0 0
        %1708 = vmatpush2.bf16.msra.mxu0 0
        %1709 = vmatprep.subr.bf16.mxu0 0
        %1710 = vmatpush2.bf16.msra.mxu0 0
        %1711 = vmatprep.subr.bf16.mxu0 0
        %1712 = vmatpush2.bf16.msra.mxu0 0
        %1713 = vmatprep.mubr.bf16.mxu0 0
        %1714 = vmatmul.mubr.bf16.gmra.mxu0 %v1549
        %v1715 = vpop.f32.mrf.mxu0
        %v1716 = vadd.f32 %v1667, %v1715
        %v1717 = vpop.f32.mrf.mxu0
        %v1718 = vpop.f32.mrf.mxu0
        %v1719 = vpop.f32.mrf.mxu0
        %1720 = vdwg.mxu0
        %v1722 = vsel %vm657, %v1586, 0
        %v1725 = vsel %vm657, %v1651, 0
        %1727 = vmatprep.subr.mxu0 0.0
        %1728 = vmatpush1.xpose.msra.mxu0 0.0
        %1729 = vmatprep.subr.mxu0 0.0
        %1730 = vmatpush1.xpose.msra.mxu0 0.0
        %1731 = vmatprep.subr.mxu0 0.0
        %1732 = vmatpush1.xpose.msra.mxu0 0.0
        %1733 = vmatprep.subr.mxu0 0.0
        %1734 = vmatpush1.xpose.msra.mxu0 0.0
        %1735 = vmatprep.subr.mxu0 0.0
        %1736 = vmatpush1.xpose.msra.mxu0 0.0
        %1737 = vmatprep.subr.mxu0 0.0
        %1738 = vmatpush1.xpose.msra.mxu0 0.0
        %1739 = vmatprep.subr.mxu0 0.0
        %1740 = vmatpush1.xpose.msra.mxu0 0.0
        %1741 = vmatprep.subr.mxu0 0.0
        %1742 = vmatpush1.xpose.msra.mxu0 0.0
        %1743 = vmatprep.subr.mxu0 0.0
        %1744 = vmatpush1.xpose.msra.mxu0 0.0
        %1745 = vmatprep.subr.mxu0 0.0
        %1746 = vmatpush1.xpose.msra.mxu0 0.0
        %1747 = vmatprep.subr.mxu0 0.0
        %1748 = vmatpush1.xpose.msra.mxu0 0.0
        %1749 = vmatprep.subr.mxu0 0.0
        %1750 = vmatpush1.xpose.msra.mxu0 0.0
        %1751 = vmatprep.subr.mxu0 0.0
        %1752 = vmatpush1.xpose.msra.mxu0 0.0
        %1753 = vmatprep.subr.mxu0 0.0
        %1754 = vmatpush1.xpose.msra.mxu0 0.0
        %1755 = vmatprep.subr.mxu0 0.0
        %1756 = vmatpush1.xpose.msra.mxu0 0.0
        %1757 = vmatprep.subr.mxu0 0.0
        %1758 = vmatpush1.xpose.msra.mxu0 %v1725
        %1759 = vmatprep.subr.mxu0 0.0
        %1760 = vmatpush2.xpose.msra.mxu0 0.0
        %1761 = vmatprep.subr.mxu0 0.0
        %1762 = vmatpush2.xpose.msra.mxu0 0.0
        %1763 = vmatprep.subr.mxu0 0.0
        %1764 = vmatpush2.xpose.msra.mxu0 0.0
        %1765 = vmatprep.subr.mxu0 0.0
        %1766 = vmatpush2.xpose.msra.mxu0 0.0
        %1767 = vmatprep.subr.mxu0 0.0
        %1768 = vmatpush2.xpose.msra.mxu0 0.0
        %1769 = vmatprep.subr.mxu0 0.0
        %1770 = vmatpush2.xpose.msra.mxu0 0.0
        %1771 = vmatprep.subr.mxu0 0.0
        %1772 = vmatpush2.xpose.msra.mxu0 0.0
        %1773 = vmatprep.subr.mxu0 0.0
        %1774 = vmatpush2.xpose.msra.mxu0 0.0
        %1775 = vmatprep.subr.mxu0 0.0
        %1776 = vmatpush2.xpose.msra.mxu0 0.0
        %1777 = vmatprep.subr.mxu0 0.0
        %1778 = vmatpush2.xpose.msra.mxu0 0.0
        %1779 = vmatprep.subr.mxu0 0.0
        %1780 = vmatpush2.xpose.msra.mxu0 0.0
        %1781 = vmatprep.subr.mxu0 0.0
        %1782 = vmatpush2.xpose.msra.mxu0 0.0
        %1783 = vmatprep.subr.mxu0 0.0
        %1784 = vmatpush2.xpose.msra.mxu0 0.0
        %1785 = vmatprep.subr.mxu0 0.0
        %1786 = vmatpush2.xpose.msra.mxu0 0.0
        %1787 = vmatprep.subr.mxu0 0.0
        %1788 = vmatpush2.xpose.msra.mxu0 0.0
        %1789 = vmatprep.subr.mxu0 0.0
        %1790 = vmatpush2.xpose.msra.mxu0 0.0
        %1791 = vmatprep.mubr.f32.mxu0 0.0
        %1792 = vmatmul.mubr.f32.gmra.mxu0 %v1722
        %v1793 = vpop.f32.mrf.mxu0
        %v1794 = vadd.f32 0.0, %v1793
        %v1795 = vpop.f32.mrf.mxu0
        %1796 = vdwg.mxu0
        %v1797 = vmul.f32 %v1794, 0.25
        %v1798 = vadd.f32 %v1797, %v739
        %v1799 = vsel %vm742, %v1798, -inf
        %1800 = vmax.xlane.f32.xlu0 %v1799
        %v1801 = vpop.xlane.xlu0 %1800
        %v1802 = vsub.f32 %v1798, %v1801
        %v1803 = vmul.f32 %v1802, 1.442695
        %v1804 = vpow.pop %v1803
        %v1805 = vsel %vm742, %v1804, 0.0
        %1806 = vadd.xlane.f32.xlu0 %v1805
        %v1807 = vpop.xlane.xlu0 %1806
        %v1808 = vrcp.pop %v1807
        %v1809 = vmul.f32 %v1804, %v1808
        %v1811 = vsel %vm742, %v1809, 0
        %1813 = vmatprep.subr.mxu0 0.0
        %1814 = vmatpush1.msra.mxu0 0.0
        %1815 = vmatprep.subr.mxu0 0.0
        %1816 = vmatpush1.msra.mxu0 0.0
        %1817 = vmatprep.subr.mxu0 0.0
        %1818 = vmatpush1.msra.mxu0 0.0
        %1819 = vmatprep.subr.mxu0 0.0
        %1820 = vmatpush1.msra.mxu0 0.0
        %1821 = vmatprep.subr.mxu0 0.0
        %1822 = vmatpush1.msra.mxu0 0.0
        %1823 = vmatprep.subr.mxu0 0.0
        %1824 = vmatpush1.msra.mxu0 0.0
        %1825 = vmatprep.subr.mxu0 0.0
        %1826 = vmatpush1.msra.mxu0 0.0
        %1827 = vmatprep.subr.mxu0 0.0
        %1828 = vmatpush1.msra.mxu0 0.0
        %1829 = vmatprep.subr.mxu0 0.0
        %1830 = vmatpush1.msra.mxu0 0.0
        %1831 = vmatprep.subr.mxu0 0.0
        %1832 = vmatpush1.msra.mxu0 0.0
        %1833 = vmatprep.subr.mxu0 0.0
        %1834 = vmatpush1.msra.mxu0 0.0
        %1835 = vmatprep.subr.mxu0 0.0
        %1836 = vmatpush1.msra.mxu0 0.0
        %1837 = vmatprep.subr.mxu0 0.0
        %1838 = vmatpush1.msra.mxu0 0.0
        %1839 = vmatprep.subr.mxu0 0.0
        %1840 = vmatpush1.msra.mxu0 0.0
        %1841 = vmatprep.subr.mxu0 0.0
        %1842 = vmatpush1.msra.mxu0 0.0
        %1843 = vmatprep.subr.mxu0 0.0
        %1844 = vmatpush1.msra.mxu0 %v1716
        %1845 = vmatprep.subr.mxu0 0.0
        %1846 = vmatpush2.msra.mxu0 0.0
        %1847 = vmatprep.subr.mxu0 0.0
        %1848 = vmatpush2.msra.mxu0 0.0
        %1849 = vmatprep.subr.mxu0 0.0
        %1850 = vmatpush2.msra.mxu0 0.0
        %1851 = vmatprep.subr.mxu0 0.0
        %1852 = vmatpush2.msra.mxu0 0.0
        %1853 = vmatprep.subr.mxu0 0.0
        %1854 = vmatpush2.msra.mxu0 0.0
        %1855 = vmatprep.subr.mxu0 0.0
        %1856 = vmatpush2.msra.mxu0 0.0
        %1857 = vmatprep.subr.mxu0 0.0
        %1858 = vmatpush2.msra.mxu0 0.0
        %1859 = vmatprep.subr.mxu0 0.0
        %1860 = vmatpush2.msra.mxu0 0.0
        %1861 = vmatprep.subr.mxu0 0.0
        %1862 = vmatpush2.msra.mxu0 0.0
        %1863 = vmatprep.subr.mxu0 0.0
        %1864 = vmatpush2.msra.mxu0 0.0
        %1865 = vmatprep.subr.mxu0 0.0
        %1866 = vmatpush2.msra.mxu0 0.0
        %1867 = vmatprep.subr.mxu0 0.0
        %1868 = vmatpush2.msra.mxu0 0.0
        %1869 = vmatprep.subr.mxu0 0.0
        %1870 = vmatpush2.msra.mxu0 0.0
        %1871 = vmatprep.subr.mxu0 0.0
        %1872 = vmatpush2.msra.mxu0 0.0
        %1873 = vmatprep.subr.mxu0 0.0
        %1874 = vmatpush2.msra.mxu0 0.0
        %1875 = vmatprep.subr.mxu0 0.0
        %1876 = vmatpush2.msra.mxu0 0.0
        %1877 = vmatprep.mubr.f32.mxu0 0.0
        %1878 = vmatmul.mubr.f32.gmra.mxu0 %v1811
        %v1879 = vpop.f32.mrf.mxu0
        %v1880 = vadd.f32 0.0, %v1879
        %v1881 = vpop.f32.mrf.mxu0
        %1882 = vdwg.mxu0
        %v1883 = vpack.c.bf16 %v1880, %v1880
        %s1884 = scalar_lea.vmem %s5, 16
        %v1885 = vld [vmem:[%s1884] sm:$0xf]
        %v1886 = vld [vmem:[%s1884 + $0x4] sm:$0xf]
        %s1887 = scalar_lea.vmem %s3, 144
        %v1888 = vld [vmem:[%s1887] sm:$0xf]
        %v1889 = vld [vmem:[%s1887 + $0x4] sm:$0xf]
        %v1890 = vld [vmem:[%s1887 + $0x8] sm:$0xf]
        %v1891 = vld [vmem:[%s1887 + $0xc] sm:$0xf]
        %s1892 = scalar_lea.vmem %s4, 9
        %v1893 = vld [vmem:[%s1892] sm:$0x1]
        %v1895 = vlaneseq
        %v1896 = vshrl.u32 %v1895, 7
        %v1897 = vsub.s32 0, %v1896
        %v1898 = vrot.slane %v1893, %v1897
        %v1904 = vunpack.c.l.b16 %v1888
        %v1905 = vunpack.c.l.b16 %v1889
        %v1906 = vunpack.c.l.b16 %v1890
        %v1907 = vunpack.c.l.b16 %v1891
        %v1908 = vpack.c.b16 %v1905, %v1904
        %v1909 = vpack.c.b16 %v1907, %v1906
        %1912 = vmatprep.subr.bf16.mxu0 0
        %1913 = vmatpush1.bf16.msra.mxu0 0
        %1914 = vmatprep.subr.bf16.mxu0 0
        %1915 = vmatpush1.bf16.msra.mxu0 0
        %1916 = vmatprep.subr.bf16.mxu0 0
        %1917 = vmatpush1.bf16.msra.mxu0 0
        %1918 = vmatprep.subr.bf16.mxu0 0
        %1919 = vmatpush1.bf16.msra.mxu0 0
        %1920 = vmatprep.subr.bf16.mxu0 0
        %1921 = vmatpush1.bf16.msra.mxu0 0
        %1922 = vmatprep.subr.bf16.mxu0 0
        %1923 = vmatpush1.bf16.msra.mxu0 0
        %1924 = vmatprep.subr.bf16.mxu0 0
        %1925 = vmatpush1.bf16.msra.mxu0 %v1909
        %1926 = vmatprep.subr.bf16.mxu0 0
        %1927 = vmatpush1.bf16.msra.mxu0 %v1908
        %1928 = vmatprep.subr.bf16.mxu0 0
        %1929 = vmatpush2.bf16.msra.mxu0 0
        %1930 = vmatprep.subr.bf16.mxu0 0
        %1931 = vmatpush2.bf16.msra.mxu0 0
        %1932 = vmatprep.subr.bf16.mxu0 0
        %1933 = vmatpush2.bf16.msra.mxu0 0
        %1934 = vmatprep.subr.bf16.mxu0 0
        %1935 = vmatpush2.bf16.msra.mxu0 0
        %1936 = vmatprep.subr.bf16.mxu0 0
        %1937 = vmatpush2.bf16.msra.mxu0 0
        %1938 = vmatprep.subr.bf16.mxu0 0
        %1939 = vmatpush2.bf16.msra.mxu0 0
        %1940 = vmatprep.subr.bf16.mxu0 0
        %1941 = vmatpush2.bf16.msra.mxu0 0
        %1942 = vmatprep.subr.bf16.mxu0 0
        %1943 = vmatpush2.bf16.msra.mxu0 0
        %1944 = vmatprep.mubr.bf16.mxu0 0
        %1945 = vmatmul.mubr.bf16.gmra.mxu0 %v1549
        %v1946 = vpop.f32.mrf.mxu0
        %v1947 = vadd.f32 %v1898, %v1946
        %v1948 = vpop.f32.mrf.mxu0
        %v1949 = vpop.f32.mrf.mxu0
        %v1950 = vpop.f32.mrf.mxu0
        %1951 = vdwg.mxu0
        %s1952 = scalar_lea.vmem %s3, 160
        %v1953 = vld [vmem:[%s1952] sm:$0xf]
        %v1954 = vld [vmem:[%s1952 + $0x4] sm:$0xf]
        %v1955 = vld [vmem:[%s1952 + $0x8] sm:$0xf]
        %v1956 = vld [vmem:[%s1952 + $0xc] sm:$0xf]
        %s1957 = scalar_lea.vmem %s4, 10
        %v1958 = vld [vmem:[%s1957] sm:$0x1]
        %v1960 = vlaneseq
        %v1961 = vshrl.u32 %v1960, 7
        %v1962 = vsub.s32 0, %v1961
        %v1963 = vrot.slane %v1958, %v1962
        %v1969 = vunpack.c.l.b16 %v1953
        %v1970 = vunpack.c.l.b16 %v1954
        %v1971 = vunpack.c.l.b16 %v1955
        %v1972 = vunpack.c.l.b16 %v1956
        %v1973 = vpack.c.b16 %v1970, %v1969
        %v1974 = vpack.c.b16 %v1972, %v1971
        %1977 = vmatprep.subr.bf16.mxu0 0
        %1978 = vmatpush1.bf16.msra.mxu0 0
        %1979 = vmatprep.subr.bf16.mxu0 0
        %1980 = vmatpush1.bf16.msra.mxu0 0
        %1981 = vmatprep.subr.bf16.mxu0 0
        %1982 = vmatpush1.bf16.msra.mxu0 0
        %1983 = vmatprep.subr.bf16.mxu0 0
        %1984 = vmatpush1.bf16.msra.mxu0 0
        %1985 = vmatprep.subr.bf16.mxu0 0
        %1986 = vmatpush1.bf16.msra.mxu0 0
        %1987 = vmatprep.subr.bf16.mxu0 0
        %1988 = vmatpush1.bf16.msra.mxu0 0
        %1989 = vmatprep.subr.bf16.mxu0 0
        %1990 = vmatpush1.bf16.msra.mxu0 %v1974
        %1991 = vmatprep.subr.bf16.mxu0 0
        %1992 = vmatpush1.bf16.msra.mxu0 %v1973
        %1993 = vmatprep.subr.bf16.mxu0 0
        %1994 = vmatpush2.bf16.msra.mxu0 0
        %1995 = vmatprep.subr.bf16.mxu0 0
        %1996 = vmatpush2.bf16.msra.mxu0 0
        %1997 = vmatprep.subr.bf16.mxu0 0
        %1998 = vmatpush2.bf16.msra.mxu0 0
        %1999 = vmatprep.subr.bf16.mxu0 0
        %2000 = vmatpush2.bf16.msra.mxu0 0
        %2001 = vmatprep.subr.bf16.mxu0 0
        %2002 = vmatpush2.bf16.msra.mxu0 0
        %2003 = vmatprep.subr.bf16.mxu0 0
        %2004 = vmatpush2.bf16.msra.mxu0 0
        %2005 = vmatprep.subr.bf16.mxu0 0
        %2006 = vmatpush2.bf16.msra.mxu0 0
        %2007 = vmatprep.subr.bf16.mxu0 0
        %2008 = vmatpush2.bf16.msra.mxu0 0
        %2009 = vmatprep.mubr.bf16.mxu0 0
        %2010 = vmatmul.mubr.bf16.gmra.mxu0 %v1549
        %v2011 = vpop.f32.mrf.mxu0
        %v2012 = vadd.f32 %v1963, %v2011
        %v2013 = vpop.f32.mrf.mxu0
        %v2014 = vpop.f32.mrf.mxu0
        %v2015 = vpop.f32.mrf.mxu0
        %2016 = vdwg.mxu0
        %s2017 = scalar_lea.vmem %s3, 176
        %v2018 = vld [vmem:[%s2017] sm:$0xf]
        %v2019 = vld [vmem:[%s2017 + $0x4] sm:$0xf]
        %v2020 = vld [vmem:[%s2017 + $0x8] sm:$0xf]
        %v2021 = vld [vmem:[%s2017 + $0xc] sm:$0xf]
        %s2022 = scalar_lea.vmem %s4, 11
        %v2023 = vld [vmem:[%s2022] sm:$0x1]
        %v2025 = vlaneseq
        %v2026 = vshrl.u32 %v2025, 7
        %v2027 = vsub.s32 0, %v2026
        %v2028 = vrot.slane %v2023, %v2027
        %v2034 = vunpack.c.l.b16 %v2018
        %v2035 = vunpack.c.l.b16 %v2019
        %v2036 = vunpack.c.l.b16 %v2020
        %v2037 = vunpack.c.l.b16 %v2021
        %v2038 = vpack.c.b16 %v2035, %v2034
        %v2039 = vpack.c.b16 %v2037, %v2036
        %2042 = vmatprep.subr.bf16.mxu0 0
        %2043 = vmatpush1.bf16.msra.mxu0 0
        %2044 = vmatprep.subr.bf16.mxu0 0
        %2045 = vmatpush1.bf16.msra.mxu0 0
        %2046 = vmatprep.subr.bf16.mxu0 0
        %2047 = vmatpush1.bf16.msra.mxu0 0
        %2048 = vmatprep.subr.bf16.mxu0 0
        %2049 = vmatpush1.bf16.msra.mxu0 0
        %2050 = vmatprep.subr.bf16.mxu0 0
        %2051 = vmatpush1.bf16.msra.mxu0 0
        %2052 = vmatprep.subr.bf16.mxu0 0
        %2053 = vmatpush1.bf16.msra.mxu0 0
        %2054 = vmatprep.subr.bf16.mxu0 0
        %2055 = vmatpush1.bf16.msra.mxu0 %v2039
        %2056 = vmatprep.subr.bf16.mxu0 0
        %2057 = vmatpush1.bf16.msra.mxu0 %v2038
        %2058 = vmatprep.subr.bf16.mxu0 0
        %2059 = vmatpush2.bf16.msra.mxu0 0
        %2060 = vmatprep.subr.bf16.mxu0 0
        %2061 = vmatpush2.bf16.msra.mxu0 0
        %2062 = vmatprep.subr.bf16.mxu0 0
        %2063 = vmatpush2.bf16.msra.mxu0 0
        %2064 = vmatprep.subr.bf16.mxu0 0
        %2065 = vmatpush2.bf16.msra.mxu0 0
        %2066 = vmatprep.subr.bf16.mxu0 0
        %2067 = vmatpush2.bf16.msra.mxu0 0
        %2068 = vmatprep.subr.bf16.mxu0 0
        %2069 = vmatpush2.bf16.msra.mxu0 0
        %2070 = vmatprep.subr.bf16.mxu0 0
        %2071 = vmatpush2.bf16.msra.mxu0 0
        %2072 = vmatprep.subr.bf16.mxu0 0
        %2073 = vmatpush2.bf16.msra.mxu0 0
        %2074 = vmatprep.mubr.bf16.mxu0 0
        %2075 = vmatmul.mubr.bf16.gmra.mxu0 %v1549
        %v2076 = vpop.f32.mrf.mxu0
        %v2077 = vadd.f32 %v2028, %v2076
        %v2078 = vpop.f32.mrf.mxu0
        %v2079 = vpop.f32.mrf.mxu0
        %v2080 = vpop.f32.mrf.mxu0
        %2081 = vdwg.mxu0
        %v2083 = vsel %vm657, %v1947, 0
        %v2086 = vsel %vm657, %v2012, 0
        %2088 = vmatprep.subr.mxu0 0.0
        %2089 = vmatpush1.xpose.msra.mxu0 0.0
        %2090 = vmatprep.subr.mxu0 0.0
        %2091 = vmatpush1.xpose.msra.mxu0 0.0
        %2092 = vmatprep.subr.mxu0 0.0
        %2093 = vmatpush1.xpose.msra.mxu0 0.0
        %2094 = vmatprep.subr.mxu0 0.0
        %2095 = vmatpush1.xpose.msra.mxu0 0.0
        %2096 = vmatprep.subr.mxu0 0.0
        %2097 = vmatpush1.xpose.msra.mxu0 0.0
        %2098 = vmatprep.subr.mxu0 0.0
        %2099 = vmatpush1.xpose.msra.mxu0 0.0
        %2100 = vmatprep.subr.mxu0 0.0
        %2101 = vmatpush1.xpose.msra.mxu0 0.0
        %2102 = vmatprep.subr.mxu0 0.0
        %2103 = vmatpush1.xpose.msra.mxu0 0.0
        %2104 = vmatprep.subr.mxu0 0.0
        %2105 = vmatpush1.xpose.msra.mxu0 0.0
        %2106 = vmatprep.subr.mxu0 0.0
        %2107 = vmatpush1.xpose.msra.mxu0 0.0
        %2108 = vmatprep.subr.mxu0 0.0
        %2109 = vmatpush1.xpose.msra.mxu0 0.0
        %2110 = vmatprep.subr.mxu0 0.0
        %2111 = vmatpush1.xpose.msra.mxu0 0.0
        %2112 = vmatprep.subr.mxu0 0.0
        %2113 = vmatpush1.xpose.msra.mxu0 0.0
        %2114 = vmatprep.subr.mxu0 0.0
        %2115 = vmatpush1.xpose.msra.mxu0 0.0
        %2116 = vmatprep.subr.mxu0 0.0
        %2117 = vmatpush1.xpose.msra.mxu0 0.0
        %2118 = vmatprep.subr.mxu0 0.0
        %2119 = vmatpush1.xpose.msra.mxu0 %v2086
        %2120 = vmatprep.subr.mxu0 0.0
        %2121 = vmatpush2.xpose.msra.mxu0 0.0
        %2122 = vmatprep.subr.mxu0 0.0
        %2123 = vmatpush2.xpose.msra.mxu0 0.0
        %2124 = vmatprep.subr.mxu0 0.0
        %2125 = vmatpush2.xpose.msra.mxu0 0.0
        %2126 = vmatprep.subr.mxu0 0.0
        %2127 = vmatpush2.xpose.msra.mxu0 0.0
        %2128 = vmatprep.subr.mxu0 0.0
        %2129 = vmatpush2.xpose.msra.mxu0 0.0
        %2130 = vmatprep.subr.mxu0 0.0
        %2131 = vmatpush2.xpose.msra.mxu0 0.0
        %2132 = vmatprep.subr.mxu0 0.0
        %2133 = vmatpush2.xpose.msra.mxu0 0.0
        %2134 = vmatprep.subr.mxu0 0.0
        %2135 = vmatpush2.xpose.msra.mxu0 0.0
        %2136 = vmatprep.subr.mxu0 0.0
        %2137 = vmatpush2.xpose.msra.mxu0 0.0
        %2138 = vmatprep.subr.mxu0 0.0
        %2139 = vmatpush2.xpose.msra.mxu0 0.0
        %2140 = vmatprep.subr.mxu0 0.0
        %2141 = vmatpush2.xpose.msra.mxu0 0.0
        %2142 = vmatprep.subr.mxu0 0.0
        %2143 = vmatpush2.xpose.msra.mxu0 0.0
        %2144 = vmatprep.subr.mxu0 0.0
        %2145 = vmatpush2.xpose.msra.mxu0 0.0
        %2146 = vmatprep.subr.mxu0 0.0
        %2147 = vmatpush2.xpose.msra.mxu0 0.0
        %2148 = vmatprep.subr.mxu0 0.0
        %2149 = vmatpush2.xpose.msra.mxu0 0.0
        %2150 = vmatprep.subr.mxu0 0.0
        %2151 = vmatpush2.xpose.msra.mxu0 0.0
        %2152 = vmatprep.mubr.f32.mxu0 0.0
        %2153 = vmatmul.mubr.f32.gmra.mxu0 %v2083
        %v2154 = vpop.f32.mrf.mxu0
        %v2155 = vadd.f32 0.0, %v2154
        %v2156 = vpop.f32.mrf.mxu0
        %2157 = vdwg.mxu0
        %v2158 = vmul.f32 %v2155, 0.25
        %v2159 = vadd.f32 %v2158, %v739
        %v2160 = vsel %vm742, %v2159, -inf
        %2161 = vmax.xlane.f32.xlu0 %v2160
        %v2162 = vpop.xlane.xlu0 %2161
        %v2163 = vsub.f32 %v2159, %v2162
        %v2164 = vmul.f32 %v2163, 1.442695
        %v2165 = vpow.pop %v2164
        %v2166 = vsel %vm742, %v2165, 0.0
        %2167 = vadd.xlane.f32.xlu0 %v2166
        %v2168 = vpop.xlane.xlu0 %2167
        %v2169 = vrcp.pop %v2168
        %v2170 = vmul.f32 %v2165, %v2169
        %v2172 = vsel %vm742, %v2170, 0
        %2174 = vmatprep.subr.mxu0 0.0
        %2175 = vmatpush1.msra.mxu0 0.0
        %2176 = vmatprep.subr.mxu0 0.0
        %2177 = vmatpush1.msra.mxu0 0.0
        %2178 = vmatprep.subr.mxu0 0.0
        %2179 = vmatpush1.msra.mxu0 0.0
        %2180 = vmatprep.subr.mxu0 0.0
        %2181 = vmatpush1.msra.mxu0 0.0
        %2182 = vmatprep.subr.mxu0 0.0
        %2183 = vmatpush1.msra.mxu0 0.0
        %2184 = vmatprep.subr.mxu0 0.0
        %2185 = vmatpush1.msra.mxu0 0.0
        %2186 = vmatprep.subr.mxu0 0.0
        %2187 = vmatpush1.msra.mxu0 0.0
        %2188 = vmatprep.subr.mxu0 0.0
        %2189 = vmatpush1.msra.mxu0 0.0
        %2190 = vmatprep.subr.mxu0 0.0
        %2191 = vmatpush1.msra.mxu0 0.0
        %2192 = vmatprep.subr.mxu0 0.0
        %2193 = vmatpush1.msra.mxu0 0.0
        %2194 = vmatprep.subr.mxu0 0.0
        %2195 = vmatpush1.msra.mxu0 0.0
        %2196 = vmatprep.subr.mxu0 0.0
        %2197 = vmatpush1.msra.mxu0 0.0
        %2198 = vmatprep.subr.mxu0 0.0
        %2199 = vmatpush1.msra.mxu0 0.0
        %2200 = vmatprep.subr.mxu0 0.0
        %2201 = vmatpush1.msra.mxu0 0.0
        %2202 = vmatprep.subr.mxu0 0.0
        %2203 = vmatpush1.msra.mxu0 0.0
        %2204 = vmatprep.subr.mxu0 0.0
        %2205 = vmatpush1.msra.mxu0 %v2077
        %2206 = vmatprep.subr.mxu0 0.0
        %2207 = vmatpush2.msra.mxu0 0.0
        %2208 = vmatprep.subr.mxu0 0.0
        %2209 = vmatpush2.msra.mxu0 0.0
        %2210 = vmatprep.subr.mxu0 0.0
        %2211 = vmatpush2.msra.mxu0 0.0
        %2212 = vmatprep.subr.mxu0 0.0
        %2213 = vmatpush2.msra.mxu0 0.0
        %2214 = vmatprep.subr.mxu0 0.0
        %2215 = vmatpush2.msra.mxu0 0.0
        %2216 = vmatprep.subr.mxu0 0.0
        %2217 = vmatpush2.msra.mxu0 0.0
        %2218 = vmatprep.subr.mxu0 0.0
        %2219 = vmatpush2.msra.mxu0 0.0
        %2220 = vmatprep.subr.mxu0 0.0
        %2221 = vmatpush2.msra.mxu0 0.0
        %2222 = vmatprep.subr.mxu0 0.0
        %2223 = vmatpush2.msra.mxu0 0.0
        %2224 = vmatprep.subr.mxu0 0.0
        %2225 = vmatpush2.msra.mxu0 0.0
        %2226 = vmatprep.subr.mxu0 0.0
        %2227 = vmatpush2.msra.mxu0 0.0
        %2228 = vmatprep.subr.mxu0 0.0
        %2229 = vmatpush2.msra.mxu0 0.0
        %2230 = vmatprep.subr.mxu0 0.0
        %2231 = vmatpush2.msra.mxu0 0.0
        %2232 = vmatprep.subr.mxu0 0.0
        %2233 = vmatpush2.msra.mxu0 0.0
        %2234 = vmatprep.subr.mxu0 0.0
        %2235 = vmatpush2.msra.mxu0 0.0
        %2236 = vmatprep.subr.mxu0 0.0
        %2237 = vmatpush2.msra.mxu0 0.0
        %2238 = vmatprep.mubr.f32.mxu0 0.0
        %2239 = vmatmul.mubr.f32.gmra.mxu0 %v2172
        %v2240 = vpop.f32.mrf.mxu0
        %v2241 = vadd.f32 0.0, %v2240
        %v2242 = vpop.f32.mrf.mxu0
        %2243 = vdwg.mxu0
        %v2244 = vpack.c.bf16 %v2241, %v2241
        %s2245 = scalar_lea.vmem %s5, 24
        %v2246 = vld [vmem:[%s2245] sm:$0xf]
        %v2247 = vld [vmem:[%s2245 + $0x4] sm:$0xf]
        %v2250 = vunpack.c.l.b16 %v2246
        %v2251 = vunpack.c.l.b16 %v2247
        %v2252 = vpack.c.b16 %v2251, %v2250
        %v2255 = vsel %vm657, %v2244, 0
        %2257 = vmatprep.subr.bf16.mxu0 0
        %2258 = vmatpush1.bf16.msra.mxu0 0
        %2259 = vmatprep.subr.bf16.mxu0 0
        %2260 = vmatpush1.bf16.msra.mxu0 0
        %2261 = vmatprep.subr.bf16.mxu0 0
        %2262 = vmatpush1.bf16.msra.mxu0 0
        %2263 = vmatprep.subr.bf16.mxu0 0
        %2264 = vmatpush1.bf16.msra.mxu0 0
        %2265 = vmatprep.subr.bf16.mxu0 0
        %2266 = vmatpush1.bf16.msra.mxu0 0
        %2267 = vmatprep.subr.bf16.mxu0 0
        %2268 = vmatpush1.bf16.msra.mxu0 0
        %2269 = vmatprep.subr.bf16.mxu0 0
        %2270 = vmatpush1.bf16.msra.mxu0 0
        %2271 = vmatprep.subr.bf16.mxu0 0
        %2272 = vmatpush1.bf16.msra.mxu0 %v2252
        %2273 = vmatprep.subr.bf16.mxu0 0
        %2274 = vmatpush2.bf16.msra.mxu0 0
        %2275 = vmatprep.subr.bf16.mxu0 0
        %2276 = vmatpush2.bf16.msra.mxu0 0
        %2277 = vmatprep.subr.bf16.mxu0 0
        %2278 = vmatpush2.bf16.msra.mxu0 0
        %2279 = vmatprep.subr.bf16.mxu0 0
        %2280 = vmatpush2.bf16.msra.mxu0 0
        %2281 = vmatprep.subr.bf16.mxu0 0
        %2282 = vmatpush2.bf16.msra.mxu0 0
        %2283 = vmatprep.subr.bf16.mxu0 0
        %2284 = vmatpush2.bf16.msra.mxu0 0
        %2285 = vmatprep.subr.bf16.mxu0 0
        %2286 = vmatpush2.bf16.msra.mxu0 0
        %2287 = vmatprep.subr.bf16.mxu0 0
        %2288 = vmatpush2.bf16.msra.mxu0 0
        %2289 = vmatprep.mubr.bf16.mxu0 0
        %2290 = vmatmul.mubr.bf16.gmra.mxu0 %v2255
        %v2291 = vpop.f32.mrf.mxu0
        %v2292 = vadd.f32 0.0, %v2291
        %v2293 = vpop.f32.mrf.mxu0
        %v2294 = vpop.f32.mrf.mxu0
        %v2295 = vpop.f32.mrf.mxu0
        %2296 = vdwg.mxu0
        %v2299 = vunpack.c.l.b16 %v1885
        %v2300 = vunpack.c.l.b16 %v1886
        %v2301 = vpack.c.b16 %v2300, %v2299
        %v2304 = vsel %vm657, %v1883, 0
        %2306 = vmatprep.subr.bf16.mxu0 0
        %2307 = vmatpush1.bf16.msra.mxu0 0
        %2308 = vmatprep.subr.bf16.mxu0 0
        %2309 = vmatpush1.bf16.msra.mxu0 0
        %2310 = vmatprep.subr.bf16.mxu0 0
        %2311 = vmatpush1.bf16.msra.mxu0 0
        %2312 = vmatprep.subr.bf16.mxu0 0
        %2313 = vmatpush1.bf16.msra.mxu0 0
        %2314 = vmatprep.subr.bf16.mxu0 0
        %2315 = vmatpush1.bf16.msra.mxu0 0
        %2316 = vmatprep.subr.bf16.mxu0 0
        %2317 = vmatpush1.bf16.msra.mxu0 0
        %2318 = vmatprep.subr.bf16.mxu0 0
        %2319 = vmatpush1.bf16.msra.mxu0 0
        %2320 = vmatprep.subr.bf16.mxu0 0
        %2321 = vmatpush1.bf16.msra.mxu0 %v2301
        %2322 = vmatprep.subr.bf16.mxu0 0
        %2323 = vmatpush2.bf16.msra.mxu0 0
        %2324 = vmatprep.subr.bf16.mxu0 0
        %2325 = vmatpush2.bf16.msra.mxu0 0
        %2326 = vmatprep.subr.bf16.mxu0 0
        %2327 = vmatpush2.bf16.msra.mxu0 0
        %2328 = vmatprep.subr.bf16.mxu0 0
        %2329 = vmatpush2.bf16.msra.mxu0 0
        %2330 = vmatprep.subr.bf16.mxu0 0
        %2331 = vmatpush2.bf16.msra.mxu0 0
        %2332 = vmatprep.subr.bf16.mxu0 0
        %2333 = vmatpush2.bf16.msra.mxu0 0
        %2334 = vmatprep.subr.bf16.mxu0 0
        %2335 = vmatpush2.bf16.msra.mxu0 0
        %2336 = vmatprep.subr.bf16.mxu0 0
        %2337 = vmatpush2.bf16.msra.mxu0 0
        %2338 = vmatprep.mubr.bf16.mxu0 0
        %2339 = vmatmul.mubr.bf16.gmra.mxu0 %v2304
        %v2340 = vpop.f32.mrf.mxu0
        %v2341 = vadd.f32 %v2292, %v2340
        %v2342 = vpop.f32.mrf.mxu0
        %v2343 = vpop.f32.mrf.mxu0
        %v2344 = vpop.f32.mrf.mxu0
        %2345 = vdwg.mxu0
        %v2346 = vadd.f32 %v1521, %v2341
        %s2347 = scalar_lea.vmem %s6, 2
        %v2348 = vld [vmem:[%s2347] sm:$0x1]
        %v2350 = vlaneseq
        %v2351 = vshrl.u32 %v2350, 7
        %v2352 = vsub.s32 0, %v2351
        %v2353 = vrot.slane %v2348, %v2352
        %v2355 = vadd.f32 %v2346, %v2353
        %s2356 = scalar_lea.vmem %s2, 6
        %v2357 = vld [vmem:[%s2356] sm:$0x1]
        %s2358 = scalar_lea.vmem %s2, 7
        %v2359 = vld [vmem:[%s2358] sm:$0x1]
        %v2360 = vsel %vm428, %v2355, 0.0
        %2361 = vadd.xlane.f32.xlu0 %v2360
        %v2362 = vpop.xlane.xlu0 %2361
        %v2363 = vmul.f32 %v2362, %v432
        %v2364 = vsub.f32 %v2355, %v2363
        %v2365 = vmul.f32 %v2364, %v2364
        %v2366 = vsel %vm428, %v2365, 0.0
        %2367 = vadd.xlane.f32.xlu0 %v2366
        %v2368 = vpop.xlane.xlu0 %2367
        %v2369 = vmul.f32 %v2368, %v432
        %v2370 = vadd.f32 %v2369, 1e-12
        %v2371 = vrsqrt.pop %v2370
        %v2372 = vmul.f32 %v2364, %v2371
        %v2374 = vlaneseq
        %v2375 = vshrl.u32 %v2374, 7
        %v2376 = vsub.s32 0, %v2375
        %v2377 = vrot.slane %v2357, %v2376
        %v2379 = vmul.f32 %v2372, %v2377
        %v2381 = vlaneseq
        %v2382 = vshrl.u32 %v2381, 7
        %v2383 = vsub.s32 0, %v2382
        %v2384 = vrot.slane %v2359, %v2383
        %v2386 = vadd.f32 %v2379, %v2384
        %v2387 = vpack.c.bf16 %v2386, %v2386
        %s2388 = scalar_lea.vmem %s7, 16
        %v2389 = vld [vmem:[%s2388] sm:$0xf]
        %v2390 = vld [vmem:[%s2388 + $0x4] sm:$0xf]
        %v2391 = vld [vmem:[%s2388 + $0x8] sm:$0xf]
        %v2392 = vld [vmem:[%s2388 + $0xc] sm:$0xf]
        %s2393 = scalar_lea.vmem %s8, 1
        %v2394 = vld [vmem:[%s2393] sm:$0x1]
        %v2396 = vlaneseq
        %v2397 = vshrl.u32 %v2396, 7
        %v2398 = vsub.s32 0, %v2397
        %v2399 = vrot.slane %v2394, %v2398
        %v2405 = vunpack.c.l.b16 %v2389
        %v2406 = vunpack.c.l.b16 %v2390
        %v2407 = vunpack.c.l.b16 %v2391
        %v2408 = vunpack.c.l.b16 %v2392
        %v2409 = vpack.c.b16 %v2406, %v2405
        %v2410 = vpack.c.b16 %v2408, %v2407
        %v2414 = vsel %vm428, %v2387, 0
        %2416 = vmatprep.subr.bf16.mxu0 0
        %2417 = vmatpush1.bf16.msra.mxu0 0
        %2418 = vmatprep.subr.bf16.mxu0 0
        %2419 = vmatpush1.bf16.msra.mxu0 0
        %2420 = vmatprep.subr.bf16.mxu0 0
        %2421 = vmatpush1.bf16.msra.mxu0 0
        %2422 = vmatprep.subr.bf16.mxu0 0
        %2423 = vmatpush1.bf16.msra.mxu0 0
        %2424 = vmatprep.subr.bf16.mxu0 0
        %2425 = vmatpush1.bf16.msra.mxu0 0
        %2426 = vmatprep.subr.bf16.mxu0 0
        %2427 = vmatpush1.bf16.msra.mxu0 0
        %2428 = vmatprep.subr.bf16.mxu0 0
        %2429 = vmatpush1.bf16.msra.mxu0 %v2410
        %2430 = vmatprep.subr.bf16.mxu0 0
        %2431 = vmatpush1.bf16.msra.mxu0 %v2409
        %2432 = vmatprep.subr.bf16.mxu0 0
        %2433 = vmatpush2.bf16.msra.mxu0 0
        %2434 = vmatprep.subr.bf16.mxu0 0
        %2435 = vmatpush2.bf16.msra.mxu0 0
        %2436 = vmatprep.subr.bf16.mxu0 0
        %2437 = vmatpush2.bf16.msra.mxu0 0
        %2438 = vmatprep.subr.bf16.mxu0 0
        %2439 = vmatpush2.bf16.msra.mxu0 0
        %2440 = vmatprep.subr.bf16.mxu0 0
        %2441 = vmatpush2.bf16.msra.mxu0 0
        %2442 = vmatprep.subr.bf16.mxu0 0
        %2443 = vmatpush2.bf16.msra.mxu0 0
        %2444 = vmatprep.subr.bf16.mxu0 0
        %2445 = vmatpush2.bf16.msra.mxu0 0
        %2446 = vmatprep.subr.bf16.mxu0 0
        %2447 = vmatpush2.bf16.msra.mxu0 0
        %2448 = vmatprep.mubr.bf16.mxu0 0
        %2449 = vmatmul.mubr.bf16.gmra.mxu0 %v2414
        %v2450 = vpop.f32.mrf.mxu0
        %v2451 = vadd.f32 %v2399, %v2450
        %v2452 = vpop.f32.mrf.mxu0
        %v2453 = vpop.f32.mrf.mxu0
        %v2454 = vpop.f32.mrf.mxu0
        %2455 = vdwg.mxu0
        %v2456 = vmul.f32 %v2451, 0.5
        %v2457 = vmul.f32 %v2451, 0.044715
        %v2458 = vmul.f32 %v2457, %v2451
        %v2459 = vmul.f32 %v2458, %v2451
        %v2460 = vadd.f32 %v2451, %v2459
        %v2461 = vmul.f32 %v2460, 0.7978846
        %v2462 = vtanh.pop %v2461
        %v2463 = vadd.f32 %v2462, 1.0
        %v2464 = vmul.f32 %v2456, %v2463
        %v2465 = vpack.c.bf16 %v2464, %v2464
        %s2466 = scalar_lea.vmem %s9, 32
        %v2467 = vld [vmem:[%s2466] sm:$0xf]
        %v2468 = vld [vmem:[%s2466 + $0x4] sm:$0xf]
        %v2469 = vld [vmem:[%s2466 + $0x8] sm:$0xf]
        %v2470 = vld [vmem:[%s2466 + $0xc] sm:$0xf]
        %v2471 = vld [vmem:[%s2466 + $0x10] sm:$0xf]
        %v2472 = vld [vmem:[%s2466 + $0x14] sm:$0xf]
        %v2473 = vld [vmem:[%s2466 + $0x18] sm:$0xf]
        %v2474 = vld [vmem:[%s2466 + $0x1c] sm:$0xf]
        %s2475 = scalar_lea.vmem %s6, 3
        %v2476 = vld [vmem:[%s2475] sm:$0x1]
        %v2478 = vlaneseq
        %v2479 = vshrl.u32 %v2478, 7
        %v2480 = vsub.s32 0, %v2479
        %v2481 = vrot.slane %v2476, %v2480
        %v2491 = vunpack.c.l.b16 %v2467
        %v2492 = vunpack.c.l.b16 %v2468
        %v2493 = vunpack.c.l.b16 %v2469
        %v2494 = vunpack.c.l.b16 %v2470
        %v2495 = vunpack.c.l.b16 %v2471
        %v2496 = vunpack.c.l.b16 %v2472
        %v2497 = vunpack.c.l.b16 %v2473
        %v2498 = vunpack.c.l.b16 %v2474
        %v2499 = vpack.c.b16 %v2492, %v2491
        %v2500 = vpack.c.b16 %v2494, %v2493
        %v2501 = vpack.c.b16 %v2496, %v2495
        %v2502 = vpack.c.b16 %v2498, %v2497
        %v2508 = vsel %vm1446, %v2465, 0
        %2510 = vmatprep.subr.bf16.mxu0 0
        %2511 = vmatpush1.bf16.msra.mxu0 0
        %2512 = vmatprep.subr.bf16.mxu0 0
        %2513 = vmatpush1.bf16.msra.mxu0 0
        %2514 = vmatprep.subr.bf16.mxu0 0
        %2515 = vmatpush1.bf16.msra.mxu0 0
        %2516 = vmatprep.subr.bf16.mxu0 0
        %2517 = vmatpush1.bf16.msra.mxu0 0
        %2518 = vmatprep.subr.bf16.mxu0 0
        %2519 = vmatpush1.bf16.msra.mxu0 %v2502
        %2520 = vmatprep.subr.bf16.mxu0 0
        %2521 = vmatpush1.bf16.msra.mxu0 %v2501
        %2522 = vmatprep.subr.bf16.mxu0 0
        %2523 = vmatpush1.bf16.msra.mxu0 %v2500
        %2524 = vmatprep.subr.bf16.mxu0 0
        %2525 = vmatpush1.bf16.msra.mxu0 %v2499
        %2526 = vmatprep.subr.bf16.mxu0 0
        %2527 = vmatpush2.bf16.msra.mxu0 0
        %2528 = vmatprep.subr.bf16.mxu0 0
        %2529 = vmatpush2.bf16.msra.mxu0 0
        %2530 = vmatprep.subr.bf16.mxu0 0
        %2531 = vmatpush2.bf16.msra.mxu0 0
        %2532 = vmatprep.subr.bf16.mxu0 0
        %2533 = vmatpush2.bf16.msra.mxu0 0
        %2534 = vmatprep.subr.bf16.mxu0 0
        %2535 = vmatpush2.bf16.msra.mxu0 0
        %2536 = vmatprep.subr.bf16.mxu0 0
        %2537 = vmatpush2.bf16.msra.mxu0 0
        %2538 = vmatprep.subr.bf16.mxu0 0
        %2539 = vmatpush2.bf16.msra.mxu0 0
        %2540 = vmatprep.subr.bf16.mxu0 0
        %2541 = vmatpush2.bf16.msra.mxu0 0
        %2542 = vmatprep.mubr.bf16.mxu0 0
        %2543 = vmatmul.mubr.bf16.gmra.mxu0 %v2508
        %v2544 = vpop.f32.mrf.mxu0
        %v2545 = vadd.f32 %v2481, %v2544
        %v2546 = vpop.f32.mrf.mxu0
        %v2547 = vpop.f32.mrf.mxu0
        %v2548 = vpop.f32.mrf.mxu0
        %2549 = vdwg.mxu0
        %v2550 = vadd.f32 %v2386, %v2545
        %s2551 = scalar_lea.vmem %s2, 8
        %v2552 = vld [vmem:[%s2551] sm:$0x1]
        %s2553 = scalar_lea.vmem %s2, 9
        %v2554 = vld [vmem:[%s2553] sm:$0x1]
        %v2555 = vsel %vm428, %v2550, 0.0
        %2556 = vadd.xlane.f32.xlu0 %v2555
        %v2557 = vpop.xlane.xlu0 %2556
        %v2558 = vmul.f32 %v2557, %v432
        %v2559 = vsub.f32 %v2550, %v2558
        %v2560 = vmul.f32 %v2559, %v2559
        %v2561 = vsel %vm428, %v2560, 0.0
        %2562 = vadd.xlane.f32.xlu0 %v2561
        %v2563 = vpop.xlane.xlu0 %2562
        %v2564 = vmul.f32 %v2563, %v432
        %v2565 = vadd.f32 %v2564, 1e-12
        %v2566 = vrsqrt.pop %v2565
        %v2567 = vmul.f32 %v2559, %v2566
        %v2569 = vlaneseq
        %v2570 = vshrl.u32 %v2569, 7
        %v2571 = vsub.s32 0, %v2570
        %v2572 = vrot.slane %v2552, %v2571
        %v2574 = vmul.f32 %v2567, %v2572
        %v2576 = vlaneseq
        %v2577 = vshrl.u32 %v2576, 7
        %v2578 = vsub.s32 0, %v2577
        %v2579 = vrot.slane %v2554, %v2578
        %v2581 = vadd.f32 %v2574, %v2579
        %s2582 = scalar_lea.vmem %s2, 10
        %v2583 = vld [vmem:[%s2582] sm:$0x1]
        %s2584 = scalar_lea.vmem %s2, 11
        %v2585 = vld [vmem:[%s2584] sm:$0x1]
        %vm2586 = vcmask 253952
        %v2587 = vsel %vm2586, %v2581, 0.0
        %2588 = vadd.xlane.f32.xlu0 %v2587
        %v2589 = vpop.xlane.xlu0 %2588
        %v2590 = vmul.f32 %v2589, %v432
        %v2591 = vsub.f32 %v2581, %v2590
        %v2592 = vmul.f32 %v2591, %v2591
        %v2593 = vsel %vm2586, %v2592, 0.0
        %2594 = vadd.xlane.f32.xlu0 %v2593
        %v2595 = vpop.xlane.xlu0 %2594
        %v2596 = vmul.f32 %v2595, %v432
        %v2597 = vadd.f32 %v2596, 1e-05
        %v2598 = vrsqrt.pop %v2597
        %v2599 = vmul.f32 %v2591, %v2598
        %v2600 = vmul.f32 %v2599, %v2583
        %v2601 = vadd.f32 %v2600, %v2585
        %v2602 = vpack.c.bf16 %v2601, %v2601
        %v2603 = vld [vmem:[%s10] sm:$0xf]
        %v2604 = vld [vmem:[%s10 + $0x4] sm:$0xf]
        %v2605 = vld [vmem:[%s10 + $0x8] sm:$0xf]
        %v2606 = vld [vmem:[%s10 + $0xc] sm:$0xf]
        %v2607 = vld [vmem:[%s11] sm:$0x1]
        %v2612 = vunpack.c.l.b16 %v2603
        %v2613 = vunpack.c.l.b16 %v2604
        %v2614 = vunpack.c.l.b16 %v2605
        %v2615 = vunpack.c.l.b16 %v2606
        %v2616 = vpack.c.b16 %v2613, %v2612
        %v2617 = vpack.c.b16 %v2615, %v2614
        %v2621 = vsel %vm428, %v2602, 0
        %2623 = vmatprep.subr.bf16.mxu0 0
        %2624 = vmatpush1.bf16.msra.mxu0 0
        %2625 = vmatprep.subr.bf16.mxu0 0
        %2626 = vmatpush1.bf16.msra.mxu0 0
        %2627 = vmatprep.subr.bf16.mxu0 0
        %2628 = vmatpush1.bf16.msra.mxu0 0
        %2629 = vmatprep.subr.bf16.mxu0 0
        %2630 = vmatpush1.bf16.msra.mxu0 0
        %2631 = vmatprep.subr.bf16.mxu0 0
        %2632 = vmatpush1.bf16.msra.mxu0 0
        %2633 = vmatprep.subr.bf16.mxu0 0
        %2634 = vmatpush1.bf16.msra.mxu0 0
        %2635 = vmatprep.subr.bf16.mxu0 0
        %2636 = vmatpush1.bf16.msra.mxu0 %v2617
        %2637 = vmatprep.subr.bf16.mxu0 0
        %2638 = vmatpush1.bf16.msra.mxu0 %v2616
        %2639 = vmatprep.subr.bf16.mxu0 0
        %2640 = vmatpush2.bf16.msra.mxu0 0
        %2641 = vmatprep.subr.bf16.mxu0 0
        %2642 = vmatpush2.bf16.msra.mxu0 0
        %2643 = vmatprep.subr.bf16.mxu0 0
        %2644 = vmatpush2.bf16.msra.mxu0 0
        %2645 = vmatprep.subr.bf16.mxu0 0
        %2646 = vmatpush2.bf16.msra.mxu0 0
        %2647 = vmatprep.subr.bf16.mxu0 0
        %2648 = vmatpush2.bf16.msra.mxu0 0
        %2649 = vmatprep.subr.bf16.mxu0 0
        %2650 = vmatpush2.bf16.msra.mxu0 0
        %2651 = vmatprep.subr.bf16.mxu0 0
        %2652 = vmatpush2.bf16.msra.mxu0 0
        %2653 = vmatprep.subr.bf16.mxu0 0
        %2654 = vmatpush2.bf16.msra.mxu0 0
        %2655 = vmatprep.mubr.bf16.mxu0 0
        %2656 = vmatmul.mubr.bf16.gmra.mxu0 %v2621
        %v2657 = vpop.f32.mrf.mxu0
        %v2658 = vadd.f32 %v2607, %v2657
        %v2659 = vpop.f32.mrf.mxu0
        %v2660 = vpop.f32.mrf.mxu0
        %v2661 = vpop.f32.mrf.mxu0
        %2662 = vdwg.mxu0
        %v2663 = vlaneseq
        %v2664 = vshrl.u32 %v2663, 7
        %v2665 = vsub.s32 0, %v2664
        %v2666 = vrot.slane %v2658, %v2665
        %2667 = vst [vmem:[%s415] sm:$0xff] %v2666
        %s2668 = sand.u32 %s296, 1
        %s2669 = scalar_lea.sflag [#allocation3], %s2668
        %s2670 = sand.u32 %s296, 1
        %s2671 = smul.addr %s2670, 8
        %s2672 = scalar_lea.vmem [#allocation2], %s2671
        // Predicated region
        $region69: #{tpu_custom_call.1} parent=67 // pred_check
          %p2673 = pneg %p306
        $region70: #{tpu_custom_call.1} parent=67 // pred_check_branch
          %2675 = sbr.rel (%p2673) target = $region72
        $region71: #{tpu_custom_call.1} parent=67 // pred_region
          %s2677 = ssub.s32 128, 128
          %2678 = vsyncadd %s2669, %s2677
          %s2679 = smul.addr %s26, 128
          %s2680 = scalar_lea.hbm %s12, %s2679
          %s2682 = sshll.u32 %s2672, 4
          %s2683 = int_to_ptr.vmem [resolvable:$true] %s2682
          %2685 = dma.vmem_to_hbm [thread:$0]  %s2683, 128, %s2680, %s2669
        $region72: #{tpu_custom_call.1} parent=67 // pred_fallthru
          _
      $region68: #{tpu_custom_call.1} parent=5 // pred_fallthru
        _
      %p2686 = scmp.le.s32.totalorder 2, %s21
      // Predicated region
      $region73: #{tpu_custom_call.1} parent=5 // pred_check
        %p2687 = pneg %p2686
      $region74: #{tpu_custom_call.1} parent=5 // pred_check_branch
        %2689 = sbr.rel (%p2687) target = $region76
      $region75: #{tpu_custom_call.1} parent=5 // pred_region
        %s2690 = ssub.s32 %s21, 2
        // Predicated region
        $region77: #{tpu_custom_call.1} parent=75 // pred_check
          %p2691 = pneg %p312
        $region78: #{tpu_custom_call.1} parent=75 // pred_check_branch
          %2693 = sbr.rel (%p2691) target = $region80
        $region79: #{tpu_custom_call.1} parent=75 // pred_region
          %s2694 = sand.u32 %s297, 1
          %s2695 = scalar_lea.sflag [#allocation3], %s2694
          %s2696 = sand.u32 %s297, 1
          %s2697 = smul.addr %s2696, 8
          %s2698 = scalar_lea.vmem [#allocation2], %s2697
          %2699 = dma.done %s2695, 128
        $region80: #{tpu_custom_call.1} parent=75 // pred_fallthru
          _
      $region76: #{tpu_custom_call.1} parent=5 // pred_fallthru
        _
    $region6: #{tpu_custom_call.1} parent=1 // loop_footer
      %s25 = sadd.s32 1, %s21
    $region7: #{tpu_custom_call.1} parent=1 // loop_footer_branch
      %20 = sbr.rel target = $region3
    $region8: #{tpu_custom_call.1} parent=1 // loop_exit
      _
    %2700 = vsyncpa [#allocation3], 1
    %s2701 = scalar_lea.sflag [#allocation3], 1
    %2702 = vsyncpa %s2701, 1

</llo_original>
